<compile_context>
chip_gen: v7x
topology: tpu7x:2x2x1
jax: 0.10.0
libtpu: 0.0.40
codegen_flags: <defaults>
</compile_context>

<pallas_src>
import numpy as np
import jax
import jax.numpy as jnp
from jax import lax
from jax.experimental import pallas as pl
from jax.experimental.pallas import tpu as pltpu


def dec_greedy_kernel(rnn_ref, uh_ref, base_ref, emb0_ref, embtab_ref,
                      wfused_ref, wws_ref, wv_ref, wfc_ref, bfc_ref,
                      logits_ref, pred_ref,
                      h_ref, c_ref, emb_ref):
    TC, BP, V = logits_ref.shape
    A = uh_ref.shape[-1]
    H = base_ref.shape[-1] // 4

    chunk = pl.program_id(0)

    # Recurrent state lives in VMEM scratch and persists across grid (chunk) iterations.
    @pl.when(chunk == 0)
    def _init():
        h_ref[...] = jnp.zeros_like(h_ref)
        c_ref[...] = jnp.zeros_like(c_ref)
        emb_ref[...] = emb0_ref[...]

    # Loop-invariant operands: constant index_maps -> DMA'd once, VMEM-resident.
    rnn = rnn_ref[...]            # (BP, S, R)
    uh = uh_ref[...]              # (BP, S, A)   atten_uh(rnn_enc) + buh + bws (bws folded)
    base = base_ref[...]          # (BP, 4H)     cnn_enc @ Wih_cnn.T + bih + bhh
    embtab = embtab_ref[...]      # (V, E)
    wfused = wfused_ref[...]      # (R+E+H, 4H)  [Wih_atten.T ; Wih_emb.T ; Whh.T]
    wws = wws_ref[...]            # (H, A)
    wv3 = wv_ref[...].reshape(1, 1, A)
    wfc = wfc_ref[...]            # (H, V)
    bfc = bfc_ref[...]            # (1, V)
    # TODO(synk): on v6e/v7x rnn/uh/embtab/wfc could be bf16 to halve VMEM/bandwidth; kept
    #             f32 to preserve the exact argmax / 1e-4 logits match against the reference.

    vocab_iota = lax.broadcasted_iota(jnp.int32, (BP, V), 1)
    col_iota = lax.broadcasted_iota(jnp.int32, (BP, TC), 1)

    def step(tl, carry):
        h, c, emb, preds = carry

        # --- Bahdanau attention over encoder states (bws folded into uh, bv cancels) ------
        ws = jnp.dot(h, wws, preferred_element_type=jnp.float32)             # (BP, A)
        e = jnp.tanh(uh + ws[:, None, :])                                    # (BP, S, A)
        score = jnp.sum(e * wv3, axis=-1)                                    # (BP, S)
        p = jnp.exp(score - jnp.max(score, axis=-1, keepdims=True))
        denom = jnp.sum(p, axis=-1, keepdims=True)                           # (BP, 1)
        r = pl.reciprocal(denom, approx=True)        # EUP slot (nearly free)
        r = r * (2.0 - denom * r)                    # one Newton step -> ~f32-exact
        score = p * r                                                        # softmax over S
        atten = jnp.sum(score[:, :, None] * rnn, axis=1)                     # (BP, R)

        # --- LSTM cell: one fused gate matmul (cnn part + both biases are in `base`) ------
        x = jnp.concatenate([atten, emb, h], axis=-1)                        # (BP, R+E+H)
        gates = base + jnp.dot(x, wfused, preferred_element_type=jnp.float32)  # (BP, 4H)
        ig = jax.nn.sigmoid(gates[:, 0 * H:1 * H])
        fg = jax.nn.sigmoid(gates[:, 1 * H:2 * H])
        gg = jnp.tanh(gates[:, 2 * H:3 * H])
        og = jax.nn.sigmoid(gates[:, 3 * H:4 * H])
        c_new = fg * c + ig * gg
        h_new = og * jnp.tanh(c_new)

        # --- Output projection + greedy token ---------------------------------------------
        logits_t = jnp.dot(h_new, wfc, preferred_element_type=jnp.float32) + bfc  # (BP, V)
        logits_ref[tl] = logits_t                         # lane-dense (V % 128 == 0)

        mx = jnp.max(logits_t, axis=-1, keepdims=True)
        pred_t = jnp.min(jnp.where(logits_t == mx, vocab_iota, V),
                         axis=-1, keepdims=True).astype(jnp.int32)           # (BP, 1)
        preds = jnp.where(col_iota == tl, pred_t, preds)  # register-resident (BP, TC)

        # Greedy feedback: embedding of the prediction (one-hot @ table on the MXU).
        # TODO(synk): for large vocab replace with an SMEM-scalar / DMA row gather.
        onehot = (vocab_iota == pred_t).astype(jnp.float32)                  # (BP, V)
        emb_next = jnp.dot(onehot, embtab, preferred_element_type=jnp.float32)  # (BP, E)
        return h_new, c_new, emb_next, preds

    carry0 = (h_ref[...], c_ref[...], emb_ref[...], jnp.zeros((BP, TC), jnp.int32))
    h_f, c_f, emb_f, preds_f = lax.fori_loop(0, TC, step, carry0, unroll=True)

    h_ref[...] = h_f
    c_ref[...] = c_f
    emb_ref[...] = emb_f
    pred_ref[0] = preds_f          # single lane-dense store per chunk


def dec_forward(rnn_enc, cnn_enc, gtruths, params, *, tc=4):
    """Eval-mode Dec forward (greedy decode). Returns (logits (T,B,V), preds (B,T))."""
    B, S, R = rnn_enc.shape
    C = cnn_enc.shape[1]
    T = int(gtruths.shape[1])
    emb_tab = params["emb"].astype(jnp.float32)        # (V, E)
    V, E = emb_tab.shape
    Wih = params["Wih"].astype(jnp.float32)            # (4H, R+C+E)
    Whh = params["Whh"].astype(jnp.float32)            # (4H, H)
    bih = params["bih"].astype(jnp.float32)
    bhh = params["bhh"].astype(jnp.float32)
    H = Whh.shape[1]

    # Pad batch to 8 sublanes; pad T up to a multiple of the chunk size.
    BP = ((B + 7) // 8) * 8
    pad = BP - B
    n_chunks = -(-T // tc)
    Tpad = n_chunks * tc

    rnn_p = jnp.pad(rnn_enc.astype(jnp.float32), ((0, pad), (0, 0), (0, 0)))
    cnn_p = jnp.pad(cnn_enc.astype(jnp.float32), ((0, pad), (0, 0)))

    # Hoisted loop-invariant projections (single XLA matmuls).  bws is folded into uh,
    # bv is dropped (softmax shift-invariance), LSTM biases + cnn projection go into `base`.
    uh = (jnp.einsum("bsr,ar->bsa", rnn_p, params["Wuh"])
          + (params["buh"] + params["bws"])[None, None, :])                  # (BP, S, A)
    base = cnn_p @ Wih[:, R:R + C].T + (bih + bhh)[None, :]                  # (BP, 4H)
    emb0 = jnp.pad(emb_tab[gtruths[:, 0]], ((0, pad), (0, 0)))               # (BP, E)

    wih_t = Wih.T                                                            # (R+C+E, 4H)
    wfused = jnp.concatenate([wih_t[:R], wih_t[R + C:], Whh.T], axis=0)      # (R+E+H, 4H)
    wws = params["Wws"].T.astype(jnp.float32)           # (H, A)
    wv = params["Wv"].astype(jnp.float32)               # (1, A)
    wfc = params["Wfc"].T.astype(jnp.float32)           # (H, V)
    bfc2 = params["bfc"].astype(jnp.float32)[None, :]   # (1, V)

    inputs = (rnn_p, uh, base, emb0, emb_tab, wfused, wws, wv, wfc, bfc2)

    def resident_spec(shape):
        nd = len(shape)
        return pl.BlockSpec(shape, lambda t, nd=nd: (0,) * nd)

    grid_spec = pltpu.PrefetchScalarGridSpec(
        num_scalar_prefetch=0,
        grid=(n_chunks,),
        in_specs=[resident_spec(tuple(int(d) for d in x.shape)) for x in inputs],
        out_specs=(
            pl.BlockSpec((tc, BP, V), lambda t: (t, 0, 0)),   # streamed per-chunk logits
            pl.BlockSpec((1, BP, tc), lambda t: (t, 0, 0)),   # lane-dense per-chunk preds
        ),
        scratch_shapes=[pltpu.VMEM((BP, H), jnp.float32),     # h carry
                        pltpu.VMEM((BP, H), jnp.float32),     # c carry
                        pltpu.VMEM((BP, E), jnp.float32)],    # emb carry
    )

    logits_p, preds_p = pl.pallas_call(
        dec_greedy_kernel,
        out_shape=(jax.ShapeDtypeStruct((Tpad, BP, V), jnp.float32),
                   jax.ShapeDtypeStruct((n_chunks, BP, tc), jnp.int32)),
        grid_spec=grid_spec,
        compiler_params=pltpu.CompilerParams(
            dimension_semantics=("arbitrary",),               # chunks are sequentially dependent
            vmem_limit_bytes=32 * 1024 * 1024),
    )(*inputs)

    logits = logits_p[:T, :B, :]                                             # (T, B, V)
    preds = jnp.transpose(preds_p, (1, 0, 2)).reshape(BP, Tpad)[:B, :T]      # (B, T)
    return logits, preds


def ref_forward(rnn_enc, cnn_enc, gtruths, params):
    """Pure-JAX reference mirroring the PyTorch Dec eval forward."""
    B, S, R = rnn_enc.shape
    T = gtruths.shape[1]
    emb_tab = params["emb"]
    Wih, Whh, bih, bhh = params["Wih"], params["Whh"], params["bih"], params["bhh"]
    H = Whh.shape[1]

    uh = jnp.einsum("bsr,ar->bsa", rnn_enc, params["Wuh"]) + params["buh"][None, None, :]
    h = jnp.zeros((B, H), jnp.float32)
    c = jnp.zeros((B, H), jnp.float32)
    emb = emb_tab[gtruths[:, 0]]
    logits_all, preds_all = [], []
    for _ in range(T):
        ws = h @ params["Wws"].T + params["bws"]
        e = jnp.tanh(uh + ws[:, None, :])
        score = jnp.einsum("bsa,a->bs", e, params["Wv"][0]) + params["bv"][0]
        score = jax.nn.softmax(score, axis=-1)
        atten = jnp.einsum("bs,bsr->br", score, rnn_enc)
        inp = jnp.concatenate([atten, cnn_enc, emb], axis=-1)
        gates = inp @ Wih.T + bih + h @ Whh.T + bhh
        ig = jax.nn.sigmoid(gates[:, :H])
        fg = jax.nn.sigmoid(gates[:, H:2 * H])
        gg = jnp.tanh(gates[:, 2 * H:3 * H])
        og = jax.nn.sigmoid(gates[:, 3 * H:])
        c = fg * c + ig * gg
        h = og * jnp.tanh(c)
        lg = h @ params["Wfc"].T + params["bfc"]
        pr = jnp.argmax(lg, axis=-1)
        logits_all.append(lg)
        preds_all.append(pr)
        emb = emb_tab[pr]
    return jnp.stack(logits_all), jnp.stack(preds_all).T


if __name__ == "__main__":
    # Small shapes consistent with Dec(zh_dims, dropout, zh_hidden, rnn_enc_size,
    #                                  cnn_enc_size, atten_vec_size)
    B, T = 2, 8          # batch, decode length
    S = 16               # encoder sequence length
    E = 16               # zh_dims
    H = 32               # zh_hidden
    R = 64               # rnn_enc_size
    C = 32               # cnn_enc_size
    A = 32               # atten_vec_size
    V = 512              # zh_voc_size (multiple of 128 -> lane-dense logits)

    key = jax.random.PRNGKey(0)
    ks = jax.random.split(key, 16)

    def u(k, shape, bound):
        return jax.random.uniform(k, shape, jnp.float32, -bound, bound)

    rnn_enc = jax.random.normal(ks[0], (B, S, R), jnp.float32)
    cnn_enc = jax.random.normal(ks[1], (B, C), jnp.float32)
    gtruths = jax.random.randint(ks[2], (B, T), 0, V, dtype=jnp.int32)

    bl = 1.0 / np.sqrt(H)
    params = {
        "emb": u(ks[3], (V, E), 0.1),                       # nn.Embedding weight
        "Wih": u(ks[4], (4 * H, R + C + E), bl),            # LSTMCell weight_ih
        "Whh": u(ks[5], (4 * H, H), bl),                    # LSTMCell weight_hh
        "bih": u(ks[6], (4 * H,), bl),
        "bhh": u(ks[7], (4 * H,), bl),
        "Wws": u(ks[8], (A, H), 1.0 / np.sqrt(H)),          # atten_ws
        "bws": u(ks[9], (A,), 1.0 / np.sqrt(H)),
        "Wuh": u(ks[10], (A, R), 1.0 / np.sqrt(R)),         # atten_uh
        "buh": u(ks[11], (A,), 1.0 / np.sqrt(R)),
        "Wv": u(ks[12], (1, A), 1.0 / np.sqrt(A)),          # atten_v
        "bv": u(ks[13], (1,), 1.0 / np.sqrt(A)),
        "Wfc": u(ks[14], (V, H), 1.0 / np.sqrt(H)),         # fc
        "bfc": u(ks[15], (V,), 1.0 / np.sqrt(H)),
    }

    logits, preds = dec_forward(rnn_enc, cnn_enc, gtruths, params, tc=4)  # 2 chunks of 4 steps
    logits = jax.block_until_ready(logits)
    preds = jax.block_until_ready(preds)

    ref_logits, ref_preds = ref_forward(rnn_enc, cnn_enc, gtruths, params)
    ref_logits = jax.block_until_ready(ref_logits)

    np.testing.assert_allclose(np.asarray(logits), np.asarray(ref_logits),
                               rtol=1e-4, atol=1e-4)
    np.testing.assert_array_equal(np.asarray(preds), np.asarray(ref_preds))

    assert logits.shape == (T, B, V) and preds.shape == (B, T)
    print("KERNEL_OK")
</pallas_src>

<mosaic_0001>
module attributes {stable_mosaic.version = 11 : i64} {
  func.func @dec_greedy_kernel(%arg0: i32, %arg1: memref<8x16x64xf32, #tpu.memory_space<vmem>>, %arg2: memref<8x16x32xf32, #tpu.memory_space<vmem>>, %arg3: memref<8x128xf32, #tpu.memory_space<vmem>>, %arg4: memref<8x16xf32, #tpu.memory_space<vmem>>, %arg5: memref<512x16xf32, #tpu.memory_space<vmem>>, %arg6: memref<112x128xf32, #tpu.memory_space<vmem>>, %arg7: memref<32x32xf32, #tpu.memory_space<vmem>>, %arg8: memref<1x32xf32, #tpu.memory_space<vmem>>, %arg9: memref<32x512xf32, #tpu.memory_space<vmem>>, %arg10: memref<1x512xf32, #tpu.memory_space<vmem>>, %arg11: memref<4x8x512xf32, #tpu.memory_space<vmem>>, %arg12: memref<1x8x4xi32, #tpu.memory_space<vmem>>, %arg13: memref<8x32xf32, #tpu.memory_space<vmem>>, %arg14: memref<8x32xf32, #tpu.memory_space<vmem>>, %arg15: memref<8x16xf32, #tpu.memory_space<vmem>>) attributes {dimension_semantics = [#tpu.dimension_semantics<arbitrary>], iteration_bounds = array<i64: 2>, scalar_prefetch = 0 : i64, scratch_operands = 3 : i64, tpu.core_type = #tpu.core_type<tc>, window_params = [{pipeline_mode = #tpu.pipeline_mode<synchronous>, transform_indices = @transform_0, window_bounds = array<i64: 8, 16, 64>}, {pipeline_mode = #tpu.pipeline_mode<synchronous>, transform_indices = @transform_1, window_bounds = array<i64: 8, 16, 32>}, {pipeline_mode = #tpu.pipeline_mode<synchronous>, transform_indices = @transform_2, window_bounds = array<i64: 8, 128>}, {pipeline_mode = #tpu.pipeline_mode<synchronous>, transform_indices = @transform_3, window_bounds = array<i64: 8, 16>}, {pipeline_mode = #tpu.pipeline_mode<synchronous>, transform_indices = @transform_4, window_bounds = array<i64: 512, 16>}, {pipeline_mode = #tpu.pipeline_mode<synchronous>, transform_indices = @transform_5, window_bounds = array<i64: 112, 128>}, {pipeline_mode = #tpu.pipeline_mode<synchronous>, transform_indices = @transform_6, window_bounds = array<i64: 32, 32>}, {pipeline_mode = #tpu.pipeline_mode<synchronous>, transform_indices = @transform_7, window_bounds = array<i64: 1, 32>}, {pipeline_mode = #tpu.pipeline_mode<synchronous>, transform_indices = @transform_8, window_bounds = array<i64: 32, 512>}, {pipeline_mode = #tpu.pipeline_mode<synchronous>, transform_indices = @transform_9, window_bounds = array<i64: 1, 512>}, {transform_indices = @transform_10, window_bounds = array<i64: 4, 8, 512>}, {transform_indices = @transform_11, window_bounds = array<i64: 1, 8, 4>}]} {
    %c0_i32 = arith.constant 0 : i32
    %0 = arith.cmpi eq, %arg0, %c0_i32 : i32
    %1 = arith.extui %0 : i1 to i32
    %c0_i32_0 = arith.constant 0 : i32
    %2 = arith.cmpi ne, %1, %c0_i32_0 : i32
    scf.if %2 {
      %cst_103 = arith.constant 0.000000e+00 : f32
      %341 = vector.broadcast %cst_103 : f32 to vector<8x32xf32>
      %c0_104 = arith.constant 0 : index
      %c0_105 = arith.constant 0 : index
      %342 = vector.load %arg13[%c0_104, %c0_105] : memref<8x32xf32, #tpu.memory_space<vmem>>, vector<8x32xf32>
      tpu.vector_store %arg13[%c0_104, %c0_105], %341 {strides = array<i32>} : memref<8x32xf32, #tpu.memory_space<vmem>>, vector<8x32xf32>,
      %cst_106 = arith.constant 0.000000e+00 : f32
      %343 = vector.broadcast %cst_106 : f32 to vector<8x32xf32>
      %c0_107 = arith.constant 0 : index
      %c0_108 = arith.constant 0 : index
      %344 = vector.load %arg14[%c0_107, %c0_108] : memref<8x32xf32, #tpu.memory_space<vmem>>, vector<8x32xf32>
      tpu.vector_store %arg14[%c0_107, %c0_108], %343 {strides = array<i32>} : memref<8x32xf32, #tpu.memory_space<vmem>>, vector<8x32xf32>,
      %c0_109 = arith.constant 0 : index
      %c0_110 = arith.constant 0 : index
      %345 = vector.load %arg4[%c0_109, %c0_110] : memref<8x16xf32, #tpu.memory_space<vmem>>, vector<8x16xf32>
      %c0_111 = arith.constant 0 : index
      %c0_112 = arith.constant 0 : index
      %346 = vector.load %arg15[%c0_111, %c0_112] : memref<8x16xf32, #tpu.memory_space<vmem>>, vector<8x16xf32>
      tpu.vector_store %arg15[%c0_111, %c0_112], %345 {strides = array<i32>} : memref<8x16xf32, #tpu.memory_space<vmem>>, vector<8x16xf32>,
    } else {
    }
    %c0 = arith.constant 0 : index
    %c0_1 = arith.constant 0 : index
    %c0_2 = arith.constant 0 : index
    %3 = vector.load %arg1[%c0, %c0_1, %c0_2] : memref<8x16x64xf32, #tpu.memory_space<vmem>>, vector<8x16x64xf32>
    %c0_3 = arith.constant 0 : index
    %c0_4 = arith.constant 0 : index
    %c0_5 = arith.constant 0 : index
    %4 = vector.load %arg2[%c0_3, %c0_4, %c0_5] : memref<8x16x32xf32, #tpu.memory_space<vmem>>, vector<8x16x32xf32>
    %c0_6 = arith.constant 0 : index
    %c0_7 = arith.constant 0 : index
    %5 = vector.load %arg3[%c0_6, %c0_7] : memref<8x128xf32, #tpu.memory_space<vmem>>, vector<8x128xf32>
    %c0_8 = arith.constant 0 : index
    %c0_9 = arith.constant 0 : index
    %6 = vector.load %arg5[%c0_8, %c0_9] : memref<512x16xf32, #tpu.memory_space<vmem>>, vector<512x16xf32>
    %c0_10 = arith.constant 0 : index
    %c0_11 = arith.constant 0 : index
    %7 = vector.load %arg6[%c0_10, %c0_11] : memref<112x128xf32, #tpu.memory_space<vmem>>, vector<112x128xf32>
    %c0_12 = arith.constant 0 : index
    %c0_13 = arith.constant 0 : index
    %8 = vector.load %arg7[%c0_12, %c0_13] : memref<32x32xf32, #tpu.memory_space<vmem>>, vector<32x32xf32>
    %c0_14 = arith.constant 0 : index
    %c0_15 = arith.constant 0 : index
    %9 = vector.load %arg8[%c0_14, %c0_15] : memref<1x32xf32, #tpu.memory_space<vmem>>, vector<1x32xf32>
    %10 = vector.shape_cast %9 : vector<1x32xf32> to vector<1x1x32xf32>
    %c0_16 = arith.constant 0 : index
    %c0_17 = arith.constant 0 : index
    %11 = vector.load %arg9[%c0_16, %c0_17] : memref<32x512xf32, #tpu.memory_space<vmem>>, vector<32x512xf32>
    %c0_18 = arith.constant 0 : index
    %c0_19 = arith.constant 0 : index
    %12 = vector.load %arg10[%c0_18, %c0_19] : memref<1x512xf32, #tpu.memory_space<vmem>>, vector<1x512xf32>
    %13 = tpu.iota {dimensions = array<i32: 1>} : vector<8x512xi32>
    %14 = tpu.iota {dimensions = array<i32: 1>} : vector<8x4xi32>
    %c0_20 = arith.constant 0 : index
    %c0_21 = arith.constant 0 : index
    %15 = vector.load %arg13[%c0_20, %c0_21] : memref<8x32xf32, #tpu.memory_space<vmem>>, vector<8x32xf32>
    %c0_22 = arith.constant 0 : index
    %c0_23 = arith.constant 0 : index
    %16 = vector.load %arg14[%c0_22, %c0_23] : memref<8x32xf32, #tpu.memory_space<vmem>>, vector<8x32xf32>
    %c0_24 = arith.constant 0 : index
    %c0_25 = arith.constant 0 : index
    %17 = vector.load %arg15[%c0_24, %c0_25] : memref<8x16xf32, #tpu.memory_space<vmem>>, vector<8x16xf32>
    %c0_i32_26 = arith.constant 0 : i32
    %18 = vector.broadcast %c0_i32_26 : i32 to vector<8x4xi32>
    %c0_i32_27 = arith.constant 0 : i32
    %cst = arith.constant dense<0.000000e+00> : vector<8x32xf32>
    %19 = tpu.matmul %15, %8, %cst {dimension_numbers = #tpu.dot_dimension_numbers<[1], [0], [0], [1], [0, 0, 1, 1], [], []>} : vector<8x32xf32>, vector<32x32xf32>, vector<8x32xf32> -> vector<8x32xf32>
    %20 = vector.shape_cast %19 : vector<8x32xf32> to vector<8x1x32xf32>
    %21 = vector.broadcast %20 : vector<8x1x32xf32> to vector<8x16x32xf32>
    %22 = arith.addf %4, %21 : vector<8x16x32xf32>
    %23 = math.tanh %22 : vector<8x16x32xf32>
    %24 = vector.broadcast %10 : vector<1x1x32xf32> to vector<8x16x32xf32>
    %25 = arith.mulf %23, %24 : vector<8x16x32xf32>
    %cst_28 = arith.constant dense<0.000000e+00> : vector<8x16xf32>
    %26 = vector.multi_reduction <add>, %25, %cst_28 [2] : vector<8x16x32xf32> to vector<8x16xf32>
    %cst_29 = arith.constant dense<0xFF800000> : vector<8xf32>
    %27 = vector.multi_reduction <maximumf>, %26, %cst_29 [1] : vector<8x16xf32> to vector<8xf32>
    %28 = vector.shape_cast %27 : vector<8xf32> to vector<8x1xf32>
    %29 = vector.broadcast %28 : vector<8x1xf32> to vector<8x16xf32>
    %30 = arith.subf %26, %29 : vector<8x16xf32>
    %31 = math.exp %30 : vector<8x16xf32>
    %cst_30 = arith.constant dense<0.000000e+00> : vector<8xf32>
    %32 = vector.multi_reduction <add>, %31, %cst_30 [1] : vector<8x16xf32> to vector<8xf32>
    %33 = vector.shape_cast %32 : vector<8xf32> to vector<8x1xf32>
    %34 = tpu.reciprocal %33 {approx = true} : vector<8x1xf32> -> vector<8x1xf32>
    %35 = arith.mulf %33, %34 : vector<8x1xf32>
    %cst_31 = arith.constant 2.000000e+00 : f32
    %36 = vector.broadcast %cst_31 : f32 to vector<8x1xf32>
    %37 = arith.subf %36, %35 : vector<8x1xf32>
    %38 = arith.mulf %34, %37 : vector<8x1xf32>
    %39 = vector.broadcast %38 : vector<8x1xf32> to vector<8x16xf32>
    %40 = arith.mulf %31, %39 : vector<8x16xf32>
    %41 = vector.shape_cast %40 : vector<8x16xf32> to vector<8x16x1xf32>
    %42 = vector.broadcast %41 : vector<8x16x1xf32> to vector<8x16x64xf32>
    %43 = arith.mulf %42, %3 : vector<8x16x64xf32>
    %cst_32 = arith.constant dense<0.000000e+00> : vector<8x64xf32>
    %44 = vector.multi_reduction <add>, %43, %cst_32 [1] : vector<8x16x64xf32> to vector<8x64xf32>
    %45 = tpu.concatenate %44, %17, %15 in 1 : vector<8x64xf32>, vector<8x16xf32>, vector<8x32xf32> -> vector<8x112xf32>
    %cst_33 = arith.constant dense<0.000000e+00> : vector<8x128xf32>
    %46 = tpu.matmul %45, %7, %cst_33 {dimension_numbers = #tpu.dot_dimension_numbers<[1], [0], [0], [1], [0, 0, 1, 1], [], []>} : vector<8x112xf32>, vector<112x128xf32>, vector<8x128xf32> -> vector<8x128xf32>
    %47 = arith.addf %5, %46 : vector<8x128xf32>
    %48 = vector.extract_strided_slice %47 {offsets = [0, 0], sizes = [8, 32], strides = [1, 1]} : vector<8x128xf32> to vector<8x32xf32>
    %49 = arith.negf %48 : vector<8x32xf32>
    %50 = math.exp %49 : vector<8x32xf32>
    %cst_34 = arith.constant 1.000000e+00 : f32
    %51 = vector.broadcast %cst_34 : f32 to vector<8x32xf32>
    %52 = arith.addf %51, %50 : vector<8x32xf32>
    %53 = arith.divf %51, %52 : vector<8x32xf32>
    %54 = vector.extract_strided_slice %47 {offsets = [0, 32], sizes = [8, 32], strides = [1, 1]} : vector<8x128xf32> to vector<8x32xf32>
    %55 = arith.negf %54 : vector<8x32xf32>
    %56 = math.exp %55 : vector<8x32xf32>
    %cst_35 = arith.constant 1.000000e+00 : f32
    %57 = vector.broadcast %cst_35 : f32 to vector<8x32xf32>
    %58 = arith.addf %57, %56 : vector<8x32xf32>
    %59 = arith.divf %57, %58 : vector<8x32xf32>
    %60 = vector.extract_strided_slice %47 {offsets = [0, 64], sizes = [8, 32], strides = [1, 1]} : vector<8x128xf32> to vector<8x32xf32>
    %61 = math.tanh %60 : vector<8x32xf32>
    %62 = vector.extract_strided_slice %47 {offsets = [0, 96], sizes = [8, 32], strides = [1, 1]} : vector<8x128xf32> to vector<8x32xf32>
    %63 = arith.negf %62 : vector<8x32xf32>
    %64 = math.exp %63 : vector<8x32xf32>
    %cst_36 = arith.constant 1.000000e+00 : f32
    %65 = vector.broadcast %cst_36 : f32 to vector<8x32xf32>
    %66 = arith.addf %65, %64 : vector<8x32xf32>
    %67 = arith.divf %65, %66 : vector<8x32xf32>
    %68 = arith.mulf %59, %16 : vector<8x32xf32>
    %69 = arith.mulf %53, %61 : vector<8x32xf32>
    %70 = arith.addf %68, %69 : vector<8x32xf32>
    %71 = math.tanh %70 : vector<8x32xf32>
    %72 = arith.mulf %67, %71 : vector<8x32xf32>
    %cst_37 = arith.constant dense<0.000000e+00> : vector<8x512xf32>
    %73 = tpu.matmul %72, %11, %cst_37 {dimension_numbers = #tpu.dot_dimension_numbers<[1], [0], [0], [1], [0, 0, 1, 1], [], []>} : vector<8x32xf32>, vector<32x512xf32>, vector<8x512xf32> -> vector<8x512xf32>
    %74 = vector.broadcast %12 : vector<1x512xf32> to vector<8x512xf32>
    %75 = arith.addf %73, %74 : vector<8x512xf32>
    %76 = arith.index_cast %c0_i32_27 : i32 to index
    %c0_38 = arith.constant 0 : index
    %c0_39 = arith.constant 0 : index
    %77 = vector.load %arg11[%76, %c0_38, %c0_39] : memref<4x8x512xf32, #tpu.memory_space<vmem>>, vector<1x8x512xf32>
    %78 = vector.shape_cast %77 : vector<1x8x512xf32> to vector<8x512xf32>
    %79 = vector.shape_cast %75 : vector<8x512xf32> to vector<1x8x512xf32>
    tpu.vector_store %arg11[%76, %c0_38, %c0_39], %79 {strides = array<i32>} : memref<4x8x512xf32, #tpu.memory_space<vmem>>, vector<1x8x512xf32>,
    %cst_40 = arith.constant dense<0xFF800000> : vector<8xf32>
    %80 = vector.multi_reduction <maximumf>, %75, %cst_40 [1] : vector<8x512xf32> to vector<8xf32>
    %81 = vector.shape_cast %80 : vector<8xf32> to vector<8x1xf32>
    %82 = vector.broadcast %81 : vector<8x1xf32> to vector<8x512xf32>
    %83 = arith.cmpf oeq, %75, %82 : vector<8x512xf32>
    %c512_i32 = arith.constant 512 : i32
    %84 = vector.broadcast %c512_i32 : i32 to vector<8x512xi32>
    %85 = arith.select %83, %13, %84 : vector<8x512xi1>, vector<8x512xi32>
    %cst_41 = arith.constant dense<2147483647> : vector<8xi32>
    %86 = vector.multi_reduction <minsi>, %85, %cst_41 [1] : vector<8x512xi32> to vector<8xi32>
    %87 = vector.shape_cast %86 : vector<8xi32> to vector<8x1xi32>
    %88 = vector.broadcast %c0_i32_27 : i32 to vector<8x4xi32>
    %89 = arith.cmpi eq, %14, %88 : vector<8x4xi32>
    %90 = vector.shape_cast %87 : vector<8x1xi32> to vector<8x1xi32>
    %91 = vector.broadcast %90 : vector<8x1xi32> to vector<8x4xi32>
    %92 = arith.select %89, %91, %18 : vector<8x4xi1>, vector<8x4xi32>
    %93 = vector.broadcast %87 : vector<8x1xi32> to vector<8x512xi32>
    %94 = arith.cmpi eq, %13, %93 : vector<8x512xi32>
    %95 = arith.extui %94 : vector<8x512xi1> to vector<8x512xi32>
    %96 = arith.sitofp %95 : vector<8x512xi32> to vector<8x512xf32>
    %cst_42 = arith.constant dense<0.000000e+00> : vector<8x16xf32>
    %97 = tpu.matmul %96, %6, %cst_42 {dimension_numbers = #tpu.dot_dimension_numbers<[1], [0], [0], [1], [0, 0, 1, 1], [], []>} : vector<8x512xf32>, vector<512x16xf32>, vector<8x16xf32> -> vector<8x16xf32>
    %c1_i32 = arith.constant 1 : i32
    %cst_43 = arith.constant dense<0.000000e+00> : vector<8x32xf32>
    %98 = tpu.matmul %72, %8, %cst_43 {dimension_numbers = #tpu.dot_dimension_numbers<[1], [0], [0], [1], [0, 0, 1, 1], [], []>} : vector<8x32xf32>, vector<32x32xf32>, vector<8x32xf32> -> vector<8x32xf32>
    %99 = vector.shape_cast %98 : vector<8x32xf32> to vector<8x1x32xf32>
    %100 = vector.broadcast %99 : vector<8x1x32xf32> to vector<8x16x32xf32>
    %101 = arith.addf %4, %100 : vector<8x16x32xf32>
    %102 = math.tanh %101 : vector<8x16x32xf32>
    %103 = vector.broadcast %10 : vector<1x1x32xf32> to vector<8x16x32xf32>
    %104 = arith.mulf %102, %103 : vector<8x16x32xf32>
    %cst_44 = arith.constant dense<0.000000e+00> : vector<8x16xf32>
    %105 = vector.multi_reduction <add>, %104, %cst_44 [2] : vector<8x16x32xf32> to vector<8x16xf32>
    %cst_45 = arith.constant dense<0xFF800000> : vector<8xf32>
    %106 = vector.multi_reduction <maximumf>, %105, %cst_45 [1] : vector<8x16xf32> to vector<8xf32>
    %107 = vector.shape_cast %106 : vector<8xf32> to vector<8x1xf32>
    %108 = vector.broadcast %107 : vector<8x1xf32> to vector<8x16xf32>
    %109 = arith.subf %105, %108 : vector<8x16xf32>
    %110 = math.exp %109 : vector<8x16xf32>
    %cst_46 = arith.constant dense<0.000000e+00> : vector<8xf32>
    %111 = vector.multi_reduction <add>, %110, %cst_46 [1] : vector<8x16xf32> to vector<8xf32>
    %112 = vector.shape_cast %111 : vector<8xf32> to vector<8x1xf32>
    %113 = tpu.reciprocal %112 {approx = true} : vector<8x1xf32> -> vector<8x1xf32>
    %114 = arith.mulf %112, %113 : vector<8x1xf32>
    %cst_47 = arith.constant 2.000000e+00 : f32
    %115 = vector.broadcast %cst_47 : f32 to vector<8x1xf32>
    %116 = arith.subf %115, %114 : vector<8x1xf32>
    %117 = arith.mulf %113, %116 : vector<8x1xf32>
    %118 = vector.broadcast %117 : vector<8x1xf32> to vector<8x16xf32>
    %119 = arith.mulf %110, %118 : vector<8x16xf32>
    %120 = vector.shape_cast %119 : vector<8x16xf32> to vector<8x16x1xf32>
    %121 = vector.broadcast %120 : vector<8x16x1xf32> to vector<8x16x64xf32>
    %122 = arith.mulf %121, %3 : vector<8x16x64xf32>
    %cst_48 = arith.constant dense<0.000000e+00> : vector<8x64xf32>
    %123 = vector.multi_reduction <add>, %122, %cst_48 [1] : vector<8x16x64xf32> to vector<8x64xf32>
    %124 = tpu.concatenate %123, %97, %72 in 1 : vector<8x64xf32>, vector<8x16xf32>, vector<8x32xf32> -> vector<8x112xf32>
    %cst_49 = arith.constant dense<0.000000e+00> : vector<8x128xf32>
    %125 = tpu.matmul %124, %7, %cst_49 {dimension_numbers = #tpu.dot_dimension_numbers<[1], [0], [0], [1], [0, 0, 1, 1], [], []>} : vector<8x112xf32>, vector<112x128xf32>, vector<8x128xf32> -> vector<8x128xf32>
    %126 = arith.addf %5, %125 : vector<8x128xf32>
    %127 = vector.extract_strided_slice %126 {offsets = [0, 0], sizes = [8, 32], strides = [1, 1]} : vector<8x128xf32> to vector<8x32xf32>
    %128 = arith.negf %127 : vector<8x32xf32>
    %129 = math.exp %128 : vector<8x32xf32>
    %cst_50 = arith.constant 1.000000e+00 : f32
    %130 = vector.broadcast %cst_50 : f32 to vector<8x32xf32>
    %131 = arith.addf %130, %129 : vector<8x32xf32>
    %132 = arith.divf %130, %131 : vector<8x32xf32>
    %133 = vector.extract_strided_slice %126 {offsets = [0, 32], sizes = [8, 32], strides = [1, 1]} : vector<8x128xf32> to vector<8x32xf32>
    %134 = arith.negf %133 : vector<8x32xf32>
    %135 = math.exp %134 : vector<8x32xf32>
    %cst_51 = arith.constant 1.000000e+00 : f32
    %136 = vector.broadcast %cst_51 : f32 to vector<8x32xf32>
    %137 = arith.addf %136, %135 : vector<8x32xf32>
    %138 = arith.divf %136, %137 : vector<8x32xf32>
    %139 = vector.extract_strided_slice %126 {offsets = [0, 64], sizes = [8, 32], strides = [1, 1]} : vector<8x128xf32> to vector<8x32xf32>
    %140 = math.tanh %139 : vector<8x32xf32>
    %141 = vector.extract_strided_slice %126 {offsets = [0, 96], sizes = [8, 32], strides = [1, 1]} : vector<8x128xf32> to vector<8x32xf32>
    %142 = arith.negf %141 : vector<8x32xf32>
    %143 = math.exp %142 : vector<8x32xf32>
    %cst_52 = arith.constant 1.000000e+00 : f32
    %144 = vector.broadcast %cst_52 : f32 to vector<8x32xf32>
    %145 = arith.addf %144, %143 : vector<8x32xf32>
    %146 = arith.divf %144, %145 : vector<8x32xf32>
    %147 = arith.mulf %138, %70 : vector<8x32xf32>
    %148 = arith.mulf %132, %140 : vector<8x32xf32>
    %149 = arith.addf %147, %148 : vector<8x32xf32>
    %150 = math.tanh %149 : vector<8x32xf32>
    %151 = arith.mulf %146, %150 : vector<8x32xf32>
    %cst_53 = arith.constant dense<0.000000e+00> : vector<8x512xf32>
    %152 = tpu.matmul %151, %11, %cst_53 {dimension_numbers = #tpu.dot_dimension_numbers<[1], [0], [0], [1], [0, 0, 1, 1], [], []>} : vector<8x32xf32>, vector<32x512xf32>, vector<8x512xf32> -> vector<8x512xf32>
    %153 = vector.broadcast %12 : vector<1x512xf32> to vector<8x512xf32>
    %154 = arith.addf %152, %153 : vector<8x512xf32>
    %155 = arith.index_cast %c1_i32 : i32 to index
    %c0_54 = arith.constant 0 : index
    %c0_55 = arith.constant 0 : index
    %156 = vector.load %arg11[%155, %c0_54, %c0_55] : memref<4x8x512xf32, #tpu.memory_space<vmem>>, vector<1x8x512xf32>
    %157 = vector.shape_cast %156 : vector<1x8x512xf32> to vector<8x512xf32>
    %158 = vector.shape_cast %154 : vector<8x512xf32> to vector<1x8x512xf32>
    tpu.vector_store %arg11[%155, %c0_54, %c0_55], %158 {strides = array<i32>} : memref<4x8x512xf32, #tpu.memory_space<vmem>>, vector<1x8x512xf32>,
    %cst_56 = arith.constant dense<0xFF800000> : vector<8xf32>
    %159 = vector.multi_reduction <maximumf>, %154, %cst_56 [1] : vector<8x512xf32> to vector<8xf32>
    %160 = vector.shape_cast %159 : vector<8xf32> to vector<8x1xf32>
    %161 = vector.broadcast %160 : vector<8x1xf32> to vector<8x512xf32>
    %162 = arith.cmpf oeq, %154, %161 : vector<8x512xf32>
    %c512_i32_57 = arith.constant 512 : i32
    %163 = vector.broadcast %c512_i32_57 : i32 to vector<8x512xi32>
    %164 = arith.select %162, %13, %163 : vector<8x512xi1>, vector<8x512xi32>
    %cst_58 = arith.constant dense<2147483647> : vector<8xi32>
    %165 = vector.multi_reduction <minsi>, %164, %cst_58 [1] : vector<8x512xi32> to vector<8xi32>
    %166 = vector.shape_cast %165 : vector<8xi32> to vector<8x1xi32>
    %167 = vector.broadcast %c1_i32 : i32 to vector<8x4xi32>
    %168 = arith.cmpi eq, %14, %167 : vector<8x4xi32>
    %169 = vector.shape_cast %166 : vector<8x1xi32> to vector<8x1xi32>
    %170 = vector.broadcast %169 : vector<8x1xi32> to vector<8x4xi32>
    %171 = arith.select %168, %170, %92 : vector<8x4xi1>, vector<8x4xi32>
    %172 = vector.broadcast %166 : vector<8x1xi32> to vector<8x512xi32>
    %173 = arith.cmpi eq, %13, %172 : vector<8x512xi32>
    %174 = arith.extui %173 : vector<8x512xi1> to vector<8x512xi32>
    %175 = arith.sitofp %174 : vector<8x512xi32> to vector<8x512xf32>
    %cst_59 = arith.constant dense<0.000000e+00> : vector<8x16xf32>
    %176 = tpu.matmul %175, %6, %cst_59 {dimension_numbers = #tpu.dot_dimension_numbers<[1], [0], [0], [1], [0, 0, 1, 1], [], []>} : vector<8x512xf32>, vector<512x16xf32>, vector<8x16xf32> -> vector<8x16xf32>
    %c2_i32 = arith.constant 2 : i32
    %cst_60 = arith.constant dense<0.000000e+00> : vector<8x32xf32>
    %177 = tpu.matmul %151, %8, %cst_60 {dimension_numbers = #tpu.dot_dimension_numbers<[1], [0], [0], [1], [0, 0, 1, 1], [], []>} : vector<8x32xf32>, vector<32x32xf32>, vector<8x32xf32> -> vector<8x32xf32>
    %178 = vector.shape_cast %177 : vector<8x32xf32> to vector<8x1x32xf32>
    %179 = vector.broadcast %178 : vector<8x1x32xf32> to vector<8x16x32xf32>
    %180 = arith.addf %4, %179 : vector<8x16x32xf32>
    %181 = math.tanh %180 : vector<8x16x32xf32>
    %182 = vector.broadcast %10 : vector<1x1x32xf32> to vector<8x16x32xf32>
    %183 = arith.mulf %181, %182 : vector<8x16x32xf32>
    %cst_61 = arith.constant dense<0.000000e+00> : vector<8x16xf32>
    %184 = vector.multi_reduction <add>, %183, %cst_61 [2] : vector<8x16x32xf32> to vector<8x16xf32>
    %cst_62 = arith.constant dense<0xFF800000> : vector<8xf32>
    %185 = vector.multi_reduction <maximumf>, %184, %cst_62 [1] : vector<8x16xf32> to vector<8xf32>
    %186 = vector.shape_cast %185 : vector<8xf32> to vector<8x1xf32>
    %187 = vector.broadcast %186 : vector<8x1xf32> to vector<8x16xf32>
    %188 = arith.subf %184, %187 : vector<8x16xf32>
    %189 = math.exp %188 : vector<8x16xf32>
    %cst_63 = arith.constant dense<0.000000e+00> : vector<8xf32>
    %190 = vector.multi_reduction <add>, %189, %cst_63 [1] : vector<8x16xf32> to vector<8xf32>
    %191 = vector.shape_cast %190 : vector<8xf32> to vector<8x1xf32>
    %192 = tpu.reciprocal %191 {approx = true} : vector<8x1xf32> -> vector<8x1xf32>
    %193 = arith.mulf %191, %192 : vector<8x1xf32>
    %cst_64 = arith.constant 2.000000e+00 : f32
    %194 = vector.broadcast %cst_64 : f32 to vector<8x1xf32>
    %195 = arith.subf %194, %193 : vector<8x1xf32>
    %196 = arith.mulf %192, %195 : vector<8x1xf32>
    %197 = vector.broadcast %196 : vector<8x1xf32> to vector<8x16xf32>
    %198 = arith.mulf %189, %197 : vector<8x16xf32>
    %199 = vector.shape_cast %198 : vector<8x16xf32> to vector<8x16x1xf32>
    %200 = vector.broadcast %199 : vector<8x16x1xf32> to vector<8x16x64xf32>
    %201 = arith.mulf %200, %3 : vector<8x16x64xf32>
    %cst_65 = arith.constant dense<0.000000e+00> : vector<8x64xf32>
    %202 = vector.multi_reduction <add>, %201, %cst_65 [1] : vector<8x16x64xf32> to vector<8x64xf32>
    %203 = tpu.concatenate %202, %176, %151 in 1 : vector<8x64xf32>, vector<8x16xf32>, vector<8x32xf32> -> vector<8x112xf32>
    %cst_66 = arith.constant dense<0.000000e+00> : vector<8x128xf32>
    %204 = tpu.matmul %203, %7, %cst_66 {dimension_numbers = #tpu.dot_dimension_numbers<[1], [0], [0], [1], [0, 0, 1, 1], [], []>} : vector<8x112xf32>, vector<112x128xf32>, vector<8x128xf32> -> vector<8x128xf32>
    %205 = arith.addf %5, %204 : vector<8x128xf32>
    %206 = vector.extract_strided_slice %205 {offsets = [0, 0], sizes = [8, 32], strides = [1, 1]} : vector<8x128xf32> to vector<8x32xf32>
    %207 = arith.negf %206 : vector<8x32xf32>
    %208 = math.exp %207 : vector<8x32xf32>
    %cst_67 = arith.constant 1.000000e+00 : f32
    %209 = vector.broadcast %cst_67 : f32 to vector<8x32xf32>
    %210 = arith.addf %209, %208 : vector<8x32xf32>
    %211 = arith.divf %209, %210 : vector<8x32xf32>
    %212 = vector.extract_strided_slice %205 {offsets = [0, 32], sizes = [8, 32], strides = [1, 1]} : vector<8x128xf32> to vector<8x32xf32>
    %213 = arith.negf %212 : vector<8x32xf32>
    %214 = math.exp %213 : vector<8x32xf32>
    %cst_68 = arith.constant 1.000000e+00 : f32
    %215 = vector.broadcast %cst_68 : f32 to vector<8x32xf32>
    %216 = arith.addf %215, %214 : vector<8x32xf32>
    %217 = arith.divf %215, %216 : vector<8x32xf32>
    %218 = vector.extract_strided_slice %205 {offsets = [0, 64], sizes = [8, 32], strides = [1, 1]} : vector<8x128xf32> to vector<8x32xf32>
    %219 = math.tanh %218 : vector<8x32xf32>
    %220 = vector.extract_strided_slice %205 {offsets = [0, 96], sizes = [8, 32], strides = [1, 1]} : vector<8x128xf32> to vector<8x32xf32>
    %221 = arith.negf %220 : vector<8x32xf32>
    %222 = math.exp %221 : vector<8x32xf32>
    %cst_69 = arith.constant 1.000000e+00 : f32
    %223 = vector.broadcast %cst_69 : f32 to vector<8x32xf32>
    %224 = arith.addf %223, %222 : vector<8x32xf32>
    %225 = arith.divf %223, %224 : vector<8x32xf32>
    %226 = arith.mulf %217, %149 : vector<8x32xf32>
    %227 = arith.mulf %211, %219 : vector<8x32xf32>
    %228 = arith.addf %226, %227 : vector<8x32xf32>
    %229 = math.tanh %228 : vector<8x32xf32>
    %230 = arith.mulf %225, %229 : vector<8x32xf32>
    %cst_70 = arith.constant dense<0.000000e+00> : vector<8x512xf32>
    %231 = tpu.matmul %230, %11, %cst_70 {dimension_numbers = #tpu.dot_dimension_numbers<[1], [0], [0], [1], [0, 0, 1, 1], [], []>} : vector<8x32xf32>, vector<32x512xf32>, vector<8x512xf32> -> vector<8x512xf32>
    %232 = vector.broadcast %12 : vector<1x512xf32> to vector<8x512xf32>
    %233 = arith.addf %231, %232 : vector<8x512xf32>
    %234 = arith.index_cast %c2_i32 : i32 to index
    %c0_71 = arith.constant 0 : index
    %c0_72 = arith.constant 0 : index
    %235 = vector.load %arg11[%234, %c0_71, %c0_72] : memref<4x8x512xf32, #tpu.memory_space<vmem>>, vector<1x8x512xf32>
    %236 = vector.shape_cast %235 : vector<1x8x512xf32> to vector<8x512xf32>
    %237 = vector.shape_cast %233 : vector<8x512xf32> to vector<1x8x512xf32>
    tpu.vector_store %arg11[%234, %c0_71, %c0_72], %237 {strides = array<i32>} : memref<4x8x512xf32, #tpu.memory_space<vmem>>, vector<1x8x512xf32>,
    %cst_73 = arith.constant dense<0xFF800000> : vector<8xf32>
    %238 = vector.multi_reduction <maximumf>, %233, %cst_73 [1] : vector<8x512xf32> to vector<8xf32>
    %239 = vector.shape_cast %238 : vector<8xf32> to vector<8x1xf32>
    %240 = vector.broadcast %239 : vector<8x1xf32> to vector<8x512xf32>
    %241 = arith.cmpf oeq, %233, %240 : vector<8x512xf32>
    %c512_i32_74 = arith.constant 512 : i32
    %242 = vector.broadcast %c512_i32_74 : i32 to vector<8x512xi32>
    %243 = arith.select %241, %13, %242 : vector<8x512xi1>, vector<8x512xi32>
    %cst_75 = arith.constant dense<2147483647> : vector<8xi32>
    %244 = vector.multi_reduction <minsi>, %243, %cst_75 [1] : vector<8x512xi32> to vector<8xi32>
    %245 = vector.shape_cast %244 : vector<8xi32> to vector<8x1xi32>
    %246 = vector.broadcast %c2_i32 : i32 to vector<8x4xi32>
    %247 = arith.cmpi eq, %14, %246 : vector<8x4xi32>
    %248 = vector.shape_cast %245 : vector<8x1xi32> to vector<8x1xi32>
    %249 = vector.broadcast %248 : vector<8x1xi32> to vector<8x4xi32>
    %250 = arith.select %247, %249, %171 : vector<8x4xi1>, vector<8x4xi32>
    %251 = vector.broadcast %245 : vector<8x1xi32> to vector<8x512xi32>
    %252 = arith.cmpi eq, %13, %251 : vector<8x512xi32>
    %253 = arith.extui %252 : vector<8x512xi1> to vector<8x512xi32>
    %254 = arith.sitofp %253 : vector<8x512xi32> to vector<8x512xf32>
    %cst_76 = arith.constant dense<0.000000e+00> : vector<8x16xf32>
    %255 = tpu.matmul %254, %6, %cst_76 {dimension_numbers = #tpu.dot_dimension_numbers<[1], [0], [0], [1], [0, 0, 1, 1], [], []>} : vector<8x512xf32>, vector<512x16xf32>, vector<8x16xf32> -> vector<8x16xf32>
    %c3_i32 = arith.constant 3 : i32
    %cst_77 = arith.constant dense<0.000000e+00> : vector<8x32xf32>
    %256 = tpu.matmul %230, %8, %cst_77 {dimension_numbers = #tpu.dot_dimension_numbers<[1], [0], [0], [1], [0, 0, 1, 1], [], []>} : vector<8x32xf32>, vector<32x32xf32>, vector<8x32xf32> -> vector<8x32xf32>
    %257 = vector.shape_cast %256 : vector<8x32xf32> to vector<8x1x32xf32>
    %258 = vector.broadcast %257 : vector<8x1x32xf32> to vector<8x16x32xf32>
    %259 = arith.addf %4, %258 : vector<8x16x32xf32>
    %260 = math.tanh %259 : vector<8x16x32xf32>
    %261 = vector.broadcast %10 : vector<1x1x32xf32> to vector<8x16x32xf32>
    %262 = arith.mulf %260, %261 : vector<8x16x32xf32>
    %cst_78 = arith.constant dense<0.000000e+00> : vector<8x16xf32>
    %263 = vector.multi_reduction <add>, %262, %cst_78 [2] : vector<8x16x32xf32> to vector<8x16xf32>
    %cst_79 = arith.constant dense<0xFF800000> : vector<8xf32>
    %264 = vector.multi_reduction <maximumf>, %263, %cst_79 [1] : vector<8x16xf32> to vector<8xf32>
    %265 = vector.shape_cast %264 : vector<8xf32> to vector<8x1xf32>
    %266 = vector.broadcast %265 : vector<8x1xf32> to vector<8x16xf32>
    %267 = arith.subf %263, %266 : vector<8x16xf32>
    %268 = math.exp %267 : vector<8x16xf32>
    %cst_80 = arith.constant dense<0.000000e+00> : vector<8xf32>
    %269 = vector.multi_reduction <add>, %268, %cst_80 [1] : vector<8x16xf32> to vector<8xf32>
    %270 = vector.shape_cast %269 : vector<8xf32> to vector<8x1xf32>
    %271 = tpu.reciprocal %270 {approx = true} : vector<8x1xf32> -> vector<8x1xf32>
    %272 = arith.mulf %270, %271 : vector<8x1xf32>
    %cst_81 = arith.constant 2.000000e+00 : f32
    %273 = vector.broadcast %cst_81 : f32 to vector<8x1xf32>
    %274 = arith.subf %273, %272 : vector<8x1xf32>
    %275 = arith.mulf %271, %274 : vector<8x1xf32>
    %276 = vector.broadcast %275 : vector<8x1xf32> to vector<8x16xf32>
    %277 = arith.mulf %268, %276 : vector<8x16xf32>
    %278 = vector.shape_cast %277 : vector<8x16xf32> to vector<8x16x1xf32>
    %279 = vector.broadcast %278 : vector<8x16x1xf32> to vector<8x16x64xf32>
    %280 = arith.mulf %279, %3 : vector<8x16x64xf32>
    %cst_82 = arith.constant dense<0.000000e+00> : vector<8x64xf32>
    %281 = vector.multi_reduction <add>, %280, %cst_82 [1] : vector<8x16x64xf32> to vector<8x64xf32>
    %282 = tpu.concatenate %281, %255, %230 in 1 : vector<8x64xf32>, vector<8x16xf32>, vector<8x32xf32> -> vector<8x112xf32>
    %cst_83 = arith.constant dense<0.000000e+00> : vector<8x128xf32>
    %283 = tpu.matmul %282, %7, %cst_83 {dimension_numbers = #tpu.dot_dimension_numbers<[1], [0], [0], [1], [0, 0, 1, 1], [], []>} : vector<8x112xf32>, vector<112x128xf32>, vector<8x128xf32> -> vector<8x128xf32>
    %284 = arith.addf %5, %283 : vector<8x128xf32>
    %285 = vector.extract_strided_slice %284 {offsets = [0, 0], sizes = [8, 32], strides = [1, 1]} : vector<8x128xf32> to vector<8x32xf32>
    %286 = arith.negf %285 : vector<8x32xf32>
    %287 = math.exp %286 : vector<8x32xf32>
    %cst_84 = arith.constant 1.000000e+00 : f32
    %288 = vector.broadcast %cst_84 : f32 to vector<8x32xf32>
    %289 = arith.addf %288, %287 : vector<8x32xf32>
    %290 = arith.divf %288, %289 : vector<8x32xf32>
    %291 = vector.extract_strided_slice %284 {offsets = [0, 32], sizes = [8, 32], strides = [1, 1]} : vector<8x128xf32> to vector<8x32xf32>
    %292 = arith.negf %291 : vector<8x32xf32>
    %293 = math.exp %292 : vector<8x32xf32>
    %cst_85 = arith.constant 1.000000e+00 : f32
    %294 = vector.broadcast %cst_85 : f32 to vector<8x32xf32>
    %295 = arith.addf %294, %293 : vector<8x32xf32>
    %296 = arith.divf %294, %295 : vector<8x32xf32>
    %297 = vector.extract_strided_slice %284 {offsets = [0, 64], sizes = [8, 32], strides = [1, 1]} : vector<8x128xf32> to vector<8x32xf32>
    %298 = math.tanh %297 : vector<8x32xf32>
    %299 = vector.extract_strided_slice %284 {offsets = [0, 96], sizes = [8, 32], strides = [1, 1]} : vector<8x128xf32> to vector<8x32xf32>
    %300 = arith.negf %299 : vector<8x32xf32>
    %301 = math.exp %300 : vector<8x32xf32>
    %cst_86 = arith.constant 1.000000e+00 : f32
    %302 = vector.broadcast %cst_86 : f32 to vector<8x32xf32>
    %303 = arith.addf %302, %301 : vector<8x32xf32>
    %304 = arith.divf %302, %303 : vector<8x32xf32>
    %305 = arith.mulf %296, %228 : vector<8x32xf32>
    %306 = arith.mulf %290, %298 : vector<8x32xf32>
    %307 = arith.addf %305, %306 : vector<8x32xf32>
    %308 = math.tanh %307 : vector<8x32xf32>
    %309 = arith.mulf %304, %308 : vector<8x32xf32>
    %cst_87 = arith.constant dense<0.000000e+00> : vector<8x512xf32>
    %310 = tpu.matmul %309, %11, %cst_87 {dimension_numbers = #tpu.dot_dimension_numbers<[1], [0], [0], [1], [0, 0, 1, 1], [], []>} : vector<8x32xf32>, vector<32x512xf32>, vector<8x512xf32> -> vector<8x512xf32>
    %311 = vector.broadcast %12 : vector<1x512xf32> to vector<8x512xf32>
    %312 = arith.addf %310, %311 : vector<8x512xf32>
    %313 = arith.index_cast %c3_i32 : i32 to index
    %c0_88 = arith.constant 0 : index
    %c0_89 = arith.constant 0 : index
    %314 = vector.load %arg11[%313, %c0_88, %c0_89] : memref<4x8x512xf32, #tpu.memory_space<vmem>>, vector<1x8x512xf32>
    %315 = vector.shape_cast %314 : vector<1x8x512xf32> to vector<8x512xf32>
    %316 = vector.shape_cast %312 : vector<8x512xf32> to vector<1x8x512xf32>
    tpu.vector_store %arg11[%313, %c0_88, %c0_89], %316 {strides = array<i32>} : memref<4x8x512xf32, #tpu.memory_space<vmem>>, vector<1x8x512xf32>,
    %cst_90 = arith.constant dense<0xFF800000> : vector<8xf32>
    %317 = vector.multi_reduction <maximumf>, %312, %cst_90 [1] : vector<8x512xf32> to vector<8xf32>
    %318 = vector.shape_cast %317 : vector<8xf32> to vector<8x1xf32>
    %319 = vector.broadcast %318 : vector<8x1xf32> to vector<8x512xf32>
    %320 = arith.cmpf oeq, %312, %319 : vector<8x512xf32>
    %c512_i32_91 = arith.constant 512 : i32
    %321 = vector.broadcast %c512_i32_91 : i32 to vector<8x512xi32>
    %322 = arith.select %320, %13, %321 : vector<8x512xi1>, vector<8x512xi32>
    %cst_92 = arith.constant dense<2147483647> : vector<8xi32>
    %323 = vector.multi_reduction <minsi>, %322, %cst_92 [1] : vector<8x512xi32> to vector<8xi32>
    %324 = vector.shape_cast %323 : vector<8xi32> to vector<8x1xi32>
    %325 = vector.broadcast %c3_i32 : i32 to vector<8x4xi32>
    %326 = arith.cmpi eq, %14, %325 : vector<8x4xi32>
    %327 = vector.shape_cast %324 : vector<8x1xi32> to vector<8x1xi32>
    %328 = vector.broadcast %327 : vector<8x1xi32> to vector<8x4xi32>
    %329 = arith.select %326, %328, %250 : vector<8x4xi1>, vector<8x4xi32>
    %330 = vector.broadcast %324 : vector<8x1xi32> to vector<8x512xi32>
    %331 = arith.cmpi eq, %13, %330 : vector<8x512xi32>
    %332 = arith.extui %331 : vector<8x512xi1> to vector<8x512xi32>
    %333 = arith.sitofp %332 : vector<8x512xi32> to vector<8x512xf32>
    %cst_93 = arith.constant dense<0.000000e+00> : vector<8x16xf32>
    %334 = tpu.matmul %333, %6, %cst_93 {dimension_numbers = #tpu.dot_dimension_numbers<[1], [0], [0], [1], [0, 0, 1, 1], [], []>} : vector<8x512xf32>, vector<512x16xf32>, vector<8x16xf32> -> vector<8x16xf32>
    %c4_i32 = arith.constant 4 : i32
    %c0_94 = arith.constant 0 : index
    %c0_95 = arith.constant 0 : index
    %335 = vector.load %arg13[%c0_94, %c0_95] : memref<8x32xf32, #tpu.memory_space<vmem>>, vector<8x32xf32>
    tpu.vector_store %arg13[%c0_94, %c0_95], %309 {strides = array<i32>} : memref<8x32xf32, #tpu.memory_space<vmem>>, vector<8x32xf32>,
    %c0_96 = arith.constant 0 : index
    %c0_97 = arith.constant 0 : index
    %336 = vector.load %arg14[%c0_96, %c0_97] : memref<8x32xf32, #tpu.memory_space<vmem>>, vector<8x32xf32>
    tpu.vector_store %arg14[%c0_96, %c0_97], %307 {strides = array<i32>} : memref<8x32xf32, #tpu.memory_space<vmem>>, vector<8x32xf32>,
    %c0_98 = arith.constant 0 : index
    %c0_99 = arith.constant 0 : index
    %337 = vector.load %arg15[%c0_98, %c0_99] : memref<8x16xf32, #tpu.memory_space<vmem>>, vector<8x16xf32>
    tpu.vector_store %arg15[%c0_98, %c0_99], %334 {strides = array<i32>} : memref<8x16xf32, #tpu.memory_space<vmem>>, vector<8x16xf32>,
    %c0_100 = arith.constant 0 : index
    %c0_101 = arith.constant 0 : index
    %c0_102 = arith.constant 0 : index
    %338 = vector.load %arg12[%c0_100, %c0_101, %c0_102] : memref<1x8x4xi32, #tpu.memory_space<vmem>>, vector<1x8x4xi32>
    %339 = vector.shape_cast %338 : vector<1x8x4xi32> to vector<8x4xi32>
    %340 = vector.shape_cast %329 : vector<8x4xi32> to vector<1x8x4xi32>
    tpu.vector_store %arg12[%c0_100, %c0_101, %c0_102], %340 {strides = array<i32>} : memref<1x8x4xi32, #tpu.memory_space<vmem>>, vector<1x8x4xi32>,
    return
  }
  func.func @transform_0(%arg0: i32) -> (i32, i32, i32) {
    %c0_i32 = arith.constant 0 : i32
    %c0_i32_0 = arith.constant 0 : i32
    %c0_i32_1 = arith.constant 0 : i32
    %c0_i32_2 = arith.constant 0 : i32
    return %c0_i32, %c0_i32_0, %c0_i32_1 : i32, i32, i32
  }
  func.func @transform_1(%arg0: i32) -> (i32, i32, i32) {
    %c0_i32 = arith.constant 0 : i32
    %c0_i32_0 = arith.constant 0 : i32
    %c0_i32_1 = arith.constant 0 : i32
    %c0_i32_2 = arith.constant 0 : i32
    return %c0_i32, %c0_i32_0, %c0_i32_1 : i32, i32, i32
  }
  func.func @transform_2(%arg0: i32) -> (i32, i32) {
    %c0_i32 = arith.constant 0 : i32
    %c0_i32_0 = arith.constant 0 : i32
    %c0_i32_1 = arith.constant 0 : i32
    return %c0_i32, %c0_i32_0 : i32, i32
  }
  func.func @transform_3(%arg0: i32) -> (i32, i32) {
    %c0_i32 = arith.constant 0 : i32
    %c0_i32_0 = arith.constant 0 : i32
    %c0_i32_1 = arith.constant 0 : i32
    return %c0_i32, %c0_i32_0 : i32, i32
  }
  func.func @transform_4(%arg0: i32) -> (i32, i32) {
    %c0_i32 = arith.constant 0 : i32
    %c0_i32_0 = arith.constant 0 : i32
    %c0_i32_1 = arith.constant 0 : i32
    return %c0_i32, %c0_i32_0 : i32, i32
  }
  func.func @transform_5(%arg0: i32) -> (i32, i32) {
    %c0_i32 = arith.constant 0 : i32
    %c0_i32_0 = arith.constant 0 : i32
    %c0_i32_1 = arith.constant 0 : i32
    return %c0_i32, %c0_i32_0 : i32, i32
  }
  func.func @transform_6(%arg0: i32) -> (i32, i32) {
    %c0_i32 = arith.constant 0 : i32
    %c0_i32_0 = arith.constant 0 : i32
    %c0_i32_1 = arith.constant 0 : i32
    return %c0_i32, %c0_i32_0 : i32, i32
  }
  func.func @transform_7(%arg0: i32) -> (i32, i32) {
    %c0_i32 = arith.constant 0 : i32
    %c0_i32_0 = arith.constant 0 : i32
    %c0_i32_1 = arith.constant 0 : i32
    return %c0_i32, %c0_i32_0 : i32, i32
  }
  func.func @transform_8(%arg0: i32) -> (i32, i32) {
    %c0_i32 = arith.constant 0 : i32
    %c0_i32_0 = arith.constant 0 : i32
    %c0_i32_1 = arith.constant 0 : i32
    return %c0_i32, %c0_i32_0 : i32, i32
  }
  func.func @transform_9(%arg0: i32) -> (i32, i32) {
    %c0_i32 = arith.constant 0 : i32
    %c0_i32_0 = arith.constant 0 : i32
    %c0_i32_1 = arith.constant 0 : i32
    return %c0_i32, %c0_i32_0 : i32, i32
  }
  func.func @transform_10(%arg0: i32) -> (i32, i32, i32) {
    %c0_i32 = arith.constant 0 : i32
    %c0_i32_0 = arith.constant 0 : i32
    %c0_i32_1 = arith.constant 0 : i32
    return %arg0, %c0_i32, %c0_i32_0 : i32, i32, i32
  }
  func.func @transform_11(%arg0: i32) -> (i32, i32, i32) {
    %c0_i32 = arith.constant 0 : i32
    %c0_i32_0 = arith.constant 0 : i32
    %c0_i32_1 = arith.constant 0 : i32
    return %arg0, %c0_i32, %c0_i32_0 : i32, i32, i32
  }
}

</mosaic_0001>

<llo_original>
// kernel: tpu_custom_call.1
$region0: #{tpu_custom_call.1}
  #allocation0 [shape = 'u32[]', space=smem, size = 0x4, offset = 0x4, fixed_abs, tag = 'smem constant byte address 0x4 - core index']
  #allocation1 [shape = 'u32[144,128]{1,0:T(1,128)}', space=vmem, size = 0x12000, scoped, tag = 'internal scratch']
  #allocation2 [shape = 'f32[8,32]{1,0:T(8,128)}', space=vmem, size = 0x1000, scoped, tag = 'scratch operand']
  #allocation3 [shape = 'f32[8,32]{1,0:T(8,128)}', space=vmem, size = 0x1000, scoped, tag = 'scratch operand']
  #allocation4 [shape = 'f32[8,16]{1,0:T(8,128)}', space=vmem, size = 0x1000, scoped, tag = 'scratch operand']
  %s0 = inlined_call_operand.vmem [shape: f32[8,16,64], index: 0, kind: input, shape index: {}]
  %s1 = inlined_call_operand.vmem [shape: f32[8,16,32], index: 1, kind: input, shape index: {}]
  %s2 = inlined_call_operand.vmem [shape: f32[8,128], index: 2, kind: input, shape index: {}]
  %s3 = inlined_call_operand.vmem [shape: f32[8,16], index: 3, kind: input, shape index: {}]
  %s4 = inlined_call_operand.vmem [shape: f32[512,16], index: 4, kind: input, shape index: {}]
  %s5 = inlined_call_operand.vmem [shape: f32[112,128], index: 5, kind: input, shape index: {}]
  %s6 = inlined_call_operand.vmem [shape: f32[32,32], index: 6, kind: input, shape index: {}]
  %s7 = inlined_call_operand.vmem [shape: f32[1,32], index: 7, kind: input, shape index: {}]
  %s8 = inlined_call_operand.vmem [shape: f32[32,512], index: 8, kind: input, shape index: {}]
  %s9 = inlined_call_operand.vmem [shape: f32[1,512], index: 9, kind: input, shape index: {}]
  %s10 = inlined_call_operand.hbm [shape: f32[8,8,512], index: 10, kind: output, shape index: {0}]
  %s11 = inlined_call_operand.vmem [shape: s32[2,8,4], index: 11, kind: output, shape index: {1}]
  %12 = xla_tuple %s10, %s11
  %s13 = sld [smem:[#allocation0]]
  $region85: #{tpu_custom_call.1} parent=0
    _
  %s15 = ssub.s32 1, %s13
  %s16 = scalar_select 0, %s15, %s13
  $region1: #{tpu_custom_call.1} parent=0
    #allocation5 [shape = 'u8[131072]{0}', space=vmem, size = 0x20000, scoped, tag = 'output window, operand 0']
    #allocation6 [shape = 's32[2]{0}', space=sflag, size = 0x8, scoped, tag = 'scoped memory for tpu_custom_call.1']
    %17 = vsyncpa [#allocation6], 0
    %s18 = scalar_lea.sflag [#allocation6], 1
    %19 = vsyncpa %s18, 0
    loop: start=0, step=1, limit=4
    $region2: #{tpu_custom_call.1} parent=1 // loop_pre_header
      _
    $region3: #{tpu_custom_call.1} parent=1 // loop_header
      %s21 = sphi 0, %s25
      %p22 = scmp.ge.s32.totalorder %s21, 4
      %s29 = sphi 0, %s29
      %s31 = sphi 0, %s29
      %s32 = sphi 0, %s31
      %s46 = sphi 0, %s32
      %s50 = sphi 0, %s50
      %s52 = sphi 0, %s50
      %s53 = sphi 0, %s52
      %s67 = sphi 0, %s53
      %s71 = sphi 0, %s71
      %s73 = sphi 0, %s71
      %s74 = sphi 0, %s73
      %s88 = sphi 0, %s74
      %s92 = sphi 0, %s92
      %s94 = sphi 0, %s92
      %s95 = sphi 0, %s94
      %s109 = sphi 0, %s95
      %s113 = sphi 0, %s113
      %s115 = sphi 0, %s113
      %s116 = sphi 0, %s115
      %s130 = sphi 0, %s116
      %s134 = sphi 0, %s134
      %s136 = sphi 0, %s134
      %s137 = sphi 0, %s136
      %s151 = sphi 0, %s137
      %s155 = sphi 0, %s155
      %s157 = sphi 0, %s155
      %s158 = sphi 0, %s157
      %s172 = sphi 0, %s158
      %s176 = sphi 0, %s176
      %s178 = sphi 0, %s176
      %s179 = sphi 0, %s178
      %s193 = sphi 0, %s179
      %s197 = sphi 0, %s197
      %s199 = sphi 0, %s197
      %s200 = sphi 0, %s199
      %s214 = sphi 0, %s200
      %s218 = sphi 0, %s218
      %s220 = sphi 0, %s218
      %s221 = sphi 0, %s220
      %s235 = sphi 0, %s221
      %s241 = sphi 0, %s243
      %s244 = sphi 0, %s241
      %s245 = sphi 0, %s244
      %s261 = sphi 0, %s245
      %s267 = sphi 0, %s269
      %s270 = sphi 0, %s267
      %s271 = sphi 0, %s270
      %s287 = sphi 0, %s271
    $region4: #{tpu_custom_call.1} parent=1 // loop_header_branch
      %24 = sbr.rel (%p22) target = $region8
    $region5: #{tpu_custom_call.1} parent=1 // loop_body
      %s26 = ssub.s32 %s21, 1
      %s27 = ssub.s32 %s21, 2
      %s28 = sadd.s32 %s21, 1
      %s30 = sadd.s32 %s29, 1
      %p33 = scmp.eq.s32.totalorder %s21, 1
      %p34 = scmp.ne.s32.totalorder %s29, %s31
      %p35 = scmp.eq.s32.totalorder %s21, 0
      %p36 = por %p34, %p35
      %p37 = scmp.ne.s32.totalorder %s29, %s31
      %p38 = scmp.eq.s32.totalorder %s26, 1
      %p39 = por %p37, %p38
      %p40 = scmp.ne.s32.totalorder %s31, %s32
      %p41 = scmp.eq.s32.totalorder %s26, 0
      %p42 = por %p40, %p41
      %p43 = scmp.ne.s32.totalorder %s31, %s32
      %p44 = scmp.eq.s32.totalorder %s27, 1
      %p45 = por %p43, %p44
      %p47 = scmp.ne.s32.totalorder %s32, %s46
      %p48 = scmp.eq.s32.totalorder %s27, 0
      %p49 = por %p47, %p48
      %s51 = sadd.s32 %s50, 1
      %p54 = scmp.eq.s32.totalorder %s21, 1
      %p55 = scmp.ne.s32.totalorder %s50, %s52
      %p56 = scmp.eq.s32.totalorder %s21, 0
      %p57 = por %p55, %p56
      %p58 = scmp.ne.s32.totalorder %s50, %s52
      %p59 = scmp.eq.s32.totalorder %s26, 1
      %p60 = por %p58, %p59
      %p61 = scmp.ne.s32.totalorder %s52, %s53
      %p62 = scmp.eq.s32.totalorder %s26, 0
      %p63 = por %p61, %p62
      %p64 = scmp.ne.s32.totalorder %s52, %s53
      %p65 = scmp.eq.s32.totalorder %s27, 1
      %p66 = por %p64, %p65
      %p68 = scmp.ne.s32.totalorder %s53, %s67
      %p69 = scmp.eq.s32.totalorder %s27, 0
      %p70 = por %p68, %p69
      %s72 = sadd.s32 %s71, 1
      %p75 = scmp.eq.s32.totalorder %s21, 1
      %p76 = scmp.ne.s32.totalorder %s71, %s73
      %p77 = scmp.eq.s32.totalorder %s21, 0
      %p78 = por %p76, %p77
      %p79 = scmp.ne.s32.totalorder %s71, %s73
      %p80 = scmp.eq.s32.totalorder %s26, 1
      %p81 = por %p79, %p80
      %p82 = scmp.ne.s32.totalorder %s73, %s74
      %p83 = scmp.eq.s32.totalorder %s26, 0
      %p84 = por %p82, %p83
      %p85 = scmp.ne.s32.totalorder %s73, %s74
      %p86 = scmp.eq.s32.totalorder %s27, 1
      %p87 = por %p85, %p86
      %p89 = scmp.ne.s32.totalorder %s74, %s88
      %p90 = scmp.eq.s32.totalorder %s27, 0
      %p91 = por %p89, %p90
      %s93 = sadd.s32 %s92, 1
      %p96 = scmp.eq.s32.totalorder %s21, 1
      %p97 = scmp.ne.s32.totalorder %s92, %s94
      %p98 = scmp.eq.s32.totalorder %s21, 0
      %p99 = por %p97, %p98
      %p100 = scmp.ne.s32.totalorder %s92, %s94
      %p101 = scmp.eq.s32.totalorder %s26, 1
      %p102 = por %p100, %p101
      %p103 = scmp.ne.s32.totalorder %s94, %s95
      %p104 = scmp.eq.s32.totalorder %s26, 0
      %p105 = por %p103, %p104
      %p106 = scmp.ne.s32.totalorder %s94, %s95
      %p107 = scmp.eq.s32.totalorder %s27, 1
      %p108 = por %p106, %p107
      %p110 = scmp.ne.s32.totalorder %s95, %s109
      %p111 = scmp.eq.s32.totalorder %s27, 0
      %p112 = por %p110, %p111
      %s114 = sadd.s32 %s113, 1
      %p117 = scmp.eq.s32.totalorder %s21, 1
      %p118 = scmp.ne.s32.totalorder %s113, %s115
      %p119 = scmp.eq.s32.totalorder %s21, 0
      %p120 = por %p118, %p119
      %p121 = scmp.ne.s32.totalorder %s113, %s115
      %p122 = scmp.eq.s32.totalorder %s26, 1
      %p123 = por %p121, %p122
      %p124 = scmp.ne.s32.totalorder %s115, %s116
      %p125 = scmp.eq.s32.totalorder %s26, 0
      %p126 = por %p124, %p125
      %p127 = scmp.ne.s32.totalorder %s115, %s116
      %p128 = scmp.eq.s32.totalorder %s27, 1
      %p129 = por %p127, %p128
      %p131 = scmp.ne.s32.totalorder %s116, %s130
      %p132 = scmp.eq.s32.totalorder %s27, 0
      %p133 = por %p131, %p132
      %s135 = sadd.s32 %s134, 1
      %p138 = scmp.eq.s32.totalorder %s21, 1
      %p139 = scmp.ne.s32.totalorder %s134, %s136
      %p140 = scmp.eq.s32.totalorder %s21, 0
      %p141 = por %p139, %p140
      %p142 = scmp.ne.s32.totalorder %s134, %s136
      %p143 = scmp.eq.s32.totalorder %s26, 1
      %p144 = por %p142, %p143
      %p145 = scmp.ne.s32.totalorder %s136, %s137
      %p146 = scmp.eq.s32.totalorder %s26, 0
      %p147 = por %p145, %p146
      %p148 = scmp.ne.s32.totalorder %s136, %s137
      %p149 = scmp.eq.s32.totalorder %s27, 1
      %p150 = por %p148, %p149
      %p152 = scmp.ne.s32.totalorder %s137, %s151
      %p153 = scmp.eq.s32.totalorder %s27, 0
      %p154 = por %p152, %p153
      %s156 = sadd.s32 %s155, 1
      %p159 = scmp.eq.s32.totalorder %s21, 1
      %p160 = scmp.ne.s32.totalorder %s155, %s157
      %p161 = scmp.eq.s32.totalorder %s21, 0
      %p162 = por %p160, %p161
      %p163 = scmp.ne.s32.totalorder %s155, %s157
      %p164 = scmp.eq.s32.totalorder %s26, 1
      %p165 = por %p163, %p164
      %p166 = scmp.ne.s32.totalorder %s157, %s158
      %p167 = scmp.eq.s32.totalorder %s26, 0
      %p168 = por %p166, %p167
      %p169 = scmp.ne.s32.totalorder %s157, %s158
      %p170 = scmp.eq.s32.totalorder %s27, 1
      %p171 = por %p169, %p170
      %p173 = scmp.ne.s32.totalorder %s158, %s172
      %p174 = scmp.eq.s32.totalorder %s27, 0
      %p175 = por %p173, %p174
      %s177 = sadd.s32 %s176, 1
      %p180 = scmp.eq.s32.totalorder %s21, 1
      %p181 = scmp.ne.s32.totalorder %s176, %s178
      %p182 = scmp.eq.s32.totalorder %s21, 0
      %p183 = por %p181, %p182
      %p184 = scmp.ne.s32.totalorder %s176, %s178
      %p185 = scmp.eq.s32.totalorder %s26, 1
      %p186 = por %p184, %p185
      %p187 = scmp.ne.s32.totalorder %s178, %s179
      %p188 = scmp.eq.s32.totalorder %s26, 0
      %p189 = por %p187, %p188
      %p190 = scmp.ne.s32.totalorder %s178, %s179
      %p191 = scmp.eq.s32.totalorder %s27, 1
      %p192 = por %p190, %p191
      %p194 = scmp.ne.s32.totalorder %s179, %s193
      %p195 = scmp.eq.s32.totalorder %s27, 0
      %p196 = por %p194, %p195
      %s198 = sadd.s32 %s197, 1
      %p201 = scmp.eq.s32.totalorder %s21, 1
      %p202 = scmp.ne.s32.totalorder %s197, %s199
      %p203 = scmp.eq.s32.totalorder %s21, 0
      %p204 = por %p202, %p203
      %p205 = scmp.ne.s32.totalorder %s197, %s199
      %p206 = scmp.eq.s32.totalorder %s26, 1
      %p207 = por %p205, %p206
      %p208 = scmp.ne.s32.totalorder %s199, %s200
      %p209 = scmp.eq.s32.totalorder %s26, 0
      %p210 = por %p208, %p209
      %p211 = scmp.ne.s32.totalorder %s199, %s200
      %p212 = scmp.eq.s32.totalorder %s27, 1
      %p213 = por %p211, %p212
      %p215 = scmp.ne.s32.totalorder %s200, %s214
      %p216 = scmp.eq.s32.totalorder %s27, 0
      %p217 = por %p215, %p216
      %s219 = sadd.s32 %s218, 1
      %p222 = scmp.eq.s32.totalorder %s21, 1
      %p223 = scmp.ne.s32.totalorder %s218, %s220
      %p224 = scmp.eq.s32.totalorder %s21, 0
      %p225 = por %p223, %p224
      %p226 = scmp.ne.s32.totalorder %s218, %s220
      %p227 = scmp.eq.s32.totalorder %s26, 1
      %p228 = por %p226, %p227
      %p229 = scmp.ne.s32.totalorder %s220, %s221
      %p230 = scmp.eq.s32.totalorder %s26, 0
      %p231 = por %p229, %p230
      %p232 = scmp.ne.s32.totalorder %s220, %s221
      %p233 = scmp.eq.s32.totalorder %s27, 1
      %p234 = por %p232, %p233
      %p236 = scmp.ne.s32.totalorder %s221, %s235
      %p237 = scmp.eq.s32.totalorder %s27, 0
      %p238 = por %p236, %p237
      %s239 = ssub.s32 %s21, %s28
      %p240 = scmp.eq.s32.totalorder %s239, 0
      %s242 = sadd.s32 %s241, 1
      %s243 = scalar_select %p240, %s241, %s242
      %p246 = pneg %p240
      %p247 = scmp.eq.s32.totalorder %s21, 1
      %p248 = por %p246, %p247
      %p249 = scmp.ne.s32.totalorder %s241, %s244
      %p250 = scmp.eq.s32.totalorder %s21, 0
      %p251 = por %p249, %p250
      %p252 = scmp.ne.s32.totalorder %s241, %s244
      %p253 = scmp.eq.s32.totalorder %s26, 1
      %p254 = por %p252, %p253
      %p255 = scmp.ne.s32.totalorder %s244, %s245
      %p256 = scmp.eq.s32.totalorder %s26, 0
      %p257 = por %p255, %p256
      %p258 = scmp.ne.s32.totalorder %s244, %s245
      %p259 = scmp.eq.s32.totalorder %s27, 1
      %p260 = por %p258, %p259
      %p262 = scmp.ne.s32.totalorder %s245, %s261
      %p263 = scmp.eq.s32.totalorder %s27, 0
      %p264 = por %p262, %p263
      %s265 = ssub.s32 %s21, %s28
      %p266 = scmp.eq.s32.totalorder %s265, 0
      %s268 = sadd.s32 %s267, 1
      %s269 = scalar_select %p266, %s267, %s268
      %p272 = pneg %p266
      %p273 = scmp.eq.s32.totalorder %s21, 1
      %p274 = por %p272, %p273
      %p275 = scmp.ne.s32.totalorder %s267, %s270
      %p276 = scmp.eq.s32.totalorder %s21, 0
      %p277 = por %p275, %p276
      %p278 = scmp.ne.s32.totalorder %s267, %s270
      %p279 = scmp.eq.s32.totalorder %s26, 1
      %p280 = por %p278, %p279
      %p281 = scmp.ne.s32.totalorder %s270, %s271
      %p282 = scmp.eq.s32.totalorder %s26, 0
      %p283 = por %p281, %p282
      %p284 = scmp.ne.s32.totalorder %s270, %s271
      %p285 = scmp.eq.s32.totalorder %s27, 1
      %p286 = por %p284, %p285
      %p288 = scmp.ne.s32.totalorder %s271, %s287
      %p289 = scmp.eq.s32.totalorder %s27, 0
      %p290 = por %p288, %p289
      %p291 = scmp.le.s32.totalorder 1, %s21
      %p292 = scmp.lt.s32.totalorder %s21, 3
      %p293 = pnand %p291, %p292
      %p294 = pneg %p293
      // Predicated region
      $region9: #{tpu_custom_call.1} parent=5 // pred_check
        _
      $region10: #{tpu_custom_call.1} parent=5 // pred_check_branch
        %296 = sbr.rel (%p293) target = $region12
      $region11: #{tpu_custom_call.1} parent=5 // pred_region
        %s297 = ssub.s32 %s21, 1
        // Predicated region
        $region13: #{tpu_custom_call.1} parent=11 // pred_check
          %p298 = pneg %p42
        $region14: #{tpu_custom_call.1} parent=11 // pred_check_branch
          %300 = sbr.rel (%p298) target = $region16
        $region15: #{tpu_custom_call.1} parent=11 // pred_region
          _
        $region16: #{tpu_custom_call.1} parent=11 // pred_fallthru
          _
        // Predicated region
        $region17: #{tpu_custom_call.1} parent=11 // pred_check
          %p301 = pneg %p63
        $region18: #{tpu_custom_call.1} parent=11 // pred_check_branch
          %303 = sbr.rel (%p301) target = $region20
        $region19: #{tpu_custom_call.1} parent=11 // pred_region
          _
        $region20: #{tpu_custom_call.1} parent=11 // pred_fallthru
          _
        // Predicated region
        $region21: #{tpu_custom_call.1} parent=11 // pred_check
          %p304 = pneg %p84
        $region22: #{tpu_custom_call.1} parent=11 // pred_check_branch
          %306 = sbr.rel (%p304) target = $region24
        $region23: #{tpu_custom_call.1} parent=11 // pred_region
          _
        $region24: #{tpu_custom_call.1} parent=11 // pred_fallthru
          _
        // Predicated region
        $region25: #{tpu_custom_call.1} parent=11 // pred_check
          %p307 = pneg %p105
        $region26: #{tpu_custom_call.1} parent=11 // pred_check_branch
          %309 = sbr.rel (%p307) target = $region28
        $region27: #{tpu_custom_call.1} parent=11 // pred_region
          _
        $region28: #{tpu_custom_call.1} parent=11 // pred_fallthru
          _
        // Predicated region
        $region29: #{tpu_custom_call.1} parent=11 // pred_check
          %p310 = pneg %p126
        $region30: #{tpu_custom_call.1} parent=11 // pred_check_branch
          %312 = sbr.rel (%p310) target = $region32
        $region31: #{tpu_custom_call.1} parent=11 // pred_region
          _
        $region32: #{tpu_custom_call.1} parent=11 // pred_fallthru
          _
        // Predicated region
        $region33: #{tpu_custom_call.1} parent=11 // pred_check
          %p313 = pneg %p147
        $region34: #{tpu_custom_call.1} parent=11 // pred_check_branch
          %315 = sbr.rel (%p313) target = $region36
        $region35: #{tpu_custom_call.1} parent=11 // pred_region
          _
        $region36: #{tpu_custom_call.1} parent=11 // pred_fallthru
          _
        // Predicated region
        $region37: #{tpu_custom_call.1} parent=11 // pred_check
          %p316 = pneg %p168
        $region38: #{tpu_custom_call.1} parent=11 // pred_check_branch
          %318 = sbr.rel (%p316) target = $region40
        $region39: #{tpu_custom_call.1} parent=11 // pred_region
          _
        $region40: #{tpu_custom_call.1} parent=11 // pred_fallthru
          _
        // Predicated region
        $region41: #{tpu_custom_call.1} parent=11 // pred_check
          %p319 = pneg %p189
        $region42: #{tpu_custom_call.1} parent=11 // pred_check_branch
          %321 = sbr.rel (%p319) target = $region44
        $region43: #{tpu_custom_call.1} parent=11 // pred_region
          _
        $region44: #{tpu_custom_call.1} parent=11 // pred_fallthru
          _
        // Predicated region
        $region45: #{tpu_custom_call.1} parent=11 // pred_check
          %p322 = pneg %p210
        $region46: #{tpu_custom_call.1} parent=11 // pred_check_branch
          %324 = sbr.rel (%p322) target = $region48
        $region47: #{tpu_custom_call.1} parent=11 // pred_region
          _
        $region48: #{tpu_custom_call.1} parent=11 // pred_fallthru
          _
        // Predicated region
        $region49: #{tpu_custom_call.1} parent=11 // pred_check
          %p325 = pneg %p231
        $region50: #{tpu_custom_call.1} parent=11 // pred_check_branch
          %327 = sbr.rel (%p325) target = $region52
        $region51: #{tpu_custom_call.1} parent=11 // pred_region
          _
        $region52: #{tpu_custom_call.1} parent=11 // pred_fallthru
          _
      $region12: #{tpu_custom_call.1} parent=5 // pred_fallthru
        _
      %p328 = scmp.lt.s32.totalorder %s21, 2
      // Predicated region
      $region53: #{tpu_custom_call.1} parent=5 // pred_check
        %p329 = pneg %p328
      $region54: #{tpu_custom_call.1} parent=5 // pred_check_branch
        %331 = sbr.rel (%p329) target = $region56
      $region55: #{tpu_custom_call.1} parent=5 // pred_region
        _
      $region56: #{tpu_custom_call.1} parent=5 // pred_fallthru
        _
      %p332 = scmp.le.s32.totalorder 1, %s21
      %p333 = scmp.lt.s32.totalorder %s21, 3
      %p334 = pnand %p332, %p333
      %p335 = pneg %p334
      // Predicated region
      $region57: #{tpu_custom_call.1} parent=5 // pred_check
        _
      $region58: #{tpu_custom_call.1} parent=5 // pred_check_branch
        %337 = sbr.rel (%p334) target = $region60
      $region59: #{tpu_custom_call.1} parent=5 // pred_region
        %s338 = ssub.s32 %s21, 1
        %p339 = pneg %p42
        %p340 = pneg %p39
        %p341 = pneg %p63
        %p342 = pneg %p60
        %p343 = pneg %p84
        %p344 = pneg %p81
        %p345 = pneg %p105
        %p346 = pneg %p102
        %p347 = pneg %p126
        %p348 = pneg %p123
        %p349 = pneg %p147
        %p350 = pneg %p144
        %p351 = pneg %p168
        %p352 = pneg %p165
        %p353 = pneg %p189
        %p354 = pneg %p186
        %p355 = pneg %p210
        %p356 = pneg %p207
        %p357 = pneg %p231
        %p358 = pneg %p228
        %p359 = pneg %p257
        %p360 = pneg %p254
        %s361 = sand.u32 %s244, 1
        %s362 = scalar_lea.sflag [#allocation6], %s361
        %s363 = sand.u32 %s244, 1
        %s364 = smul.addr %s363, 128
        %s365 = scalar_lea.vmem [#allocation5], %s364
        %p366 = pneg %p283
        %p367 = pneg %p280
        %p368 = scmp.lt.s32.totalorder %s26, 1
        %s369 = scalar_select %p368, %s26, 1
        %s370 = smul.addr %s369, 8
        %s371 = scalar_lea.vmem %s11, %s370
        %s372 = smul.u32 4, %s26
        %p373 = scmp.lt.s32.totalorder %s26, 1
        %s374 = scalar_select %p373, %s26, 1
        %s375 = smul.addr %s374, 8
        %s376 = scalar_lea.vmem %s11, %s375
        %p377 = scmp.eq.s32.totalorder %s26, 0
        // Predicated region
        $region61: #{tpu_custom_call.1} parent=59 // pred_check
          %p378 = pneg %p377
        $region62: #{tpu_custom_call.1} parent=59 // pred_check_branch
          %380 = sbr.rel (%p378) target = $region64
        $region63: #{tpu_custom_call.1} parent=59 // pred_region
          %vm381 = vcmask 261120
          %382 = vst.msk [vmem:[#allocation2] sm:$0xff] %vm381, 0.0
          %383 = vst.msk [vmem:[#allocation3] sm:$0xff] %vm381, 0.0
          %v384 = vld [vmem:[%s3] sm:$0xff]
          %vm385 = vcmask 130048
          %386 = vst.msk [vmem:[#allocation4] sm:$0xff] %vm385, %v384
        $region64: #{tpu_custom_call.1} parent=59 // pred_fallthru
          _
        %v387 = vld [vmem:[%s0] sm:$0xff]
        %v388 = vld [vmem:[%s0 + $0x8] sm:$0xff]
        %v389 = vld [vmem:[%s0 + $0x10] sm:$0xff]
        %v390 = vld [vmem:[%s0 + $0x18] sm:$0xff]
        %v391 = vld [vmem:[%s0 + $0x20] sm:$0xff]
        %v392 = vld [vmem:[%s0 + $0x28] sm:$0xff]
        %v393 = vld [vmem:[%s0 + $0x30] sm:$0xff]
        %v394 = vld [vmem:[%s0 + $0x38] sm:$0xff]
        %v395 = vld [vmem:[%s0 + $0x40] sm:$0xff]
        %v396 = vld [vmem:[%s0 + $0x48] sm:$0xff]
        %v397 = vld [vmem:[%s0 + $0x50] sm:$0xff]
        %v398 = vld [vmem:[%s0 + $0x58] sm:$0xff]
        %v399 = vld [vmem:[%s0 + $0x60] sm:$0xff]
        %v400 = vld [vmem:[%s0 + $0x68] sm:$0xff]
        %v401 = vld [vmem:[%s0 + $0x70] sm:$0xff]
        %v402 = vld [vmem:[%s0 + $0x78] sm:$0xff]
        %v403 = vld [vmem:[%s1] sm:$0xff]
        %v404 = vld [vmem:[%s1 + $0x8] sm:$0xff]
        %v405 = vld [vmem:[%s1 + $0x10] sm:$0xff]
        %v406 = vld [vmem:[%s1 + $0x18] sm:$0xff]
        %v407 = vld [vmem:[%s1 + $0x20] sm:$0xff]
        %v408 = vld [vmem:[%s1 + $0x28] sm:$0xff]
        %v409 = vld [vmem:[%s1 + $0x30] sm:$0xff]
        %v410 = vld [vmem:[%s1 + $0x38] sm:$0xff]
        %v411 = vld [vmem:[%s1 + $0x40] sm:$0xff]
        %v412 = vld [vmem:[%s1 + $0x48] sm:$0xff]
        %v413 = vld [vmem:[%s1 + $0x50] sm:$0xff]
        %v414 = vld [vmem:[%s1 + $0x58] sm:$0xff]
        %v415 = vld [vmem:[%s1 + $0x60] sm:$0xff]
        %v416 = vld [vmem:[%s1 + $0x68] sm:$0xff]
        %v417 = vld [vmem:[%s1 + $0x70] sm:$0xff]
        %v418 = vld [vmem:[%s1 + $0x78] sm:$0xff]
        %v419 = vld [vmem:[%s2] sm:$0xff]
        %v420 = vld [vmem:[%s4] sm:$0xff]
        %v421 = vld [vmem:[%s4 + $0x8] sm:$0xff]
        %v422 = vld [vmem:[%s4 + $0x10] sm:$0xff]
        %v423 = vld [vmem:[%s4 + $0x18] sm:$0xff]
        %v424 = vld [vmem:[%s4 + $0x20] sm:$0xff]
        %v425 = vld [vmem:[%s4 + $0x28] sm:$0xff]
        %v426 = vld [vmem:[%s4 + $0x30] sm:$0xff]
        %v427 = vld [vmem:[%s4 + $0x38] sm:$0xff]
        %v428 = vld [vmem:[%s4 + $0x40] sm:$0xff]
        %v429 = vld [vmem:[%s4 + $0x48] sm:$0xff]
        %v430 = vld [vmem:[%s4 + $0x50] sm:$0xff]
        %v431 = vld [vmem:[%s4 + $0x58] sm:$0xff]
        %v432 = vld [vmem:[%s4 + $0x60] sm:$0xff]
        %v433 = vld [vmem:[%s4 + $0x68] sm:$0xff]
        %v434 = vld [vmem:[%s4 + $0x70] sm:$0xff]
        %v435 = vld [vmem:[%s4 + $0x78] sm:$0xff]
        %v436 = vld [vmem:[%s4 + $0x80] sm:$0xff]
        %v437 = vld [vmem:[%s4 + $0x88] sm:$0xff]
        %v438 = vld [vmem:[%s4 + $0x90] sm:$0xff]
        %v439 = vld [vmem:[%s4 + $0x98] sm:$0xff]
        %v440 = vld [vmem:[%s4 + $0xa0] sm:$0xff]
        %v441 = vld [vmem:[%s4 + $0xa8] sm:$0xff]
        %v442 = vld [vmem:[%s4 + $0xb0] sm:$0xff]
        %v443 = vld [vmem:[%s4 + $0xb8] sm:$0xff]
        %v444 = vld [vmem:[%s4 + $0xc0] sm:$0xff]
        %v445 = vld [vmem:[%s4 + $0xc8] sm:$0xff]
        %v446 = vld [vmem:[%s4 + $0xd0] sm:$0xff]
        %v447 = vld [vmem:[%s4 + $0xd8] sm:$0xff]
        %v448 = vld [vmem:[%s4 + $0xe0] sm:$0xff]
        %v449 = vld [vmem:[%s4 + $0xe8] sm:$0xff]
        %v450 = vld [vmem:[%s4 + $0xf0] sm:$0xff]
        %v451 = vld [vmem:[%s4 + $0xf8] sm:$0xff]
        %v452 = vld [vmem:[%s4 + $0x100] sm:$0xff]
        %v453 = vld [vmem:[%s4 + $0x108] sm:$0xff]
        %v454 = vld [vmem:[%s4 + $0x110] sm:$0xff]
        %v455 = vld [vmem:[%s4 + $0x118] sm:$0xff]
        %v456 = vld [vmem:[%s4 + $0x120] sm:$0xff]
        %v457 = vld [vmem:[%s4 + $0x128] sm:$0xff]
        %v458 = vld [vmem:[%s4 + $0x130] sm:$0xff]
        %v459 = vld [vmem:[%s4 + $0x138] sm:$0xff]
        %v460 = vld [vmem:[%s4 + $0x140] sm:$0xff]
        %v461 = vld [vmem:[%s4 + $0x148] sm:$0xff]
        %v462 = vld [vmem:[%s4 + $0x150] sm:$0xff]
        %v463 = vld [vmem:[%s4 + $0x158] sm:$0xff]
        %v464 = vld [vmem:[%s4 + $0x160] sm:$0xff]
        %v465 = vld [vmem:[%s4 + $0x168] sm:$0xff]
        %v466 = vld [vmem:[%s4 + $0x170] sm:$0xff]
        %v467 = vld [vmem:[%s4 + $0x178] sm:$0xff]
        %v468 = vld [vmem:[%s4 + $0x180] sm:$0xff]
        %v469 = vld [vmem:[%s4 + $0x188] sm:$0xff]
        %v470 = vld [vmem:[%s4 + $0x190] sm:$0xff]
        %v471 = vld [vmem:[%s4 + $0x198] sm:$0xff]
        %v472 = vld [vmem:[%s4 + $0x1a0] sm:$0xff]
        %v473 = vld [vmem:[%s4 + $0x1a8] sm:$0xff]
        %v474 = vld [vmem:[%s4 + $0x1b0] sm:$0xff]
        %v475 = vld [vmem:[%s4 + $0x1b8] sm:$0xff]
        %v476 = vld [vmem:[%s4 + $0x1c0] sm:$0xff]
        %v477 = vld [vmem:[%s4 + $0x1c8] sm:$0xff]
        %v478 = vld [vmem:[%s4 + $0x1d0] sm:$0xff]
        %v479 = vld [vmem:[%s4 + $0x1d8] sm:$0xff]
        %v480 = vld [vmem:[%s4 + $0x1e0] sm:$0xff]
        %v481 = vld [vmem:[%s4 + $0x1e8] sm:$0xff]
        %v482 = vld [vmem:[%s4 + $0x1f0] sm:$0xff]
        %v483 = vld [vmem:[%s4 + $0x1f8] sm:$0xff]
        %v484 = vld [vmem:[%s5] sm:$0xff]
        %v485 = vld [vmem:[%s5 + $0x8] sm:$0xff]
        %v486 = vld [vmem:[%s5 + $0x10] sm:$0xff]
        %v487 = vld [vmem:[%s5 + $0x18] sm:$0xff]
        %v488 = vld [vmem:[%s5 + $0x20] sm:$0xff]
        %v489 = vld [vmem:[%s5 + $0x28] sm:$0xff]
        %v490 = vld [vmem:[%s5 + $0x30] sm:$0xff]
        %v491 = vld [vmem:[%s5 + $0x38] sm:$0xff]
        %v492 = vld [vmem:[%s5 + $0x40] sm:$0xff]
        %v493 = vld [vmem:[%s5 + $0x48] sm:$0xff]
        %v494 = vld [vmem:[%s5 + $0x50] sm:$0xff]
        %v495 = vld [vmem:[%s5 + $0x58] sm:$0xff]
        %v496 = vld [vmem:[%s5 + $0x60] sm:$0xff]
        %v497 = vld [vmem:[%s5 + $0x68] sm:$0xff]
        %v498 = vld [vmem:[%s6] sm:$0xff]
        %v499 = vld [vmem:[%s6 + $0x8] sm:$0xff]
        %v500 = vld [vmem:[%s6 + $0x10] sm:$0xff]
        %v501 = vld [vmem:[%s6 + $0x18] sm:$0xff]
        %v502 = vld [vmem:[%s7] sm:$0x1]
        %v503 = vld [vmem:[%s8] sm:$0xff]
        %v504 = vld [vmem:[%s8 + $0x8] sm:$0xff]
        %v505 = vld [vmem:[%s8 + $0x10] sm:$0xff]
        %v506 = vld [vmem:[%s8 + $0x18] sm:$0xff]
        %v507 = vld [vmem:[%s8 + $0x20] sm:$0xff]
        %v508 = vld [vmem:[%s8 + $0x28] sm:$0xff]
        %v509 = vld [vmem:[%s8 + $0x30] sm:$0xff]
        %v510 = vld [vmem:[%s8 + $0x38] sm:$0xff]
        %v511 = vld [vmem:[%s8 + $0x40] sm:$0xff]
        %v512 = vld [vmem:[%s8 + $0x48] sm:$0xff]
        %v513 = vld [vmem:[%s8 + $0x50] sm:$0xff]
        %v514 = vld [vmem:[%s8 + $0x58] sm:$0xff]
        %v515 = vld [vmem:[%s8 + $0x60] sm:$0xff]
        %v516 = vld [vmem:[%s8 + $0x68] sm:$0xff]
        %v517 = vld [vmem:[%s8 + $0x70] sm:$0xff]
        %v518 = vld [vmem:[%s8 + $0x78] sm:$0xff]
        %v519 = vld [vmem:[%s9] sm:$0xf]
        %v520 = vlaneseq
        %v521 = vand.u32 %v520, 127
        %v522 = vadd.s32 %v521, 128
        %v523 = vadd.s32 %v521, 256
        %v524 = vadd.s32 %v521, 384
        %v525 = vld [vmem:[#allocation2] sm:$0xff]
        %v526 = vld [vmem:[#allocation3] sm:$0xff]
        %v527 = vld [vmem:[#allocation4] sm:$0xff]
        %vm528 = vcmask 261120
        %v530 = vsel %vm528, %v525, 0
        %532 = vmatprep.subr.mxu0 0.0
        %533 = vmatpush1.msra.mxu0 %v498
        %534 = vmatprep.subr.mxu0 0.0
        %535 = vmatpush1.msra.mxu0 %v499
        %536 = vmatprep.subr.mxu0 0.0
        %537 = vmatpush1.msra.mxu0 %v500
        %538 = vmatprep.subr.mxu0 0.0
        %539 = vmatpush1.msra.mxu0 %v501
        %540 = vmatprep.subr.mxu0 0.0
        %541 = vmatpush1.msra.mxu0 0.0
        %542 = vmatprep.subr.mxu0 0.0
        %543 = vmatpush1.msra.mxu0 0.0
        %544 = vmatprep.subr.mxu0 0.0
        %545 = vmatpush1.msra.mxu0 0.0
        %546 = vmatprep.subr.mxu0 0.0
        %547 = vmatpush1.msra.mxu0 0.0
        %548 = vmatprep.subr.mxu0 0.0
        %549 = vmatpush1.msra.mxu0 0.0
        %550 = vmatprep.subr.mxu0 0.0
        %551 = vmatpush1.msra.mxu0 0.0
        %552 = vmatprep.subr.mxu0 0.0
        %553 = vmatpush1.msra.mxu0 0.0
        %554 = vmatprep.subr.mxu0 0.0
        %555 = vmatpush1.msra.mxu0 0.0
        %556 = vmatprep.subr.mxu0 0.0
        %557 = vmatpush1.msra.mxu0 0.0
        %558 = vmatprep.subr.mxu0 0.0
        %559 = vmatpush1.msra.mxu0 0.0
        %560 = vmatprep.subr.mxu0 0.0
        %561 = vmatpush1.msra.mxu0 0.0
        %562 = vmatprep.subr.mxu0 0.0
        %563 = vmatpush1.msra.mxu0 0.0
        %564 = vmatprep.subr.mxu0 0.0
        %565 = vmatpush1.msra.mxu0 0.0
        %566 = vmatprep.subr.mxu0 0.0
        %567 = vmatpush1.msra.mxu0 0.0
        %568 = vmatprep.subr.mxu0 0.0
        %569 = vmatpush1.msra.mxu0 0.0
        %570 = vmatprep.subr.mxu0 0.0
        %571 = vmatpush1.msra.mxu0 0.0
        %572 = vmatprep.subr.mxu0 0.0
        %573 = vmatpush1.msra.mxu0 0.0
        %574 = vmatprep.subr.mxu0 0.0
        %575 = vmatpush1.msra.mxu0 0.0
        %576 = vmatprep.subr.mxu0 0.0
        %577 = vmatpush1.msra.mxu0 0.0
        %578 = vmatprep.subr.mxu0 0.0
        %579 = vmatpush1.msra.mxu0 0.0
        %580 = vmatprep.subr.mxu0 0.0
        %581 = vmatpush1.msra.mxu0 0.0
        %582 = vmatprep.subr.mxu0 0.0
        %583 = vmatpush1.msra.mxu0 0.0
        %584 = vmatprep.subr.mxu0 0.0
        %585 = vmatpush1.msra.mxu0 0.0
        %586 = vmatprep.subr.mxu0 0.0
        %587 = vmatpush1.msra.mxu0 0.0
        %588 = vmatprep.subr.mxu0 0.0
        %589 = vmatpush1.msra.mxu0 0.0
        %590 = vmatprep.subr.mxu0 0.0
        %591 = vmatpush1.msra.mxu0 0.0
        %592 = vmatprep.subr.mxu0 0.0
        %593 = vmatpush1.msra.mxu0 0.0
        %594 = vmatprep.subr.mxu0 0.0
        %595 = vmatpush1.msra.mxu0 0.0
        %596 = vmatprep.mubr.f32.mxu0 0.0
        %597 = vmatmul.mubr.f32.gmra.mrb[0].mxu0 %v530
        %v598 = vpop.f32.mrb[0].mxu0
        %v599 = vadd.f32 0.0, %v598
        %v600 = vpop.f32.mrb[0].mxu0
        %601 = vdwg.mxu0
        %v603 = vcombine.high %v599, %v599
        %v605 = vunpack.c.l.s4 1966171168
        %v606 = vunpack.c.0.s8 %v605
        %v607 = vlaneseq
        %v608 = vshrl.u32 %v607, 7
        %v609 = vsub.s32 %v606, %v608
        %v610 = vrot.slane %v599, %v609
        %v612 = vunpack.c.l.s4 1966171168
        %v613 = vunpack.c.0.s8 %v612
        %v614 = vlaneseq
        %v615 = vshrl.u32 %v614, 7
        %v616 = vsub.s32 %v613, %v615
        %v617 = vrot.slane %v603, %v616
        %v618 = vcombine.high %v610, %v610
        %v619 = vcombine.high %v617, %v617
        %v621 = vunpack.c.l.s4 1966171168
        %v622 = vunpack.c.0.s8 %v621
        %v623 = vlaneseq
        %v624 = vshrl.u32 %v623, 7
        %v625 = vsub.s32 %v622, %v624
        %v626 = vrot.slane %v610, %v625
        %v628 = vunpack.c.l.s4 1966171168
        %v629 = vunpack.c.0.s8 %v628
        %v630 = vlaneseq
        %v631 = vshrl.u32 %v630, 7
        %v632 = vsub.s32 %v629, %v631
        %v633 = vrot.slane %v617, %v632
        %v635 = vunpack.c.l.s4 1966171168
        %v636 = vunpack.c.0.s8 %v635
        %v637 = vlaneseq
        %v638 = vshrl.u32 %v637, 7
        %v639 = vsub.s32 %v636, %v638
        %v640 = vrot.slane %v618, %v639
        %v642 = vunpack.c.l.s4 1966171168
        %v643 = vunpack.c.0.s8 %v642
        %v644 = vlaneseq
        %v645 = vshrl.u32 %v644, 7
        %v646 = vsub.s32 %v643, %v645
        %v647 = vrot.slane %v619, %v646
        %v648 = vcombine.high %v626, %v626
        %v649 = vcombine.high %v633, %v633
        %v650 = vcombine.high %v640, %v640
        %v651 = vcombine.high %v647, %v647
        %v652 = vlaneseq
        %v653 = vshrl.u32 %v652, 7
        %v654 = vsub.s32 0, %v653
        %v655 = vrot.slane %v626, %v654
        %v656 = vlaneseq
        %v657 = vshrl.u32 %v656, 7
        %v658 = vsub.s32 0, %v657
        %v659 = vrot.slane %v640, %v658
        %v660 = vlaneseq
        %v661 = vshrl.u32 %v660, 7
        %v662 = vsub.s32 0, %v661
        %v663 = vrot.slane %v648, %v662
        %v664 = vlaneseq
        %v665 = vshrl.u32 %v664, 7
        %v666 = vsub.s32 0, %v665
        %v667 = vrot.slane %v650, %v666
        %v668 = vlaneseq
        %v669 = vshrl.u32 %v668, 7
        %v670 = vsub.s32 0, %v669
        %v671 = vrot.slane %v633, %v670
        %v672 = vlaneseq
        %v673 = vshrl.u32 %v672, 7
        %v674 = vsub.s32 0, %v673
        %v675 = vrot.slane %v647, %v674
        %v676 = vlaneseq
        %v677 = vshrl.u32 %v676, 7
        %v678 = vsub.s32 0, %v677
        %v679 = vrot.slane %v649, %v678
        %v680 = vlaneseq
        %v681 = vshrl.u32 %v680, 7
        %v682 = vsub.s32 0, %v681
        %v683 = vrot.slane %v651, %v682
        %v692 = vadd.f32 %v403, %v655
        %v693 = vadd.f32 %v404, %v655
        %v694 = vadd.f32 %v405, %v659
        %v695 = vadd.f32 %v406, %v659
        %v696 = vadd.f32 %v407, %v663
        %v697 = vadd.f32 %v408, %v663
        %v698 = vadd.f32 %v409, %v667
        %v699 = vadd.f32 %v410, %v667
        %v700 = vadd.f32 %v411, %v671
        %v701 = vadd.f32 %v412, %v671
        %v702 = vadd.f32 %v413, %v675
        %v703 = vadd.f32 %v414, %v675
        %v704 = vadd.f32 %v415, %v679
        %v705 = vadd.f32 %v416, %v679
        %v706 = vadd.f32 %v417, %v683
        %v707 = vadd.f32 %v418, %v683
        %v708 = vtanh.pop %v692
        %v709 = vtanh.pop %v693
        %v710 = vtanh.pop %v694
        %v711 = vtanh.pop %v695
        %v712 = vtanh.pop %v696
        %v713 = vtanh.pop %v697
        %v714 = vtanh.pop %v698
        %v715 = vtanh.pop %v699
        %v716 = vtanh.pop %v700
        %v717 = vtanh.pop %v701
        %v718 = vtanh.pop %v702
        %v719 = vtanh.pop %v703
        %v720 = vtanh.pop %v704
        %v721 = vtanh.pop %v705
        %v722 = vtanh.pop %v706
        %v723 = vtanh.pop %v707
        %v725 = vlaneseq
        %v726 = vshrl.u32 %v725, 7
        %v727 = vsub.s32 0, %v726
        %v728 = vrot.slane %v502, %v727
        %v730 = vmul.f32 %v708, %v728
        %v731 = vmul.f32 %v709, %v728
        %v732 = vmul.f32 %v710, %v728
        %v733 = vmul.f32 %v711, %v728
        %v734 = vmul.f32 %v712, %v728
        %v735 = vmul.f32 %v713, %v728
        %v736 = vmul.f32 %v714, %v728
        %v737 = vmul.f32 %v715, %v728
        %v738 = vmul.f32 %v716, %v728
        %v739 = vmul.f32 %v717, %v728
        %v740 = vmul.f32 %v718, %v728
        %v741 = vmul.f32 %v719, %v728
        %v742 = vmul.f32 %v720, %v728
        %v743 = vmul.f32 %v721, %v728
        %v744 = vmul.f32 %v722, %v728
        %v745 = vmul.f32 %v723, %v728
        %v746 = vsel %vm528, %v730, 0.0
        %747 = vadd.xlane.f32.xlu0 %v746
        %v748 = vpop.xlane.xlu0 %747
        %v749 = vsel %vm528, %v731, 0.0
        %750 = vadd.xlane.f32.xlu0 %v749
        %v751 = vpop.xlane.xlu0 %750
        %v752 = vsel %vm528, %v732, 0.0
        %753 = vadd.xlane.f32.xlu0 %v752
        %v754 = vpop.xlane.xlu0 %753
        %v755 = vsel %vm528, %v733, 0.0
        %756 = vadd.xlane.f32.xlu0 %v755
        %v757 = vpop.xlane.xlu0 %756
        %v758 = vsel %vm528, %v734, 0.0
        %759 = vadd.xlane.f32.xlu0 %v758
        %v760 = vpop.xlane.xlu0 %759
        %v761 = vsel %vm528, %v735, 0.0
        %762 = vadd.xlane.f32.xlu0 %v761
        %v763 = vpop.xlane.xlu0 %762
        %v764 = vsel %vm528, %v736, 0.0
        %765 = vadd.xlane.f32.xlu0 %v764
        %v766 = vpop.xlane.xlu0 %765
        %v767 = vsel %vm528, %v737, 0.0
        %768 = vadd.xlane.f32.xlu0 %v767
        %v769 = vpop.xlane.xlu0 %768
        %v770 = vsel %vm528, %v738, 0.0
        %771 = vadd.xlane.f32.xlu0 %v770
        %v772 = vpop.xlane.xlu0 %771
        %v773 = vsel %vm528, %v739, 0.0
        %774 = vadd.xlane.f32.xlu0 %v773
        %v775 = vpop.xlane.xlu0 %774
        %v776 = vsel %vm528, %v740, 0.0
        %777 = vadd.xlane.f32.xlu0 %v776
        %v778 = vpop.xlane.xlu0 %777
        %v779 = vsel %vm528, %v741, 0.0
        %780 = vadd.xlane.f32.xlu0 %v779
        %v781 = vpop.xlane.xlu0 %780
        %v782 = vsel %vm528, %v742, 0.0
        %783 = vadd.xlane.f32.xlu0 %v782
        %v784 = vpop.xlane.xlu0 %783
        %v785 = vsel %vm528, %v743, 0.0
        %786 = vadd.xlane.f32.xlu0 %v785
        %v787 = vpop.xlane.xlu0 %786
        %v788 = vsel %vm528, %v744, 0.0
        %789 = vadd.xlane.f32.xlu0 %v788
        %v790 = vpop.xlane.xlu0 %789
        %v791 = vsel %vm528, %v745, 0.0
        %792 = vadd.xlane.f32.xlu0 %v791
        %v793 = vpop.xlane.xlu0 %792
        %v810 = vlaneseq
        %v811 = vshrl.u32 %v810, 7
        %v812 = vsub.s32 %v521, %v811
        %v813 = vrot.slane %v748, %v812
        %v814 = vadd.s32 %v521, 4294967288
        %v815 = vlaneseq
        %v816 = vshrl.u32 %v815, 7
        %v817 = vsub.s32 %v814, %v816
        %v818 = vrot.slane %v751, %v817
        %vm819 = vcmask 130112
        %v820 = vsel %vm819, %v818, %v813
        %v821 = vlaneseq
        %v822 = vshrl.u32 %v821, 7
        %v823 = vsub.s32 %v521, %v822
        %v824 = vrot.slane %v754, %v823
        %v825 = vlaneseq
        %v826 = vshrl.u32 %v825, 7
        %v827 = vsub.s32 %v814, %v826
        %v828 = vrot.slane %v757, %v827
        %v829 = vsel %vm819, %v828, %v824
        %v830 = vlaneseq
        %v831 = vshrl.u32 %v830, 7
        %v832 = vsub.s32 %v521, %v831
        %v833 = vrot.slane %v760, %v832
        %v834 = vlaneseq
        %v835 = vshrl.u32 %v834, 7
        %v836 = vsub.s32 %v814, %v835
        %v837 = vrot.slane %v763, %v836
        %v838 = vsel %vm819, %v837, %v833
        %v839 = vlaneseq
        %v840 = vshrl.u32 %v839, 7
        %v841 = vsub.s32 %v521, %v840
        %v842 = vrot.slane %v766, %v841
        %v843 = vlaneseq
        %v844 = vshrl.u32 %v843, 7
        %v845 = vsub.s32 %v814, %v844
        %v846 = vrot.slane %v769, %v845
        %v847 = vsel %vm819, %v846, %v842
        %v848 = vlaneseq
        %v849 = vshrl.u32 %v848, 7
        %v850 = vsub.s32 %v521, %v849
        %v851 = vrot.slane %v772, %v850
        %v852 = vlaneseq
        %v853 = vshrl.u32 %v852, 7
        %v854 = vsub.s32 %v814, %v853
        %v855 = vrot.slane %v775, %v854
        %v856 = vsel %vm819, %v855, %v851
        %v857 = vlaneseq
        %v858 = vshrl.u32 %v857, 7
        %v859 = vsub.s32 %v521, %v858
        %v860 = vrot.slane %v778, %v859
        %v861 = vlaneseq
        %v862 = vshrl.u32 %v861, 7
        %v863 = vsub.s32 %v814, %v862
        %v864 = vrot.slane %v781, %v863
        %v865 = vsel %vm819, %v864, %v860
        %v866 = vlaneseq
        %v867 = vshrl.u32 %v866, 7
        %v868 = vsub.s32 %v521, %v867
        %v869 = vrot.slane %v784, %v868
        %v870 = vlaneseq
        %v871 = vshrl.u32 %v870, 7
        %v872 = vsub.s32 %v814, %v871
        %v873 = vrot.slane %v787, %v872
        %v874 = vsel %vm819, %v873, %v869
        %v875 = vlaneseq
        %v876 = vshrl.u32 %v875, 7
        %v877 = vsub.s32 %v521, %v876
        %v878 = vrot.slane %v790, %v877
        %v879 = vlaneseq
        %v880 = vshrl.u32 %v879, 7
        %v881 = vsub.s32 %v814, %v880
        %v882 = vrot.slane %v793, %v881
        %v883 = vsel %vm819, %v882, %v878
        %vm884 = vcmask 1041409
        %v885 = vsel %vm884, %v829, %v820
        %vm886 = vcmask 1042434
        %v887 = vsel %vm886, %v838, %v885
        %vm888 = vcmask 1043459
        %v889 = vsel %vm888, %v847, %v887
        %vm890 = vcmask 1044484
        %v891 = vsel %vm890, %v856, %v889
        %vm892 = vcmask 1045509
        %v893 = vsel %vm892, %v865, %v891
        %vm894 = vcmask 1046534
        %v895 = vsel %vm894, %v874, %v893
        %vm896 = vcmask 1047559
        %v897 = vsel %vm896, %v883, %v895
        %vm899 = vcmask 130048
        %v900 = vsel %vm899, %v897, -inf
        %901 = vmax.xlane.f32.xlu0 %v900
        %v902 = vpop.xlane.xlu0 %901
        %v904 = vlaneseq
        %v905 = vshrl.u32 %v904, 7
        %v906 = vsub.s32 0, %v905
        %v907 = vrot.slane %v902, %v906
        %v908 = vlaneseq
        %v909 = vshrl.u32 %v908, 7
        %v910 = vsub.s32 1, %v909
        %v911 = vrot.slane %v902, %v910
        %v912 = vlaneseq
        %v913 = vshrl.u32 %v912, 7
        %v914 = vsub.s32 2, %v913
        %v915 = vrot.slane %v902, %v914
        %v916 = vlaneseq
        %v917 = vshrl.u32 %v916, 7
        %v918 = vsub.s32 3, %v917
        %v919 = vrot.slane %v902, %v918
        %v920 = vlaneseq
        %v921 = vshrl.u32 %v920, 7
        %v922 = vsub.s32 4, %v921
        %v923 = vrot.slane %v902, %v922
        %v924 = vlaneseq
        %v925 = vshrl.u32 %v924, 7
        %v926 = vsub.s32 5, %v925
        %v927 = vrot.slane %v902, %v926
        %v928 = vlaneseq
        %v929 = vshrl.u32 %v928, 7
        %v930 = vsub.s32 6, %v929
        %v931 = vrot.slane %v902, %v930
        %v932 = vlaneseq
        %v933 = vshrl.u32 %v932, 7
        %v934 = vsub.s32 7, %v933
        %v935 = vrot.slane %v902, %v934
        %v944 = vsub.f32 %v748, %v907
        %v945 = vsub.f32 %v751, %v907
        %v946 = vsub.f32 %v754, %v911
        %v947 = vsub.f32 %v757, %v911
        %v948 = vsub.f32 %v760, %v915
        %v949 = vsub.f32 %v763, %v915
        %v950 = vsub.f32 %v766, %v919
        %v951 = vsub.f32 %v769, %v919
        %v952 = vsub.f32 %v772, %v923
        %v953 = vsub.f32 %v775, %v923
        %v954 = vsub.f32 %v778, %v927
        %v955 = vsub.f32 %v781, %v927
        %v956 = vsub.f32 %v784, %v931
        %v957 = vsub.f32 %v787, %v931
        %v958 = vsub.f32 %v790, %v935
        %v959 = vsub.f32 %v793, %v935
        %v960 = vmul.f32 %v944, 1.442695
        %v961 = vpow.pop %v960
        %v962 = vmul.f32 %v945, 1.442695
        %v963 = vpow.pop %v962
        %v964 = vmul.f32 %v946, 1.442695
        %v965 = vpow.pop %v964
        %v966 = vmul.f32 %v947, 1.442695
        %v967 = vpow.pop %v966
        %v968 = vmul.f32 %v948, 1.442695
        %v969 = vpow.pop %v968
        %v970 = vmul.f32 %v949, 1.442695
        %v971 = vpow.pop %v970
        %v972 = vmul.f32 %v950, 1.442695
        %v973 = vpow.pop %v972
        %v974 = vmul.f32 %v951, 1.442695
        %v975 = vpow.pop %v974
        %v976 = vmul.f32 %v952, 1.442695
        %v977 = vpow.pop %v976
        %v978 = vmul.f32 %v953, 1.442695
        %v979 = vpow.pop %v978
        %v980 = vmul.f32 %v954, 1.442695
        %v981 = vpow.pop %v980
        %v982 = vmul.f32 %v955, 1.442695
        %v983 = vpow.pop %v982
        %v984 = vmul.f32 %v956, 1.442695
        %v985 = vpow.pop %v984
        %v986 = vmul.f32 %v957, 1.442695
        %v987 = vpow.pop %v986
        %v988 = vmul.f32 %v958, 1.442695
        %v989 = vpow.pop %v988
        %v990 = vmul.f32 %v959, 1.442695
        %v991 = vpow.pop %v990
        %1008 = vset.pattern.permute.xlu0 0
        %1009 = vperm.xlu0 %1008, %v961
        %v1010 = vpop.permute.xlu0 %1009
        %1011 = vset.pattern.permute.xlu0 0
        %1012 = vperm.xlu0 %1011, %v963
        %v1013 = vpop.permute.xlu0 %1012
        %1014 = vset.pattern.permute.xlu0 0
        %1015 = vperm.xlu0 %1014, %v965
        %v1016 = vpop.permute.xlu0 %1015
        %1017 = vset.pattern.permute.xlu0 0
        %1018 = vperm.xlu0 %1017, %v967
        %v1019 = vpop.permute.xlu0 %1018
        %1020 = vset.pattern.permute.xlu0 0
        %1021 = vperm.xlu0 %1020, %v969
        %v1022 = vpop.permute.xlu0 %1021
        %1023 = vset.pattern.permute.xlu0 0
        %1024 = vperm.xlu0 %1023, %v971
        %v1025 = vpop.permute.xlu0 %1024
        %1026 = vset.pattern.permute.xlu0 0
        %1027 = vperm.xlu0 %1026, %v973
        %v1028 = vpop.permute.xlu0 %1027
        %1029 = vset.pattern.permute.xlu0 0
        %1030 = vperm.xlu0 %1029, %v975
        %v1031 = vpop.permute.xlu0 %1030
        %1032 = vset.pattern.permute.xlu0 0
        %1033 = vperm.xlu0 %1032, %v977
        %v1034 = vpop.permute.xlu0 %1033
        %1035 = vset.pattern.permute.xlu0 0
        %1036 = vperm.xlu0 %1035, %v979
        %v1037 = vpop.permute.xlu0 %1036
        %1038 = vset.pattern.permute.xlu0 0
        %1039 = vperm.xlu0 %1038, %v981
        %v1040 = vpop.permute.xlu0 %1039
        %1041 = vset.pattern.permute.xlu0 0
        %1042 = vperm.xlu0 %1041, %v983
        %v1043 = vpop.permute.xlu0 %1042
        %1044 = vset.pattern.permute.xlu0 0
        %1045 = vperm.xlu0 %1044, %v985
        %v1046 = vpop.permute.xlu0 %1045
        %1047 = vset.pattern.permute.xlu0 0
        %1048 = vperm.xlu0 %1047, %v987
        %v1049 = vpop.permute.xlu0 %1048
        %1050 = vset.pattern.permute.xlu0 0
        %1051 = vperm.xlu0 %1050, %v989
        %v1052 = vpop.permute.xlu0 %1051
        %1053 = vset.pattern.permute.xlu0 0
        %1054 = vperm.xlu0 %1053, %v991
        %v1055 = vpop.permute.xlu0 %1054
        %v1056 = vlaneseq
        %v1057 = vshrl.u32 %v1056, 7
        %v1058 = vsub.s32 %v521, %v1057
        %v1059 = vrot.slane %v1010, %v1058
        %v1060 = vlaneseq
        %v1061 = vshrl.u32 %v1060, 7
        %v1062 = vsub.s32 %v814, %v1061
        %v1063 = vrot.slane %v1013, %v1062
        %v1064 = vsel %vm819, %v1063, %v1059
        %v1065 = vlaneseq
        %v1066 = vshrl.u32 %v1065, 7
        %v1067 = vsub.s32 %v521, %v1066
        %v1068 = vrot.slane %v1016, %v1067
        %v1069 = vlaneseq
        %v1070 = vshrl.u32 %v1069, 7
        %v1071 = vsub.s32 %v814, %v1070
        %v1072 = vrot.slane %v1019, %v1071
        %v1073 = vsel %vm819, %v1072, %v1068
        %v1074 = vlaneseq
        %v1075 = vshrl.u32 %v1074, 7
        %v1076 = vsub.s32 %v521, %v1075
        %v1077 = vrot.slane %v1022, %v1076
        %v1078 = vlaneseq
        %v1079 = vshrl.u32 %v1078, 7
        %v1080 = vsub.s32 %v814, %v1079
        %v1081 = vrot.slane %v1025, %v1080
        %v1082 = vsel %vm819, %v1081, %v1077
        %v1083 = vlaneseq
        %v1084 = vshrl.u32 %v1083, 7
        %v1085 = vsub.s32 %v521, %v1084
        %v1086 = vrot.slane %v1028, %v1085
        %v1087 = vlaneseq
        %v1088 = vshrl.u32 %v1087, 7
        %v1089 = vsub.s32 %v814, %v1088
        %v1090 = vrot.slane %v1031, %v1089
        %v1091 = vsel %vm819, %v1090, %v1086
        %v1092 = vlaneseq
        %v1093 = vshrl.u32 %v1092, 7
        %v1094 = vsub.s32 %v521, %v1093
        %v1095 = vrot.slane %v1034, %v1094
        %v1096 = vlaneseq
        %v1097 = vshrl.u32 %v1096, 7
        %v1098 = vsub.s32 %v814, %v1097
        %v1099 = vrot.slane %v1037, %v1098
        %v1100 = vsel %vm819, %v1099, %v1095
        %v1101 = vlaneseq
        %v1102 = vshrl.u32 %v1101, 7
        %v1103 = vsub.s32 %v521, %v1102
        %v1104 = vrot.slane %v1040, %v1103
        %v1105 = vlaneseq
        %v1106 = vshrl.u32 %v1105, 7
        %v1107 = vsub.s32 %v814, %v1106
        %v1108 = vrot.slane %v1043, %v1107
        %v1109 = vsel %vm819, %v1108, %v1104
        %v1110 = vlaneseq
        %v1111 = vshrl.u32 %v1110, 7
        %v1112 = vsub.s32 %v521, %v1111
        %v1113 = vrot.slane %v1046, %v1112
        %v1114 = vlaneseq
        %v1115 = vshrl.u32 %v1114, 7
        %v1116 = vsub.s32 %v814, %v1115
        %v1117 = vrot.slane %v1049, %v1116
        %v1118 = vsel %vm819, %v1117, %v1113
        %v1119 = vlaneseq
        %v1120 = vshrl.u32 %v1119, 7
        %v1121 = vsub.s32 %v521, %v1120
        %v1122 = vrot.slane %v1052, %v1121
        %v1123 = vlaneseq
        %v1124 = vshrl.u32 %v1123, 7
        %v1125 = vsub.s32 %v814, %v1124
        %v1126 = vrot.slane %v1055, %v1125
        %v1127 = vsel %vm819, %v1126, %v1122
        %v1128 = vsel %vm884, %v1073, %v1064
        %v1129 = vsel %vm886, %v1082, %v1128
        %v1130 = vsel %vm888, %v1091, %v1129
        %v1131 = vsel %vm890, %v1100, %v1130
        %v1132 = vsel %vm892, %v1109, %v1131
        %v1133 = vsel %vm894, %v1118, %v1132
        %v1134 = vsel %vm896, %v1127, %v1133
        %v1136 = vsel %vm899, %v1134, 0.0
        %1137 = vadd.xlane.f32.xlu0 %v1136
        %v1138 = vpop.xlane.xlu0 %1137
        %v1139 = vrcp.pop %v1138
        %v1140 = vmul.f32 %v1138, %v1139
        %v1141 = vsub.f32 2.0, %v1140
        %v1142 = vmul.f32 %v1139, %v1141
        %v1144 = vlaneseq
        %v1145 = vshrl.u32 %v1144, 7
        %v1146 = vsub.s32 0, %v1145
        %v1147 = vrot.slane %v1142, %v1146
        %v1148 = vlaneseq
        %v1149 = vshrl.u32 %v1148, 7
        %v1150 = vsub.s32 1, %v1149
        %v1151 = vrot.slane %v1142, %v1150
        %v1152 = vlaneseq
        %v1153 = vshrl.u32 %v1152, 7
        %v1154 = vsub.s32 2, %v1153
        %v1155 = vrot.slane %v1142, %v1154
        %v1156 = vlaneseq
        %v1157 = vshrl.u32 %v1156, 7
        %v1158 = vsub.s32 3, %v1157
        %v1159 = vrot.slane %v1142, %v1158
        %v1160 = vlaneseq
        %v1161 = vshrl.u32 %v1160, 7
        %v1162 = vsub.s32 4, %v1161
        %v1163 = vrot.slane %v1142, %v1162
        %v1164 = vlaneseq
        %v1165 = vshrl.u32 %v1164, 7
        %v1166 = vsub.s32 5, %v1165
        %v1167 = vrot.slane %v1142, %v1166
        %v1168 = vlaneseq
        %v1169 = vshrl.u32 %v1168, 7
        %v1170 = vsub.s32 6, %v1169
        %v1171 = vrot.slane %v1142, %v1170
        %v1172 = vlaneseq
        %v1173 = vshrl.u32 %v1172, 7
        %v1174 = vsub.s32 7, %v1173
        %v1175 = vrot.slane %v1142, %v1174
        %v1184 = vmul.f32 %v961, %v1147
        %v1185 = vmul.f32 %v963, %v1147
        %v1186 = vmul.f32 %v965, %v1151
        %v1187 = vmul.f32 %v967, %v1151
        %v1188 = vmul.f32 %v969, %v1155
        %v1189 = vmul.f32 %v971, %v1155
        %v1190 = vmul.f32 %v973, %v1159
        %v1191 = vmul.f32 %v975, %v1159
        %v1192 = vmul.f32 %v977, %v1163
        %v1193 = vmul.f32 %v979, %v1163
        %v1194 = vmul.f32 %v981, %v1167
        %v1195 = vmul.f32 %v983, %v1167
        %v1196 = vmul.f32 %v985, %v1171
        %v1197 = vmul.f32 %v987, %v1171
        %v1198 = vmul.f32 %v989, %v1175
        %v1199 = vmul.f32 %v991, %v1175
        %1201 = vset.pattern.permute.xlu0 0
        %1202 = vperm.xlu0 %1201, %v1184
        %v1203 = vpop.permute.xlu0 %1202
        %1206 = vset.pattern.permute.xlu0 0
        %1207 = vperm.xlu0 %1206, %v1185
        %v1208 = vpop.permute.xlu0 %1207
        %1211 = vset.pattern.permute.xlu0 0
        %1212 = vperm.xlu0 %1211, %v1186
        %v1213 = vpop.permute.xlu0 %1212
        %1216 = vset.pattern.permute.xlu0 0
        %1217 = vperm.xlu0 %1216, %v1187
        %v1218 = vpop.permute.xlu0 %1217
        %1221 = vset.pattern.permute.xlu0 0
        %1222 = vperm.xlu0 %1221, %v1188
        %v1223 = vpop.permute.xlu0 %1222
        %1226 = vset.pattern.permute.xlu0 0
        %1227 = vperm.xlu0 %1226, %v1189
        %v1228 = vpop.permute.xlu0 %1227
        %1231 = vset.pattern.permute.xlu0 0
        %1232 = vperm.xlu0 %1231, %v1190
        %v1233 = vpop.permute.xlu0 %1232
        %1236 = vset.pattern.permute.xlu0 0
        %1237 = vperm.xlu0 %1236, %v1191
        %v1238 = vpop.permute.xlu0 %1237
        %1241 = vset.pattern.permute.xlu0 0
        %1242 = vperm.xlu0 %1241, %v1192
        %v1243 = vpop.permute.xlu0 %1242
        %1246 = vset.pattern.permute.xlu0 0
        %1247 = vperm.xlu0 %1246, %v1193
        %v1248 = vpop.permute.xlu0 %1247
        %1251 = vset.pattern.permute.xlu0 0
        %1252 = vperm.xlu0 %1251, %v1194
        %v1253 = vpop.permute.xlu0 %1252
        %1256 = vset.pattern.permute.xlu0 0
        %1257 = vperm.xlu0 %1256, %v1195
        %v1258 = vpop.permute.xlu0 %1257
        %1261 = vset.pattern.permute.xlu0 0
        %1262 = vperm.xlu0 %1261, %v1196
        %v1263 = vpop.permute.xlu0 %1262
        %1266 = vset.pattern.permute.xlu0 0
        %1267 = vperm.xlu0 %1266, %v1197
        %v1268 = vpop.permute.xlu0 %1267
        %1271 = vset.pattern.permute.xlu0 0
        %1272 = vperm.xlu0 %1271, %v1198
        %v1273 = vpop.permute.xlu0 %1272
        %1276 = vset.pattern.permute.xlu0 0
        %1277 = vperm.xlu0 %1276, %v1199
        %v1278 = vpop.permute.xlu0 %1277
        %v1280 = vmul.f32 %v1203, %v387
        %v1281 = vmul.f32 %v1208, %v388
        %v1282 = vmul.f32 %v1213, %v389
        %v1283 = vmul.f32 %v1218, %v390
        %v1284 = vmul.f32 %v1223, %v391
        %v1285 = vmul.f32 %v1228, %v392
        %v1286 = vmul.f32 %v1233, %v393
        %v1287 = vmul.f32 %v1238, %v394
        %v1288 = vmul.f32 %v1243, %v395
        %v1289 = vmul.f32 %v1248, %v396
        %v1290 = vmul.f32 %v1253, %v397
        %v1291 = vmul.f32 %v1258, %v398
        %v1292 = vmul.f32 %v1263, %v399
        %v1293 = vmul.f32 %v1268, %v400
        %v1294 = vmul.f32 %v1273, %v401
        %v1295 = vmul.f32 %v1278, %v402
        %vm1296 = vcmask 523264
        %v1297 = vsel %vm1296, %v1280, 0.0
        %v1298 = vsel %vm1296, %v1281, 0.0
        %v1299 = vadd.f32 %v1297, %v1298
        %v1300 = vrot.slane %v1299, 4
        %v1301 = vadd.f32 %v1299, %v1300
        %v1302 = vrot.slane %v1301, 2
        %v1303 = vadd.f32 %v1301, %v1302
        %v1304 = vrot.slane %v1303, 1
        %v1305 = vadd.f32 %v1303, %v1304
        %v1306 = vsel %vm1296, %v1282, 0.0
        %v1307 = vsel %vm1296, %v1283, 0.0
        %v1308 = vadd.f32 %v1306, %v1307
        %v1309 = vrot.slane %v1308, 4
        %v1310 = vadd.f32 %v1308, %v1309
        %v1311 = vrot.slane %v1310, 2
        %v1312 = vadd.f32 %v1310, %v1311
        %v1313 = vrot.slane %v1312, 1
        %v1314 = vadd.f32 %v1312, %v1313
        %v1315 = vsel %vm1296, %v1284, 0.0
        %v1316 = vsel %vm1296, %v1285, 0.0
        %v1317 = vadd.f32 %v1315, %v1316
        %v1318 = vrot.slane %v1317, 4
        %v1319 = vadd.f32 %v1317, %v1318
        %v1320 = vrot.slane %v1319, 2
        %v1321 = vadd.f32 %v1319, %v1320
        %v1322 = vrot.slane %v1321, 1
        %v1323 = vadd.f32 %v1321, %v1322
        %v1324 = vsel %vm1296, %v1286, 0.0
        %v1325 = vsel %vm1296, %v1287, 0.0
        %v1326 = vadd.f32 %v1324, %v1325
        %v1327 = vrot.slane %v1326, 4
        %v1328 = vadd.f32 %v1326, %v1327
        %v1329 = vrot.slane %v1328, 2
        %v1330 = vadd.f32 %v1328, %v1329
        %v1331 = vrot.slane %v1330, 1
        %v1332 = vadd.f32 %v1330, %v1331
        %v1333 = vsel %vm1296, %v1288, 0.0
        %v1334 = vsel %vm1296, %v1289, 0.0
        %v1335 = vadd.f32 %v1333, %v1334
        %v1336 = vrot.slane %v1335, 4
        %v1337 = vadd.f32 %v1335, %v1336
        %v1338 = vrot.slane %v1337, 2
        %v1339 = vadd.f32 %v1337, %v1338
        %v1340 = vrot.slane %v1339, 1
        %v1341 = vadd.f32 %v1339, %v1340
        %v1342 = vsel %vm1296, %v1290, 0.0
        %v1343 = vsel %vm1296, %v1291, 0.0
        %v1344 = vadd.f32 %v1342, %v1343
        %v1345 = vrot.slane %v1344, 4
        %v1346 = vadd.f32 %v1344, %v1345
        %v1347 = vrot.slane %v1346, 2
        %v1348 = vadd.f32 %v1346, %v1347
        %v1349 = vrot.slane %v1348, 1
        %v1350 = vadd.f32 %v1348, %v1349
        %v1351 = vsel %vm1296, %v1292, 0.0
        %v1352 = vsel %vm1296, %v1293, 0.0
        %v1353 = vadd.f32 %v1351, %v1352
        %v1354 = vrot.slane %v1353, 4
        %v1355 = vadd.f32 %v1353, %v1354
        %v1356 = vrot.slane %v1355, 2
        %v1357 = vadd.f32 %v1355, %v1356
        %v1358 = vrot.slane %v1357, 1
        %v1359 = vadd.f32 %v1357, %v1358
        %v1360 = vsel %vm1296, %v1294, 0.0
        %v1361 = vsel %vm1296, %v1295, 0.0
        %v1362 = vadd.f32 %v1360, %v1361
        %v1363 = vrot.slane %v1362, 4
        %v1364 = vadd.f32 %v1362, %v1363
        %v1365 = vrot.slane %v1364, 2
        %v1366 = vadd.f32 %v1364, %v1365
        %v1367 = vrot.slane %v1366, 1
        %v1368 = vadd.f32 %v1366, %v1367
        %v1377 = vsel %vm884, %v1314, %v1305
        %v1378 = vsel %vm886, %v1323, %v1377
        %v1379 = vsel %vm888, %v1332, %v1378
        %v1380 = vsel %vm890, %v1341, %v1379
        %v1381 = vsel %vm892, %v1350, %v1380
        %v1382 = vsel %vm894, %v1359, %v1381
        %v1383 = vsel %vm896, %v1368, %v1382
        %1386 = vrot.lane.b32.xlu0 %v527, 64
        %v1387 = vpop.permute.xlu0 %1386
        %1389 = vrot.lane.b32.xlu0 %v525, 80
        %v1390 = vpop.permute.xlu0 %1389
        %v1392 = vsel %vm1296, %v1383, %v1387
        %vm1393 = vcmask 654336
        %v1394 = vsel %vm1393, %v1392, %v1390
        %vm1395 = vcmask 916480
        %v1397 = vsel %vm1395, %v1394, 0
        %1399 = vmatprep.subr.mxu0 0.0
        %1400 = vmatpush1.msra.mxu0 %v484
        %1401 = vmatprep.subr.mxu0 0.0
        %1402 = vmatpush1.msra.mxu0 %v485
        %1403 = vmatprep.subr.mxu0 0.0
        %1404 = vmatpush1.msra.mxu0 %v486
        %1405 = vmatprep.subr.mxu0 0.0
        %1406 = vmatpush1.msra.mxu0 %v487
        %1407 = vmatprep.subr.mxu0 0.0
        %1408 = vmatpush1.msra.mxu0 %v488
        %1409 = vmatprep.subr.mxu0 0.0
        %1410 = vmatpush1.msra.mxu0 %v489
        %1411 = vmatprep.subr.mxu0 0.0
        %1412 = vmatpush1.msra.mxu0 %v490
        %1413 = vmatprep.subr.mxu0 0.0
        %1414 = vmatpush1.msra.mxu0 %v491
        %1415 = vmatprep.subr.mxu0 0.0
        %1416 = vmatpush1.msra.mxu0 %v492
        %1417 = vmatprep.subr.mxu0 0.0
        %1418 = vmatpush1.msra.mxu0 %v493
        %1419 = vmatprep.subr.mxu0 0.0
        %1420 = vmatpush1.msra.mxu0 %v494
        %1421 = vmatprep.subr.mxu0 0.0
        %1422 = vmatpush1.msra.mxu0 %v495
        %1423 = vmatprep.subr.mxu0 0.0
        %1424 = vmatpush1.msra.mxu0 %v496
        %1425 = vmatprep.subr.mxu0 0.0
        %1426 = vmatpush1.msra.mxu0 %v497
        %1427 = vmatprep.subr.mxu0 0.0
        %1428 = vmatpush1.msra.mxu0 0.0
        %1429 = vmatprep.subr.mxu0 0.0
        %1430 = vmatpush1.msra.mxu0 0.0
        %1431 = vmatprep.subr.mxu0 0.0
        %1432 = vmatpush1.msra.mxu0 0.0
        %1433 = vmatprep.subr.mxu0 0.0
        %1434 = vmatpush1.msra.mxu0 0.0
        %1435 = vmatprep.subr.mxu0 0.0
        %1436 = vmatpush1.msra.mxu0 0.0
        %1437 = vmatprep.subr.mxu0 0.0
        %1438 = vmatpush1.msra.mxu0 0.0
        %1439 = vmatprep.subr.mxu0 0.0
        %1440 = vmatpush1.msra.mxu0 0.0
        %1441 = vmatprep.subr.mxu0 0.0
        %1442 = vmatpush1.msra.mxu0 0.0
        %1443 = vmatprep.subr.mxu0 0.0
        %1444 = vmatpush1.msra.mxu0 0.0
        %1445 = vmatprep.subr.mxu0 0.0
        %1446 = vmatpush1.msra.mxu0 0.0
        %1447 = vmatprep.subr.mxu0 0.0
        %1448 = vmatpush1.msra.mxu0 0.0
        %1449 = vmatprep.subr.mxu0 0.0
        %1450 = vmatpush1.msra.mxu0 0.0
        %1451 = vmatprep.subr.mxu0 0.0
        %1452 = vmatpush1.msra.mxu0 0.0
        %1453 = vmatprep.subr.mxu0 0.0
        %1454 = vmatpush1.msra.mxu0 0.0
        %1455 = vmatprep.subr.mxu0 0.0
        %1456 = vmatpush1.msra.mxu0 0.0
        %1457 = vmatprep.subr.mxu0 0.0
        %1458 = vmatpush1.msra.mxu0 0.0
        %1459 = vmatprep.subr.mxu0 0.0
        %1460 = vmatpush1.msra.mxu0 0.0
        %1461 = vmatprep.subr.mxu0 0.0
        %1462 = vmatpush1.msra.mxu0 0.0
        %1463 = vmatprep.mubr.f32.mxu0 0.0
        %1464 = vmatmul.mubr.f32.gmra.mrb[0].mxu0 %v1397
        %v1465 = vpop.f32.mrb[0].mxu0
        %v1466 = vadd.f32 0.0, %v1465
        %v1467 = vpop.f32.mrb[0].mxu0
        %1468 = vdwg.mxu0
        %v1469 = vadd.f32 %v419, %v1466
        %v1470 = vxor.u32 %v1469, 2147483648
        %v1471 = vmul.f32 %v1470, 1.442695
        %v1472 = vpow.pop %v1471
        %v1473 = vadd.f32 %v1472, 1.0
        %v1474 = vrcp.pop %v1473
        %v1475 = vmul.f32 1.0, %v1474
        %v1476 = vtanh.pop %v1469
        %1478 = vrot.lane.b32.xlu0 %v526, 32
        %v1479 = vpop.permute.xlu0 %1478
        %v1481 = vmul.f32 %v1475, %v1479
        %1483 = vrot.lane.b32.xlu0 %v1476, 64
        %v1484 = vpop.permute.xlu0 %1483
        %v1486 = vmul.f32 %v1475, %v1484
        %1488 = vrot.lane.b32.xlu0 %v1486, 32
        %v1489 = vpop.permute.xlu0 %1488
        %v1491 = vadd.f32 %v1481, %v1489
        %v1492 = vtanh.pop %v1491
        %1494 = vrot.lane.b32.xlu0 %v1492, 64
        %v1495 = vpop.permute.xlu0 %1494
        %v1497 = vmul.f32 %v1475, %v1495
        %v1499 = vlaneseq
        %v1500 = vshrl.u32 %v1499, 7
        %v1501 = vsub.s32 0, %v1500
        %v1502 = vrot.slane %v519, %v1501
        %v1503 = vlaneseq
        %v1504 = vshrl.u32 %v1503, 7
        %v1505 = vsub.s32 1, %v1504
        %v1506 = vrot.slane %v519, %v1505
        %v1507 = vlaneseq
        %v1508 = vshrl.u32 %v1507, 7
        %v1509 = vsub.s32 2, %v1508
        %v1510 = vrot.slane %v519, %v1509
        %v1511 = vlaneseq
        %v1512 = vshrl.u32 %v1511, 7
        %v1513 = vsub.s32 3, %v1512
        %v1514 = vrot.slane %v519, %v1513
        %1520 = vrot.lane.b32.xlu0 %v1497, 32
        %v1521 = vpop.permute.xlu0 %1520
        %v1522 = vsel %vm528, %v1521, 0
        %1524 = vmatprep.subr.mxu0 %v504
        %1525 = vmatpush1.msra.mxu0 %v503
        %1526 = vmatprep.subr.mxu0 %v508
        %1527 = vmatpush1.msra.mxu0 %v507
        %1528 = vmatprep.subr.mxu0 %v512
        %1529 = vmatpush1.msra.mxu0 %v511
        %1530 = vmatprep.subr.mxu0 %v516
        %1531 = vmatpush1.msra.mxu0 %v515
        %1532 = vmatprep.subr.mxu0 0.0
        %1533 = vmatpush1.msra.mxu0 0.0
        %1534 = vmatprep.subr.mxu0 0.0
        %1535 = vmatpush1.msra.mxu0 0.0
        %1536 = vmatprep.subr.mxu0 0.0
        %1537 = vmatpush1.msra.mxu0 0.0
        %1538 = vmatprep.subr.mxu0 0.0
        %1539 = vmatpush1.msra.mxu0 0.0
        %1540 = vmatprep.subr.mxu0 0.0
        %1541 = vmatpush1.msra.mxu0 0.0
        %1542 = vmatprep.subr.mxu0 0.0
        %1543 = vmatpush1.msra.mxu0 0.0
        %1544 = vmatprep.subr.mxu0 0.0
        %1545 = vmatpush1.msra.mxu0 0.0
        %1546 = vmatprep.subr.mxu0 0.0
        %1547 = vmatpush1.msra.mxu0 0.0
        %1548 = vmatprep.subr.mxu0 0.0
        %1549 = vmatpush1.msra.mxu0 0.0
        %1550 = vmatprep.subr.mxu0 0.0
        %1551 = vmatpush1.msra.mxu0 0.0
        %1552 = vmatprep.subr.mxu0 0.0
        %1553 = vmatpush1.msra.mxu0 0.0
        %1554 = vmatprep.subr.mxu0 0.0
        %1555 = vmatpush1.msra.mxu0 0.0
        %1556 = vmatprep.subr.mxu0 0.0
        %1557 = vmatpush1.msra.mxu0 0.0
        %1558 = vmatprep.subr.mxu0 0.0
        %1559 = vmatpush1.msra.mxu0 0.0
        %1560 = vmatprep.subr.mxu0 0.0
        %1561 = vmatpush1.msra.mxu0 0.0
        %1562 = vmatprep.subr.mxu0 0.0
        %1563 = vmatpush1.msra.mxu0 0.0
        %1564 = vmatprep.subr.mxu0 0.0
        %1565 = vmatpush1.msra.mxu0 0.0
        %1566 = vmatprep.subr.mxu0 0.0
        %1567 = vmatpush1.msra.mxu0 0.0
        %1568 = vmatprep.subr.mxu0 0.0
        %1569 = vmatpush1.msra.mxu0 0.0
        %1570 = vmatprep.subr.mxu0 0.0
        %1571 = vmatpush1.msra.mxu0 0.0
        %1572 = vmatprep.subr.mxu0 0.0
        %1573 = vmatpush1.msra.mxu0 0.0
        %1574 = vmatprep.subr.mxu0 0.0
        %1575 = vmatpush1.msra.mxu0 0.0
        %1576 = vmatprep.subr.mxu0 0.0
        %1577 = vmatpush1.msra.mxu0 0.0
        %1578 = vmatprep.subr.mxu0 0.0
        %1579 = vmatpush1.msra.mxu0 0.0
        %1580 = vmatprep.subr.mxu0 0.0
        %1581 = vmatpush1.msra.mxu0 0.0
        %1582 = vmatprep.subr.mxu0 0.0
        %1583 = vmatpush1.msra.mxu0 0.0
        %1584 = vmatprep.subr.mxu0 0.0
        %1585 = vmatpush1.msra.mxu0 0.0
        %1586 = vmatprep.subr.mxu0 0.0
        %1587 = vmatpush1.msra.mxu0 0.0
        %1588 = vmatprep.mubr.f32.mxu0 0.0
        %1589 = vmatmul.mubr.f32.gmra.mrb[0].mxu0 %v1522
        %v1590 = vpop.f32.mrb[0].mxu0
        %v1591 = vadd.f32 %v1502, %v1590
        %v1592 = vpop.f32.mrb[0].mxu0
        %v1593 = vadd.f32 %v1506, %v1592
        %1594 = vdwg.mxu0
        %1595 = vmatprep.subr.mxu0 %v506
        %1596 = vmatpush1.msra.mxu0 %v505
        %1597 = vmatprep.subr.mxu0 %v510
        %1598 = vmatpush1.msra.mxu0 %v509
        %1599 = vmatprep.subr.mxu0 %v514
        %1600 = vmatpush1.msra.mxu0 %v513
        %1601 = vmatprep.subr.mxu0 %v518
        %1602 = vmatpush1.msra.mxu0 %v517
        %1603 = vmatprep.subr.mxu0 0.0
        %1604 = vmatpush1.msra.mxu0 0.0
        %1605 = vmatprep.subr.mxu0 0.0
        %1606 = vmatpush1.msra.mxu0 0.0
        %1607 = vmatprep.subr.mxu0 0.0
        %1608 = vmatpush1.msra.mxu0 0.0
        %1609 = vmatprep.subr.mxu0 0.0
        %1610 = vmatpush1.msra.mxu0 0.0
        %1611 = vmatprep.subr.mxu0 0.0
        %1612 = vmatpush1.msra.mxu0 0.0
        %1613 = vmatprep.subr.mxu0 0.0
        %1614 = vmatpush1.msra.mxu0 0.0
        %1615 = vmatprep.subr.mxu0 0.0
        %1616 = vmatpush1.msra.mxu0 0.0
        %1617 = vmatprep.subr.mxu0 0.0
        %1618 = vmatpush1.msra.mxu0 0.0
        %1619 = vmatprep.subr.mxu0 0.0
        %1620 = vmatpush1.msra.mxu0 0.0
        %1621 = vmatprep.subr.mxu0 0.0
        %1622 = vmatpush1.msra.mxu0 0.0
        %1623 = vmatprep.subr.mxu0 0.0
        %1624 = vmatpush1.msra.mxu0 0.0
        %1625 = vmatprep.subr.mxu0 0.0
        %1626 = vmatpush1.msra.mxu0 0.0
        %1627 = vmatprep.subr.mxu0 0.0
        %1628 = vmatpush1.msra.mxu0 0.0
        %1629 = vmatprep.subr.mxu0 0.0
        %1630 = vmatpush1.msra.mxu0 0.0
        %1631 = vmatprep.subr.mxu0 0.0
        %1632 = vmatpush1.msra.mxu0 0.0
        %1633 = vmatprep.subr.mxu0 0.0
        %1634 = vmatpush1.msra.mxu0 0.0
        %1635 = vmatprep.subr.mxu0 0.0
        %1636 = vmatpush1.msra.mxu0 0.0
        %1637 = vmatprep.subr.mxu0 0.0
        %1638 = vmatpush1.msra.mxu0 0.0
        %1639 = vmatprep.subr.mxu0 0.0
        %1640 = vmatpush1.msra.mxu0 0.0
        %1641 = vmatprep.subr.mxu0 0.0
        %1642 = vmatpush1.msra.mxu0 0.0
        %1643 = vmatprep.subr.mxu0 0.0
        %1644 = vmatpush1.msra.mxu0 0.0
        %1645 = vmatprep.subr.mxu0 0.0
        %1646 = vmatpush1.msra.mxu0 0.0
        %1647 = vmatprep.subr.mxu0 0.0
        %1648 = vmatpush1.msra.mxu0 0.0
        %1649 = vmatprep.subr.mxu0 0.0
        %1650 = vmatpush1.msra.mxu0 0.0
        %1651 = vmatprep.subr.mxu0 0.0
        %1652 = vmatpush1.msra.mxu0 0.0
        %1653 = vmatprep.subr.mxu0 0.0
        %1654 = vmatpush1.msra.mxu0 0.0
        %1655 = vmatprep.subr.mxu0 0.0
        %1656 = vmatpush1.msra.mxu0 0.0
        %1657 = vmatprep.subr.mxu0 0.0
        %1658 = vmatpush1.msra.mxu0 0.0
        %1659 = vmatprep.mubr.f32.mxu0 0.0
        %1660 = vmatmul.mubr.f32.gmra.mrb[0].mxu0 %v1522
        %v1661 = vpop.f32.mrb[0].mxu0
        %v1662 = vadd.f32 %v1510, %v1661
        %v1663 = vpop.f32.mrb[0].mxu0
        %v1664 = vadd.f32 %v1514, %v1663
        %1665 = vdwg.mxu0
        %1666 = vst [vmem:[%s365] sm:$0xff] %v1591
        %1667 = vst [vmem:[%s365 + $0x8] sm:$0xff] %v1593
        %1668 = vst [vmem:[%s365 + $0x10] sm:$0xff] %v1662
        %1669 = vst [vmem:[%s365 + $0x18] sm:$0xff] %v1664
        %v1670 = vmax.f32 %v1591, %v1593
        %v1671 = vmax.f32 %v1662, %v1664
        %v1672 = vmax.f32 %v1670, %v1671
        %1673 = vmax.xlane.f32.xlu0 %v1672
        %v1674 = vpop.xlane.xlu0 %1673
        %vm1675 = vcmp.eq.f32.partialorder %v1591, %v1674
        %vm1676 = vcmp.eq.f32.partialorder %v1593, %v1674
        %vm1677 = vcmp.eq.f32.partialorder %v1662, %v1674
        %vm1678 = vcmp.eq.f32.partialorder %v1664, %v1674
        %v1679 = vsel %vm1675, %v521, 512
        %v1680 = vsel %vm1676, %v522, 512
        %v1681 = vsel %vm1677, %v523, 512
        %v1682 = vsel %vm1678, %v524, 512
        %vm1683 = vcmp.lt.s32.totalorder %v1679, %v1680
        %v1684 = vsel %vm1683, %v1679, %v1680
        %vm1685 = vcmp.lt.s32.totalorder %v1681, %v1682
        %v1686 = vsel %vm1685, %v1681, %v1682
        %vm1687 = vcmp.lt.s32.totalorder %v1684, %v1686
        %v1688 = vsel %vm1687, %v1684, %v1686
        %v1689 = vand.u32 %v1688, 65535
        %v1690 = vshra.s32 %v1688, 16
        %v1691 = vcvt.s32.f32 %v1689
        %v1692 = vcvt.s32.f32 %v1690
        %1693 = vmin.xlane.f32.xlu0 %v1692
        %v1694 = vpop.xlane.xlu0 %1693
        %vm1695 = vcmp.eq.f32.partialorder %v1692, %v1694
        %v1696 = vsel %vm1695, %v1691, inf
        %1697 = vmin.xlane.f32.xlu0 %v1696
        %v1698 = vpop.xlane.xlu0 %1697
        %v1699 = vcvt.f32.s32 %v1698
        %v1700 = vcvt.f32.s32 %v1694
        %v1701 = vshll.u32 %v1700, 16
        %v1702 = vadd.s32 %v1701, %v1699
        %vm1703 = vcmp.eq.s32.totalorder %v521, 0
        %v1704 = vsel %vm1703, %v1702, 0
        %vm1705 = vcmp.eq.s32.totalorder %v521, %v1702
        %vm1706 = vcmp.eq.s32.totalorder %v522, %v1702
        %vm1707 = vcmp.eq.s32.totalorder %v523, %v1702
        %vm1708 = vcmp.eq.s32.totalorder %v524, %v1702
        %v1709 = vsel %vm1705, 1, 0
        %v1710 = vsel %vm1706, 1, 0
        %v1711 = vsel %vm1707, 1, 0
        %v1712 = vsel %vm1708, 1, 0
        %v1713 = vcvt.s32.f32 %v1709
        %v1714 = vcvt.s32.f32 %v1710
        %v1715 = vcvt.s32.f32 %v1711
        %v1716 = vcvt.s32.f32 %v1712
        %1717 = vmatprep.subr.mxu0 0.0
        %1718 = vmatpush1.msra.mxu0 %v420
        %1719 = vmatprep.subr.mxu0 0.0
        %1720 = vmatpush1.msra.mxu0 %v421
        %1721 = vmatprep.subr.mxu0 0.0
        %1722 = vmatpush1.msra.mxu0 %v422
        %1723 = vmatprep.subr.mxu0 0.0
        %1724 = vmatpush1.msra.mxu0 %v423
        %1725 = vmatprep.subr.mxu0 0.0
        %1726 = vmatpush1.msra.mxu0 %v424
        %1727 = vmatprep.subr.mxu0 0.0
        %1728 = vmatpush1.msra.mxu0 %v425
        %1729 = vmatprep.subr.mxu0 0.0
        %1730 = vmatpush1.msra.mxu0 %v426
        %1731 = vmatprep.subr.mxu0 0.0
        %1732 = vmatpush1.msra.mxu0 %v427
        %1733 = vmatprep.subr.mxu0 0.0
        %1734 = vmatpush1.msra.mxu0 %v428
        %1735 = vmatprep.subr.mxu0 0.0
        %1736 = vmatpush1.msra.mxu0 %v429
        %1737 = vmatprep.subr.mxu0 0.0
        %1738 = vmatpush1.msra.mxu0 %v430
        %1739 = vmatprep.subr.mxu0 0.0
        %1740 = vmatpush1.msra.mxu0 %v431
        %1741 = vmatprep.subr.mxu0 0.0
        %1742 = vmatpush1.msra.mxu0 %v432
        %1743 = vmatprep.subr.mxu0 0.0
        %1744 = vmatpush1.msra.mxu0 %v433
        %1745 = vmatprep.subr.mxu0 0.0
        %1746 = vmatpush1.msra.mxu0 %v434
        %1747 = vmatprep.subr.mxu0 0.0
        %1748 = vmatpush1.msra.mxu0 %v435
        %1749 = vmatprep.subr.mxu0 0.0
        %1750 = vmatpush1.msra.mxu0 %v436
        %1751 = vmatprep.subr.mxu0 0.0
        %1752 = vmatpush1.msra.mxu0 %v437
        %1753 = vmatprep.subr.mxu0 0.0
        %1754 = vmatpush1.msra.mxu0 %v438
        %1755 = vmatprep.subr.mxu0 0.0
        %1756 = vmatpush1.msra.mxu0 %v439
        %1757 = vmatprep.subr.mxu0 0.0
        %1758 = vmatpush1.msra.mxu0 %v440
        %1759 = vmatprep.subr.mxu0 0.0
        %1760 = vmatpush1.msra.mxu0 %v441
        %1761 = vmatprep.subr.mxu0 0.0
        %1762 = vmatpush1.msra.mxu0 %v442
        %1763 = vmatprep.subr.mxu0 0.0
        %1764 = vmatpush1.msra.mxu0 %v443
        %1765 = vmatprep.subr.mxu0 0.0
        %1766 = vmatpush1.msra.mxu0 %v444
        %1767 = vmatprep.subr.mxu0 0.0
        %1768 = vmatpush1.msra.mxu0 %v445
        %1769 = vmatprep.subr.mxu0 0.0
        %1770 = vmatpush1.msra.mxu0 %v446
        %1771 = vmatprep.subr.mxu0 0.0
        %1772 = vmatpush1.msra.mxu0 %v447
        %1773 = vmatprep.subr.mxu0 0.0
        %1774 = vmatpush1.msra.mxu0 %v448
        %1775 = vmatprep.subr.mxu0 0.0
        %1776 = vmatpush1.msra.mxu0 %v449
        %1777 = vmatprep.subr.mxu0 0.0
        %1778 = vmatpush1.msra.mxu0 %v450
        %1779 = vmatprep.subr.mxu0 0.0
        %1780 = vmatpush1.msra.mxu0 %v451
        %1781 = vmatprep.mubr.f32.mxu0 %v1714
        %1782 = vmatmul.mubr.f32.gmra.mrb[0].mxu0 %v1713
        %v1783 = vpop.f32.mrb[0].mxu0
        %v1784 = vadd.f32 0.0, %v1783
        %v1785 = vpop.f32.mrb[0].mxu0
        %1786 = vdwg.mxu0
        %1787 = vmatprep.subr.mxu0 0.0
        %1788 = vmatpush1.msra.mxu0 %v452
        %1789 = vmatprep.subr.mxu0 0.0
        %1790 = vmatpush1.msra.mxu0 %v453
        %1791 = vmatprep.subr.mxu0 0.0
        %1792 = vmatpush1.msra.mxu0 %v454
        %1793 = vmatprep.subr.mxu0 0.0
        %1794 = vmatpush1.msra.mxu0 %v455
        %1795 = vmatprep.subr.mxu0 0.0
        %1796 = vmatpush1.msra.mxu0 %v456
        %1797 = vmatprep.subr.mxu0 0.0
        %1798 = vmatpush1.msra.mxu0 %v457
        %1799 = vmatprep.subr.mxu0 0.0
        %1800 = vmatpush1.msra.mxu0 %v458
        %1801 = vmatprep.subr.mxu0 0.0
        %1802 = vmatpush1.msra.mxu0 %v459
        %1803 = vmatprep.subr.mxu0 0.0
        %1804 = vmatpush1.msra.mxu0 %v460
        %1805 = vmatprep.subr.mxu0 0.0
        %1806 = vmatpush1.msra.mxu0 %v461
        %1807 = vmatprep.subr.mxu0 0.0
        %1808 = vmatpush1.msra.mxu0 %v462
        %1809 = vmatprep.subr.mxu0 0.0
        %1810 = vmatpush1.msra.mxu0 %v463
        %1811 = vmatprep.subr.mxu0 0.0
        %1812 = vmatpush1.msra.mxu0 %v464
        %1813 = vmatprep.subr.mxu0 0.0
        %1814 = vmatpush1.msra.mxu0 %v465
        %1815 = vmatprep.subr.mxu0 0.0
        %1816 = vmatpush1.msra.mxu0 %v466
        %1817 = vmatprep.subr.mxu0 0.0
        %1818 = vmatpush1.msra.mxu0 %v467
        %1819 = vmatprep.subr.mxu0 0.0
        %1820 = vmatpush1.msra.mxu0 %v468
        %1821 = vmatprep.subr.mxu0 0.0
        %1822 = vmatpush1.msra.mxu0 %v469
        %1823 = vmatprep.subr.mxu0 0.0
        %1824 = vmatpush1.msra.mxu0 %v470
        %1825 = vmatprep.subr.mxu0 0.0
        %1826 = vmatpush1.msra.mxu0 %v471
        %1827 = vmatprep.subr.mxu0 0.0
        %1828 = vmatpush1.msra.mxu0 %v472
        %1829 = vmatprep.subr.mxu0 0.0
        %1830 = vmatpush1.msra.mxu0 %v473
        %1831 = vmatprep.subr.mxu0 0.0
        %1832 = vmatpush1.msra.mxu0 %v474
        %1833 = vmatprep.subr.mxu0 0.0
        %1834 = vmatpush1.msra.mxu0 %v475
        %1835 = vmatprep.subr.mxu0 0.0
        %1836 = vmatpush1.msra.mxu0 %v476
        %1837 = vmatprep.subr.mxu0 0.0
        %1838 = vmatpush1.msra.mxu0 %v477
        %1839 = vmatprep.subr.mxu0 0.0
        %1840 = vmatpush1.msra.mxu0 %v478
        %1841 = vmatprep.subr.mxu0 0.0
        %1842 = vmatpush1.msra.mxu0 %v479
        %1843 = vmatprep.subr.mxu0 0.0
        %1844 = vmatpush1.msra.mxu0 %v480
        %1845 = vmatprep.subr.mxu0 0.0
        %1846 = vmatpush1.msra.mxu0 %v481
        %1847 = vmatprep.subr.mxu0 0.0
        %1848 = vmatpush1.msra.mxu0 %v482
        %1849 = vmatprep.subr.mxu0 0.0
        %1850 = vmatpush1.msra.mxu0 %v483
        %1851 = vmatprep.mubr.f32.mxu0 %v1716
        %1852 = vmatmul.mubr.f32.gmra.mrb[0].mxu0 %v1715
        %v1853 = vpop.f32.mrb[0].mxu0
        %v1854 = vadd.f32 %v1784, %v1853
        %v1855 = vpop.f32.mrb[0].mxu0
        %1856 = vdwg.mxu0
        %1857 = vmatprep.subr.mxu0 0.0
        %1858 = vmatpush1.msra.mxu0 %v498
        %1859 = vmatprep.subr.mxu0 0.0
        %1860 = vmatpush1.msra.mxu0 %v499
        %1861 = vmatprep.subr.mxu0 0.0
        %1862 = vmatpush1.msra.mxu0 %v500
        %1863 = vmatprep.subr.mxu0 0.0
        %1864 = vmatpush1.msra.mxu0 %v501
        %1865 = vmatprep.subr.mxu0 0.0
        %1866 = vmatpush1.msra.mxu0 0.0
        %1867 = vmatprep.subr.mxu0 0.0
        %1868 = vmatpush1.msra.mxu0 0.0
        %1869 = vmatprep.subr.mxu0 0.0
        %1870 = vmatpush1.msra.mxu0 0.0
        %1871 = vmatprep.subr.mxu0 0.0
        %1872 = vmatpush1.msra.mxu0 0.0
        %1873 = vmatprep.subr.mxu0 0.0
        %1874 = vmatpush1.msra.mxu0 0.0
        %1875 = vmatprep.subr.mxu0 0.0
        %1876 = vmatpush1.msra.mxu0 0.0
        %1877 = vmatprep.subr.mxu0 0.0
        %1878 = vmatpush1.msra.mxu0 0.0
        %1879 = vmatprep.subr.mxu0 0.0
        %1880 = vmatpush1.msra.mxu0 0.0
        %1881 = vmatprep.subr.mxu0 0.0
        %1882 = vmatpush1.msra.mxu0 0.0
        %1883 = vmatprep.subr.mxu0 0.0
        %1884 = vmatpush1.msra.mxu0 0.0
        %1885 = vmatprep.subr.mxu0 0.0
        %1886 = vmatpush1.msra.mxu0 0.0
        %1887 = vmatprep.subr.mxu0 0.0
        %1888 = vmatpush1.msra.mxu0 0.0
        %1889 = vmatprep.subr.mxu0 0.0
        %1890 = vmatpush1.msra.mxu0 0.0
        %1891 = vmatprep.subr.mxu0 0.0
        %1892 = vmatpush1.msra.mxu0 0.0
        %1893 = vmatprep.subr.mxu0 0.0
        %1894 = vmatpush1.msra.mxu0 0.0
        %1895 = vmatprep.subr.mxu0 0.0
        %1896 = vmatpush1.msra.mxu0 0.0
        %1897 = vmatprep.subr.mxu0 0.0
        %1898 = vmatpush1.msra.mxu0 0.0
        %1899 = vmatprep.subr.mxu0 0.0
        %1900 = vmatpush1.msra.mxu0 0.0
        %1901 = vmatprep.subr.mxu0 0.0
        %1902 = vmatpush1.msra.mxu0 0.0
        %1903 = vmatprep.subr.mxu0 0.0
        %1904 = vmatpush1.msra.mxu0 0.0
        %1905 = vmatprep.subr.mxu0 0.0
        %1906 = vmatpush1.msra.mxu0 0.0
        %1907 = vmatprep.subr.mxu0 0.0
        %1908 = vmatpush1.msra.mxu0 0.0
        %1909 = vmatprep.subr.mxu0 0.0
        %1910 = vmatpush1.msra.mxu0 0.0
        %1911 = vmatprep.subr.mxu0 0.0
        %1912 = vmatpush1.msra.mxu0 0.0
        %1913 = vmatprep.subr.mxu0 0.0
        %1914 = vmatpush1.msra.mxu0 0.0
        %1915 = vmatprep.subr.mxu0 0.0
        %1916 = vmatpush1.msra.mxu0 0.0
        %1917 = vmatprep.subr.mxu0 0.0
        %1918 = vmatpush1.msra.mxu0 0.0
        %1919 = vmatprep.subr.mxu0 0.0
        %1920 = vmatpush1.msra.mxu0 0.0
        %1921 = vmatprep.mubr.f32.mxu0 0.0
        %1922 = vmatmul.mubr.f32.gmra.mrb[0].mxu0 %v1522
        %v1923 = vpop.f32.mrb[0].mxu0
        %v1924 = vadd.f32 0.0, %v1923
        %v1925 = vpop.f32.mrb[0].mxu0
        %1926 = vdwg.mxu0
        %v1928 = vcombine.high %v1924, %v1924
        %v1930 = vunpack.c.l.s4 1966171168
        %v1931 = vunpack.c.0.s8 %v1930
        %v1932 = vlaneseq
        %v1933 = vshrl.u32 %v1932, 7
        %v1934 = vsub.s32 %v1931, %v1933
        %v1935 = vrot.slane %v1924, %v1934
        %v1937 = vunpack.c.l.s4 1966171168
        %v1938 = vunpack.c.0.s8 %v1937
        %v1939 = vlaneseq
        %v1940 = vshrl.u32 %v1939, 7
        %v1941 = vsub.s32 %v1938, %v1940
        %v1942 = vrot.slane %v1928, %v1941
        %v1943 = vcombine.high %v1935, %v1935
        %v1944 = vcombine.high %v1942, %v1942
        %v1946 = vunpack.c.l.s4 1966171168
        %v1947 = vunpack.c.0.s8 %v1946
        %v1948 = vlaneseq
        %v1949 = vshrl.u32 %v1948, 7
        %v1950 = vsub.s32 %v1947, %v1949
        %v1951 = vrot.slane %v1935, %v1950
        %v1953 = vunpack.c.l.s4 1966171168
        %v1954 = vunpack.c.0.s8 %v1953
        %v1955 = vlaneseq
        %v1956 = vshrl.u32 %v1955, 7
        %v1957 = vsub.s32 %v1954, %v1956
        %v1958 = vrot.slane %v1942, %v1957
        %v1960 = vunpack.c.l.s4 1966171168
        %v1961 = vunpack.c.0.s8 %v1960
        %v1962 = vlaneseq
        %v1963 = vshrl.u32 %v1962, 7
        %v1964 = vsub.s32 %v1961, %v1963
        %v1965 = vrot.slane %v1943, %v1964
        %v1967 = vunpack.c.l.s4 1966171168
        %v1968 = vunpack.c.0.s8 %v1967
        %v1969 = vlaneseq
        %v1970 = vshrl.u32 %v1969, 7
        %v1971 = vsub.s32 %v1968, %v1970
        %v1972 = vrot.slane %v1944, %v1971
        %v1973 = vcombine.high %v1951, %v1951
        %v1974 = vcombine.high %v1958, %v1958
        %v1975 = vcombine.high %v1965, %v1965
        %v1976 = vcombine.high %v1972, %v1972
        %v1977 = vlaneseq
        %v1978 = vshrl.u32 %v1977, 7
        %v1979 = vsub.s32 0, %v1978
        %v1980 = vrot.slane %v1951, %v1979
        %v1981 = vlaneseq
        %v1982 = vshrl.u32 %v1981, 7
        %v1983 = vsub.s32 0, %v1982
        %v1984 = vrot.slane %v1965, %v1983
        %v1985 = vlaneseq
        %v1986 = vshrl.u32 %v1985, 7
        %v1987 = vsub.s32 0, %v1986
        %v1988 = vrot.slane %v1973, %v1987
        %v1989 = vlaneseq
        %v1990 = vshrl.u32 %v1989, 7
        %v1991 = vsub.s32 0, %v1990
        %v1992 = vrot.slane %v1975, %v1991
        %v1993 = vlaneseq
        %v1994 = vshrl.u32 %v1993, 7
        %v1995 = vsub.s32 0, %v1994
        %v1996 = vrot.slane %v1958, %v1995
        %v1997 = vlaneseq
        %v1998 = vshrl.u32 %v1997, 7
        %v1999 = vsub.s32 0, %v1998
        %v2000 = vrot.slane %v1972, %v1999
        %v2001 = vlaneseq
        %v2002 = vshrl.u32 %v2001, 7
        %v2003 = vsub.s32 0, %v2002
        %v2004 = vrot.slane %v1974, %v2003
        %v2005 = vlaneseq
        %v2006 = vshrl.u32 %v2005, 7
        %v2007 = vsub.s32 0, %v2006
        %v2008 = vrot.slane %v1976, %v2007
        %v2017 = vadd.f32 %v403, %v1980
        %v2018 = vadd.f32 %v404, %v1980
        %v2019 = vadd.f32 %v405, %v1984
        %v2020 = vadd.f32 %v406, %v1984
        %v2021 = vadd.f32 %v407, %v1988
        %v2022 = vadd.f32 %v408, %v1988
        %v2023 = vadd.f32 %v409, %v1992
        %v2024 = vadd.f32 %v410, %v1992
        %v2025 = vadd.f32 %v411, %v1996
        %v2026 = vadd.f32 %v412, %v1996
        %v2027 = vadd.f32 %v413, %v2000
        %v2028 = vadd.f32 %v414, %v2000
        %v2029 = vadd.f32 %v415, %v2004
        %v2030 = vadd.f32 %v416, %v2004
        %v2031 = vadd.f32 %v417, %v2008
        %v2032 = vadd.f32 %v418, %v2008
        %v2033 = vtanh.pop %v2017
        %v2034 = vtanh.pop %v2018
        %v2035 = vtanh.pop %v2019
        %v2036 = vtanh.pop %v2020
        %v2037 = vtanh.pop %v2021
        %v2038 = vtanh.pop %v2022
        %v2039 = vtanh.pop %v2023
        %v2040 = vtanh.pop %v2024
        %v2041 = vtanh.pop %v2025
        %v2042 = vtanh.pop %v2026
        %v2043 = vtanh.pop %v2027
        %v2044 = vtanh.pop %v2028
        %v2045 = vtanh.pop %v2029
        %v2046 = vtanh.pop %v2030
        %v2047 = vtanh.pop %v2031
        %v2048 = vtanh.pop %v2032
        %v2049 = vmul.f32 %v2033, %v728
        %v2050 = vmul.f32 %v2034, %v728
        %v2051 = vmul.f32 %v2035, %v728
        %v2052 = vmul.f32 %v2036, %v728
        %v2053 = vmul.f32 %v2037, %v728
        %v2054 = vmul.f32 %v2038, %v728
        %v2055 = vmul.f32 %v2039, %v728
        %v2056 = vmul.f32 %v2040, %v728
        %v2057 = vmul.f32 %v2041, %v728
        %v2058 = vmul.f32 %v2042, %v728
        %v2059 = vmul.f32 %v2043, %v728
        %v2060 = vmul.f32 %v2044, %v728
        %v2061 = vmul.f32 %v2045, %v728
        %v2062 = vmul.f32 %v2046, %v728
        %v2063 = vmul.f32 %v2047, %v728
        %v2064 = vmul.f32 %v2048, %v728
        %v2065 = vsel %vm528, %v2049, 0.0
        %2066 = vadd.xlane.f32.xlu0 %v2065
        %v2067 = vpop.xlane.xlu0 %2066
        %v2068 = vsel %vm528, %v2050, 0.0
        %2069 = vadd.xlane.f32.xlu0 %v2068
        %v2070 = vpop.xlane.xlu0 %2069
        %v2071 = vsel %vm528, %v2051, 0.0
        %2072 = vadd.xlane.f32.xlu0 %v2071
        %v2073 = vpop.xlane.xlu0 %2072
        %v2074 = vsel %vm528, %v2052, 0.0
        %2075 = vadd.xlane.f32.xlu0 %v2074
        %v2076 = vpop.xlane.xlu0 %2075
        %v2077 = vsel %vm528, %v2053, 0.0
        %2078 = vadd.xlane.f32.xlu0 %v2077
        %v2079 = vpop.xlane.xlu0 %2078
        %v2080 = vsel %vm528, %v2054, 0.0
        %2081 = vadd.xlane.f32.xlu0 %v2080
        %v2082 = vpop.xlane.xlu0 %2081
        %v2083 = vsel %vm528, %v2055, 0.0
        %2084 = vadd.xlane.f32.xlu0 %v2083
        %v2085 = vpop.xlane.xlu0 %2084
        %v2086 = vsel %vm528, %v2056, 0.0
        %2087 = vadd.xlane.f32.xlu0 %v2086
        %v2088 = vpop.xlane.xlu0 %2087
        %v2089 = vsel %vm528, %v2057, 0.0
        %2090 = vadd.xlane.f32.xlu0 %v2089
        %v2091 = vpop.xlane.xlu0 %2090
        %v2092 = vsel %vm528, %v2058, 0.0
        %2093 = vadd.xlane.f32.xlu0 %v2092
        %v2094 = vpop.xlane.xlu0 %2093
        %v2095 = vsel %vm528, %v2059, 0.0
        %2096 = vadd.xlane.f32.xlu0 %v2095
        %v2097 = vpop.xlane.xlu0 %2096
        %v2098 = vsel %vm528, %v2060, 0.0
        %2099 = vadd.xlane.f32.xlu0 %v2098
        %v2100 = vpop.xlane.xlu0 %2099
        %v2101 = vsel %vm528, %v2061, 0.0
        %2102 = vadd.xlane.f32.xlu0 %v2101
        %v2103 = vpop.xlane.xlu0 %2102
        %v2104 = vsel %vm528, %v2062, 0.0
        %2105 = vadd.xlane.f32.xlu0 %v2104
        %v2106 = vpop.xlane.xlu0 %2105
        %v2107 = vsel %vm528, %v2063, 0.0
        %2108 = vadd.xlane.f32.xlu0 %v2107
        %v2109 = vpop.xlane.xlu0 %2108
        %v2110 = vsel %vm528, %v2064, 0.0
        %2111 = vadd.xlane.f32.xlu0 %v2110
        %v2112 = vpop.xlane.xlu0 %2111
        %v2129 = vlaneseq
        %v2130 = vshrl.u32 %v2129, 7
        %v2131 = vsub.s32 %v521, %v2130
        %v2132 = vrot.slane %v2067, %v2131
        %v2133 = vlaneseq
        %v2134 = vshrl.u32 %v2133, 7
        %v2135 = vsub.s32 %v814, %v2134
        %v2136 = vrot.slane %v2070, %v2135
        %v2137 = vsel %vm819, %v2136, %v2132
        %v2138 = vlaneseq
        %v2139 = vshrl.u32 %v2138, 7
        %v2140 = vsub.s32 %v521, %v2139
        %v2141 = vrot.slane %v2073, %v2140
        %v2142 = vlaneseq
        %v2143 = vshrl.u32 %v2142, 7
        %v2144 = vsub.s32 %v814, %v2143
        %v2145 = vrot.slane %v2076, %v2144
        %v2146 = vsel %vm819, %v2145, %v2141
        %v2147 = vlaneseq
        %v2148 = vshrl.u32 %v2147, 7
        %v2149 = vsub.s32 %v521, %v2148
        %v2150 = vrot.slane %v2079, %v2149
        %v2151 = vlaneseq
        %v2152 = vshrl.u32 %v2151, 7
        %v2153 = vsub.s32 %v814, %v2152
        %v2154 = vrot.slane %v2082, %v2153
        %v2155 = vsel %vm819, %v2154, %v2150
        %v2156 = vlaneseq
        %v2157 = vshrl.u32 %v2156, 7
        %v2158 = vsub.s32 %v521, %v2157
        %v2159 = vrot.slane %v2085, %v2158
        %v2160 = vlaneseq
        %v2161 = vshrl.u32 %v2160, 7
        %v2162 = vsub.s32 %v814, %v2161
        %v2163 = vrot.slane %v2088, %v2162
        %v2164 = vsel %vm819, %v2163, %v2159
        %v2165 = vlaneseq
        %v2166 = vshrl.u32 %v2165, 7
        %v2167 = vsub.s32 %v521, %v2166
        %v2168 = vrot.slane %v2091, %v2167
        %v2169 = vlaneseq
        %v2170 = vshrl.u32 %v2169, 7
        %v2171 = vsub.s32 %v814, %v2170
        %v2172 = vrot.slane %v2094, %v2171
        %v2173 = vsel %vm819, %v2172, %v2168
        %v2174 = vlaneseq
        %v2175 = vshrl.u32 %v2174, 7
        %v2176 = vsub.s32 %v521, %v2175
        %v2177 = vrot.slane %v2097, %v2176
        %v2178 = vlaneseq
        %v2179 = vshrl.u32 %v2178, 7
        %v2180 = vsub.s32 %v814, %v2179
        %v2181 = vrot.slane %v2100, %v2180
        %v2182 = vsel %vm819, %v2181, %v2177
        %v2183 = vlaneseq
        %v2184 = vshrl.u32 %v2183, 7
        %v2185 = vsub.s32 %v521, %v2184
        %v2186 = vrot.slane %v2103, %v2185
        %v2187 = vlaneseq
        %v2188 = vshrl.u32 %v2187, 7
        %v2189 = vsub.s32 %v814, %v2188
        %v2190 = vrot.slane %v2106, %v2189
        %v2191 = vsel %vm819, %v2190, %v2186
        %v2192 = vlaneseq
        %v2193 = vshrl.u32 %v2192, 7
        %v2194 = vsub.s32 %v521, %v2193
        %v2195 = vrot.slane %v2109, %v2194
        %v2196 = vlaneseq
        %v2197 = vshrl.u32 %v2196, 7
        %v2198 = vsub.s32 %v814, %v2197
        %v2199 = vrot.slane %v2112, %v2198
        %v2200 = vsel %vm819, %v2199, %v2195
        %v2201 = vsel %vm884, %v2146, %v2137
        %v2202 = vsel %vm886, %v2155, %v2201
        %v2203 = vsel %vm888, %v2164, %v2202
        %v2204 = vsel %vm890, %v2173, %v2203
        %v2205 = vsel %vm892, %v2182, %v2204
        %v2206 = vsel %vm894, %v2191, %v2205
        %v2207 = vsel %vm896, %v2200, %v2206
        %v2209 = vsel %vm899, %v2207, -inf
        %2210 = vmax.xlane.f32.xlu0 %v2209
        %v2211 = vpop.xlane.xlu0 %2210
        %v2213 = vlaneseq
        %v2214 = vshrl.u32 %v2213, 7
        %v2215 = vsub.s32 0, %v2214
        %v2216 = vrot.slane %v2211, %v2215
        %v2217 = vlaneseq
        %v2218 = vshrl.u32 %v2217, 7
        %v2219 = vsub.s32 1, %v2218
        %v2220 = vrot.slane %v2211, %v2219
        %v2221 = vlaneseq
        %v2222 = vshrl.u32 %v2221, 7
        %v2223 = vsub.s32 2, %v2222
        %v2224 = vrot.slane %v2211, %v2223
        %v2225 = vlaneseq
        %v2226 = vshrl.u32 %v2225, 7
        %v2227 = vsub.s32 3, %v2226
        %v2228 = vrot.slane %v2211, %v2227
        %v2229 = vlaneseq
        %v2230 = vshrl.u32 %v2229, 7
        %v2231 = vsub.s32 4, %v2230
        %v2232 = vrot.slane %v2211, %v2231
        %v2233 = vlaneseq
        %v2234 = vshrl.u32 %v2233, 7
        %v2235 = vsub.s32 5, %v2234
        %v2236 = vrot.slane %v2211, %v2235
        %v2237 = vlaneseq
        %v2238 = vshrl.u32 %v2237, 7
        %v2239 = vsub.s32 6, %v2238
        %v2240 = vrot.slane %v2211, %v2239
        %v2241 = vlaneseq
        %v2242 = vshrl.u32 %v2241, 7
        %v2243 = vsub.s32 7, %v2242
        %v2244 = vrot.slane %v2211, %v2243
        %v2253 = vsub.f32 %v2067, %v2216
        %v2254 = vsub.f32 %v2070, %v2216
        %v2255 = vsub.f32 %v2073, %v2220
        %v2256 = vsub.f32 %v2076, %v2220
        %v2257 = vsub.f32 %v2079, %v2224
        %v2258 = vsub.f32 %v2082, %v2224
        %v2259 = vsub.f32 %v2085, %v2228
        %v2260 = vsub.f32 %v2088, %v2228
        %v2261 = vsub.f32 %v2091, %v2232
        %v2262 = vsub.f32 %v2094, %v2232
        %v2263 = vsub.f32 %v2097, %v2236
        %v2264 = vsub.f32 %v2100, %v2236
        %v2265 = vsub.f32 %v2103, %v2240
        %v2266 = vsub.f32 %v2106, %v2240
        %v2267 = vsub.f32 %v2109, %v2244
        %v2268 = vsub.f32 %v2112, %v2244
        %v2269 = vmul.f32 %v2253, 1.442695
        %v2270 = vpow.pop %v2269
        %v2271 = vmul.f32 %v2254, 1.442695
        %v2272 = vpow.pop %v2271
        %v2273 = vmul.f32 %v2255, 1.442695
        %v2274 = vpow.pop %v2273
        %v2275 = vmul.f32 %v2256, 1.442695
        %v2276 = vpow.pop %v2275
        %v2277 = vmul.f32 %v2257, 1.442695
        %v2278 = vpow.pop %v2277
        %v2279 = vmul.f32 %v2258, 1.442695
        %v2280 = vpow.pop %v2279
        %v2281 = vmul.f32 %v2259, 1.442695
        %v2282 = vpow.pop %v2281
        %v2283 = vmul.f32 %v2260, 1.442695
        %v2284 = vpow.pop %v2283
        %v2285 = vmul.f32 %v2261, 1.442695
        %v2286 = vpow.pop %v2285
        %v2287 = vmul.f32 %v2262, 1.442695
        %v2288 = vpow.pop %v2287
        %v2289 = vmul.f32 %v2263, 1.442695
        %v2290 = vpow.pop %v2289
        %v2291 = vmul.f32 %v2264, 1.442695
        %v2292 = vpow.pop %v2291
        %v2293 = vmul.f32 %v2265, 1.442695
        %v2294 = vpow.pop %v2293
        %v2295 = vmul.f32 %v2266, 1.442695
        %v2296 = vpow.pop %v2295
        %v2297 = vmul.f32 %v2267, 1.442695
        %v2298 = vpow.pop %v2297
        %v2299 = vmul.f32 %v2268, 1.442695
        %v2300 = vpow.pop %v2299
        %2317 = vset.pattern.permute.xlu0 0
        %2318 = vperm.xlu0 %2317, %v2270
        %v2319 = vpop.permute.xlu0 %2318
        %2320 = vset.pattern.permute.xlu0 0
        %2321 = vperm.xlu0 %2320, %v2272
        %v2322 = vpop.permute.xlu0 %2321
        %2323 = vset.pattern.permute.xlu0 0
        %2324 = vperm.xlu0 %2323, %v2274
        %v2325 = vpop.permute.xlu0 %2324
        %2326 = vset.pattern.permute.xlu0 0
        %2327 = vperm.xlu0 %2326, %v2276
        %v2328 = vpop.permute.xlu0 %2327
        %2329 = vset.pattern.permute.xlu0 0
        %2330 = vperm.xlu0 %2329, %v2278
        %v2331 = vpop.permute.xlu0 %2330
        %2332 = vset.pattern.permute.xlu0 0
        %2333 = vperm.xlu0 %2332, %v2280
        %v2334 = vpop.permute.xlu0 %2333
        %2335 = vset.pattern.permute.xlu0 0
        %2336 = vperm.xlu0 %2335, %v2282
        %v2337 = vpop.permute.xlu0 %2336
        %2338 = vset.pattern.permute.xlu0 0
        %2339 = vperm.xlu0 %2338, %v2284
        %v2340 = vpop.permute.xlu0 %2339
        %2341 = vset.pattern.permute.xlu0 0
        %2342 = vperm.xlu0 %2341, %v2286
        %v2343 = vpop.permute.xlu0 %2342
        %2344 = vset.pattern.permute.xlu0 0
        %2345 = vperm.xlu0 %2344, %v2288
        %v2346 = vpop.permute.xlu0 %2345
        %2347 = vset.pattern.permute.xlu0 0
        %2348 = vperm.xlu0 %2347, %v2290
        %v2349 = vpop.permute.xlu0 %2348
        %2350 = vset.pattern.permute.xlu0 0
        %2351 = vperm.xlu0 %2350, %v2292
        %v2352 = vpop.permute.xlu0 %2351
        %2353 = vset.pattern.permute.xlu0 0
        %2354 = vperm.xlu0 %2353, %v2294
        %v2355 = vpop.permute.xlu0 %2354
        %2356 = vset.pattern.permute.xlu0 0
        %2357 = vperm.xlu0 %2356, %v2296
        %v2358 = vpop.permute.xlu0 %2357
        %2359 = vset.pattern.permute.xlu0 0
        %2360 = vperm.xlu0 %2359, %v2298
        %v2361 = vpop.permute.xlu0 %2360
        %2362 = vset.pattern.permute.xlu0 0
        %2363 = vperm.xlu0 %2362, %v2300
        %v2364 = vpop.permute.xlu0 %2363
        %v2365 = vlaneseq
        %v2366 = vshrl.u32 %v2365, 7
        %v2367 = vsub.s32 %v521, %v2366
        %v2368 = vrot.slane %v2319, %v2367
        %v2369 = vlaneseq
        %v2370 = vshrl.u32 %v2369, 7
        %v2371 = vsub.s32 %v814, %v2370
        %v2372 = vrot.slane %v2322, %v2371
        %v2373 = vsel %vm819, %v2372, %v2368
        %v2374 = vlaneseq
        %v2375 = vshrl.u32 %v2374, 7
        %v2376 = vsub.s32 %v521, %v2375
        %v2377 = vrot.slane %v2325, %v2376
        %v2378 = vlaneseq
        %v2379 = vshrl.u32 %v2378, 7
        %v2380 = vsub.s32 %v814, %v2379
        %v2381 = vrot.slane %v2328, %v2380
        %v2382 = vsel %vm819, %v2381, %v2377
        %v2383 = vlaneseq
        %v2384 = vshrl.u32 %v2383, 7
        %v2385 = vsub.s32 %v521, %v2384
        %v2386 = vrot.slane %v2331, %v2385
        %v2387 = vlaneseq
        %v2388 = vshrl.u32 %v2387, 7
        %v2389 = vsub.s32 %v814, %v2388
        %v2390 = vrot.slane %v2334, %v2389
        %v2391 = vsel %vm819, %v2390, %v2386
        %v2392 = vlaneseq
        %v2393 = vshrl.u32 %v2392, 7
        %v2394 = vsub.s32 %v521, %v2393
        %v2395 = vrot.slane %v2337, %v2394
        %v2396 = vlaneseq
        %v2397 = vshrl.u32 %v2396, 7
        %v2398 = vsub.s32 %v814, %v2397
        %v2399 = vrot.slane %v2340, %v2398
        %v2400 = vsel %vm819, %v2399, %v2395
        %v2401 = vlaneseq
        %v2402 = vshrl.u32 %v2401, 7
        %v2403 = vsub.s32 %v521, %v2402
        %v2404 = vrot.slane %v2343, %v2403
        %v2405 = vlaneseq
        %v2406 = vshrl.u32 %v2405, 7
        %v2407 = vsub.s32 %v814, %v2406
        %v2408 = vrot.slane %v2346, %v2407
        %v2409 = vsel %vm819, %v2408, %v2404
        %v2410 = vlaneseq
        %v2411 = vshrl.u32 %v2410, 7
        %v2412 = vsub.s32 %v521, %v2411
        %v2413 = vrot.slane %v2349, %v2412
        %v2414 = vlaneseq
        %v2415 = vshrl.u32 %v2414, 7
        %v2416 = vsub.s32 %v814, %v2415
        %v2417 = vrot.slane %v2352, %v2416
        %v2418 = vsel %vm819, %v2417, %v2413
        %v2419 = vlaneseq
        %v2420 = vshrl.u32 %v2419, 7
        %v2421 = vsub.s32 %v521, %v2420
        %v2422 = vrot.slane %v2355, %v2421
        %v2423 = vlaneseq
        %v2424 = vshrl.u32 %v2423, 7
        %v2425 = vsub.s32 %v814, %v2424
        %v2426 = vrot.slane %v2358, %v2425
        %v2427 = vsel %vm819, %v2426, %v2422
        %v2428 = vlaneseq
        %v2429 = vshrl.u32 %v2428, 7
        %v2430 = vsub.s32 %v521, %v2429
        %v2431 = vrot.slane %v2361, %v2430
        %v2432 = vlaneseq
        %v2433 = vshrl.u32 %v2432, 7
        %v2434 = vsub.s32 %v814, %v2433
        %v2435 = vrot.slane %v2364, %v2434
        %v2436 = vsel %vm819, %v2435, %v2431
        %v2437 = vsel %vm884, %v2382, %v2373
        %v2438 = vsel %vm886, %v2391, %v2437
        %v2439 = vsel %vm888, %v2400, %v2438
        %v2440 = vsel %vm890, %v2409, %v2439
        %v2441 = vsel %vm892, %v2418, %v2440
        %v2442 = vsel %vm894, %v2427, %v2441
        %v2443 = vsel %vm896, %v2436, %v2442
        %v2445 = vsel %vm899, %v2443, 0.0
        %2446 = vadd.xlane.f32.xlu0 %v2445
        %v2447 = vpop.xlane.xlu0 %2446
        %v2448 = vrcp.pop %v2447
        %v2449 = vmul.f32 %v2447, %v2448
        %v2450 = vsub.f32 2.0, %v2449
        %v2451 = vmul.f32 %v2448, %v2450
        %v2453 = vlaneseq
        %v2454 = vshrl.u32 %v2453, 7
        %v2455 = vsub.s32 0, %v2454
        %v2456 = vrot.slane %v2451, %v2455
        %v2457 = vlaneseq
        %v2458 = vshrl.u32 %v2457, 7
        %v2459 = vsub.s32 1, %v2458
        %v2460 = vrot.slane %v2451, %v2459
        %v2461 = vlaneseq
        %v2462 = vshrl.u32 %v2461, 7
        %v2463 = vsub.s32 2, %v2462
        %v2464 = vrot.slane %v2451, %v2463
        %v2465 = vlaneseq
        %v2466 = vshrl.u32 %v2465, 7
        %v2467 = vsub.s32 3, %v2466
        %v2468 = vrot.slane %v2451, %v2467
        %v2469 = vlaneseq
        %v2470 = vshrl.u32 %v2469, 7
        %v2471 = vsub.s32 4, %v2470
        %v2472 = vrot.slane %v2451, %v2471
        %v2473 = vlaneseq
        %v2474 = vshrl.u32 %v2473, 7
        %v2475 = vsub.s32 5, %v2474
        %v2476 = vrot.slane %v2451, %v2475
        %v2477 = vlaneseq
        %v2478 = vshrl.u32 %v2477, 7
        %v2479 = vsub.s32 6, %v2478
        %v2480 = vrot.slane %v2451, %v2479
        %v2481 = vlaneseq
        %v2482 = vshrl.u32 %v2481, 7
        %v2483 = vsub.s32 7, %v2482
        %v2484 = vrot.slane %v2451, %v2483
        %v2493 = vmul.f32 %v2270, %v2456
        %v2494 = vmul.f32 %v2272, %v2456
        %v2495 = vmul.f32 %v2274, %v2460
        %v2496 = vmul.f32 %v2276, %v2460
        %v2497 = vmul.f32 %v2278, %v2464
        %v2498 = vmul.f32 %v2280, %v2464
        %v2499 = vmul.f32 %v2282, %v2468
        %v2500 = vmul.f32 %v2284, %v2468
        %v2501 = vmul.f32 %v2286, %v2472
        %v2502 = vmul.f32 %v2288, %v2472
        %v2503 = vmul.f32 %v2290, %v2476
        %v2504 = vmul.f32 %v2292, %v2476
        %v2505 = vmul.f32 %v2294, %v2480
        %v2506 = vmul.f32 %v2296, %v2480
        %v2507 = vmul.f32 %v2298, %v2484
        %v2508 = vmul.f32 %v2300, %v2484
        %2510 = vset.pattern.permute.xlu0 0
        %2511 = vperm.xlu0 %2510, %v2493
        %v2512 = vpop.permute.xlu0 %2511
        %2515 = vset.pattern.permute.xlu0 0
        %2516 = vperm.xlu0 %2515, %v2494
        %v2517 = vpop.permute.xlu0 %2516
        %2520 = vset.pattern.permute.xlu0 0
        %2521 = vperm.xlu0 %2520, %v2495
        %v2522 = vpop.permute.xlu0 %2521
        %2525 = vset.pattern.permute.xlu0 0
        %2526 = vperm.xlu0 %2525, %v2496
        %v2527 = vpop.permute.xlu0 %2526
        %2530 = vset.pattern.permute.xlu0 0
        %2531 = vperm.xlu0 %2530, %v2497
        %v2532 = vpop.permute.xlu0 %2531
        %2535 = vset.pattern.permute.xlu0 0
        %2536 = vperm.xlu0 %2535, %v2498
        %v2537 = vpop.permute.xlu0 %2536
        %2540 = vset.pattern.permute.xlu0 0
        %2541 = vperm.xlu0 %2540, %v2499
        %v2542 = vpop.permute.xlu0 %2541
        %2545 = vset.pattern.permute.xlu0 0
        %2546 = vperm.xlu0 %2545, %v2500
        %v2547 = vpop.permute.xlu0 %2546
        %2550 = vset.pattern.permute.xlu0 0
        %2551 = vperm.xlu0 %2550, %v2501
        %v2552 = vpop.permute.xlu0 %2551
        %2555 = vset.pattern.permute.xlu0 0
        %2556 = vperm.xlu0 %2555, %v2502
        %v2557 = vpop.permute.xlu0 %2556
        %2560 = vset.pattern.permute.xlu0 0
        %2561 = vperm.xlu0 %2560, %v2503
        %v2562 = vpop.permute.xlu0 %2561
        %2565 = vset.pattern.permute.xlu0 0
        %2566 = vperm.xlu0 %2565, %v2504
        %v2567 = vpop.permute.xlu0 %2566
        %2570 = vset.pattern.permute.xlu0 0
        %2571 = vperm.xlu0 %2570, %v2505
        %v2572 = vpop.permute.xlu0 %2571
        %2575 = vset.pattern.permute.xlu0 0
        %2576 = vperm.xlu0 %2575, %v2506
        %v2577 = vpop.permute.xlu0 %2576
        %2580 = vset.pattern.permute.xlu0 0
        %2581 = vperm.xlu0 %2580, %v2507
        %v2582 = vpop.permute.xlu0 %2581
        %2585 = vset.pattern.permute.xlu0 0
        %2586 = vperm.xlu0 %2585, %v2508
        %v2587 = vpop.permute.xlu0 %2586
        %v2589 = vmul.f32 %v2512, %v387
        %v2590 = vmul.f32 %v2517, %v388
        %v2591 = vmul.f32 %v2522, %v389
        %v2592 = vmul.f32 %v2527, %v390
        %v2593 = vmul.f32 %v2532, %v391
        %v2594 = vmul.f32 %v2537, %v392
        %v2595 = vmul.f32 %v2542, %v393
        %v2596 = vmul.f32 %v2547, %v394
        %v2597 = vmul.f32 %v2552, %v395
        %v2598 = vmul.f32 %v2557, %v396
        %v2599 = vmul.f32 %v2562, %v397
        %v2600 = vmul.f32 %v2567, %v398
        %v2601 = vmul.f32 %v2572, %v399
        %v2602 = vmul.f32 %v2577, %v400
        %v2603 = vmul.f32 %v2582, %v401
        %v2604 = vmul.f32 %v2587, %v402
        %v2605 = vsel %vm1296, %v2589, 0.0
        %v2606 = vsel %vm1296, %v2590, 0.0
        %v2607 = vadd.f32 %v2605, %v2606
        %v2608 = vrot.slane %v2607, 4
        %v2609 = vadd.f32 %v2607, %v2608
        %v2610 = vrot.slane %v2609, 2
        %v2611 = vadd.f32 %v2609, %v2610
        %v2612 = vrot.slane %v2611, 1
        %v2613 = vadd.f32 %v2611, %v2612
        %v2614 = vsel %vm1296, %v2591, 0.0
        %v2615 = vsel %vm1296, %v2592, 0.0
        %v2616 = vadd.f32 %v2614, %v2615
        %v2617 = vrot.slane %v2616, 4
        %v2618 = vadd.f32 %v2616, %v2617
        %v2619 = vrot.slane %v2618, 2
        %v2620 = vadd.f32 %v2618, %v2619
        %v2621 = vrot.slane %v2620, 1
        %v2622 = vadd.f32 %v2620, %v2621
        %v2623 = vsel %vm1296, %v2593, 0.0
        %v2624 = vsel %vm1296, %v2594, 0.0
        %v2625 = vadd.f32 %v2623, %v2624
        %v2626 = vrot.slane %v2625, 4
        %v2627 = vadd.f32 %v2625, %v2626
        %v2628 = vrot.slane %v2627, 2
        %v2629 = vadd.f32 %v2627, %v2628
        %v2630 = vrot.slane %v2629, 1
        %v2631 = vadd.f32 %v2629, %v2630
        %v2632 = vsel %vm1296, %v2595, 0.0
        %v2633 = vsel %vm1296, %v2596, 0.0
        %v2634 = vadd.f32 %v2632, %v2633
        %v2635 = vrot.slane %v2634, 4
        %v2636 = vadd.f32 %v2634, %v2635
        %v2637 = vrot.slane %v2636, 2
        %v2638 = vadd.f32 %v2636, %v2637
        %v2639 = vrot.slane %v2638, 1
        %v2640 = vadd.f32 %v2638, %v2639
        %v2641 = vsel %vm1296, %v2597, 0.0
        %v2642 = vsel %vm1296, %v2598, 0.0
        %v2643 = vadd.f32 %v2641, %v2642
        %v2644 = vrot.slane %v2643, 4
        %v2645 = vadd.f32 %v2643, %v2644
        %v2646 = vrot.slane %v2645, 2
        %v2647 = vadd.f32 %v2645, %v2646
        %v2648 = vrot.slane %v2647, 1
        %v2649 = vadd.f32 %v2647, %v2648
        %v2650 = vsel %vm1296, %v2599, 0.0
        %v2651 = vsel %vm1296, %v2600, 0.0
        %v2652 = vadd.f32 %v2650, %v2651
        %v2653 = vrot.slane %v2652, 4
        %v2654 = vadd.f32 %v2652, %v2653
        %v2655 = vrot.slane %v2654, 2
        %v2656 = vadd.f32 %v2654, %v2655
        %v2657 = vrot.slane %v2656, 1
        %v2658 = vadd.f32 %v2656, %v2657
        %v2659 = vsel %vm1296, %v2601, 0.0
        %v2660 = vsel %vm1296, %v2602, 0.0
        %v2661 = vadd.f32 %v2659, %v2660
        %v2662 = vrot.slane %v2661, 4
        %v2663 = vadd.f32 %v2661, %v2662
        %v2664 = vrot.slane %v2663, 2
        %v2665 = vadd.f32 %v2663, %v2664
        %v2666 = vrot.slane %v2665, 1
        %v2667 = vadd.f32 %v2665, %v2666
        %v2668 = vsel %vm1296, %v2603, 0.0
        %v2669 = vsel %vm1296, %v2604, 0.0
        %v2670 = vadd.f32 %v2668, %v2669
        %v2671 = vrot.slane %v2670, 4
        %v2672 = vadd.f32 %v2670, %v2671
        %v2673 = vrot.slane %v2672, 2
        %v2674 = vadd.f32 %v2672, %v2673
        %v2675 = vrot.slane %v2674, 1
        %v2676 = vadd.f32 %v2674, %v2675
        %v2685 = vsel %vm884, %v2622, %v2613
        %v2686 = vsel %vm886, %v2631, %v2685
        %v2687 = vsel %vm888, %v2640, %v2686
        %v2688 = vsel %vm890, %v2649, %v2687
        %v2689 = vsel %vm892, %v2658, %v2688
        %v2690 = vsel %vm894, %v2667, %v2689
        %v2691 = vsel %vm896, %v2676, %v2690
        %2694 = vrot.lane.b32.xlu0 %v1854, 64
        %v2695 = vpop.permute.xlu0 %2694
        %2697 = vrot.lane.b32.xlu0 %v1497, 112
        %v2698 = vpop.permute.xlu0 %2697
        %v2700 = vsel %vm1296, %v2691, %v2695
        %v2701 = vsel %vm1393, %v2700, %v2698
        %v2703 = vsel %vm1395, %v2701, 0
        %2705 = vmatprep.subr.mxu0 0.0
        %2706 = vmatpush1.msra.mxu0 %v484
        %2707 = vmatprep.subr.mxu0 0.0
        %2708 = vmatpush1.msra.mxu0 %v485
        %2709 = vmatprep.subr.mxu0 0.0
        %2710 = vmatpush1.msra.mxu0 %v486
        %2711 = vmatprep.subr.mxu0 0.0
        %2712 = vmatpush1.msra.mxu0 %v487
        %2713 = vmatprep.subr.mxu0 0.0
        %2714 = vmatpush1.msra.mxu0 %v488
        %2715 = vmatprep.subr.mxu0 0.0
        %2716 = vmatpush1.msra.mxu0 %v489
        %2717 = vmatprep.subr.mxu0 0.0
        %2718 = vmatpush1.msra.mxu0 %v490
        %2719 = vmatprep.subr.mxu0 0.0
        %2720 = vmatpush1.msra.mxu0 %v491
        %2721 = vmatprep.subr.mxu0 0.0
        %2722 = vmatpush1.msra.mxu0 %v492
        %2723 = vmatprep.subr.mxu0 0.0
        %2724 = vmatpush1.msra.mxu0 %v493
        %2725 = vmatprep.subr.mxu0 0.0
        %2726 = vmatpush1.msra.mxu0 %v494
        %2727 = vmatprep.subr.mxu0 0.0
        %2728 = vmatpush1.msra.mxu0 %v495
        %2729 = vmatprep.subr.mxu0 0.0
        %2730 = vmatpush1.msra.mxu0 %v496
        %2731 = vmatprep.subr.mxu0 0.0
        %2732 = vmatpush1.msra.mxu0 %v497
        %2733 = vmatprep.subr.mxu0 0.0
        %2734 = vmatpush1.msra.mxu0 0.0
        %2735 = vmatprep.subr.mxu0 0.0
        %2736 = vmatpush1.msra.mxu0 0.0
        %2737 = vmatprep.subr.mxu0 0.0
        %2738 = vmatpush1.msra.mxu0 0.0
        %2739 = vmatprep.subr.mxu0 0.0
        %2740 = vmatpush1.msra.mxu0 0.0
        %2741 = vmatprep.subr.mxu0 0.0
        %2742 = vmatpush1.msra.mxu0 0.0
        %2743 = vmatprep.subr.mxu0 0.0
        %2744 = vmatpush1.msra.mxu0 0.0
        %2745 = vmatprep.subr.mxu0 0.0
        %2746 = vmatpush1.msra.mxu0 0.0
        %2747 = vmatprep.subr.mxu0 0.0
        %2748 = vmatpush1.msra.mxu0 0.0
        %2749 = vmatprep.subr.mxu0 0.0
        %2750 = vmatpush1.msra.mxu0 0.0
        %2751 = vmatprep.subr.mxu0 0.0
        %2752 = vmatpush1.msra.mxu0 0.0
        %2753 = vmatprep.subr.mxu0 0.0
        %2754 = vmatpush1.msra.mxu0 0.0
        %2755 = vmatprep.subr.mxu0 0.0
        %2756 = vmatpush1.msra.mxu0 0.0
        %2757 = vmatprep.subr.mxu0 0.0
        %2758 = vmatpush1.msra.mxu0 0.0
        %2759 = vmatprep.subr.mxu0 0.0
        %2760 = vmatpush1.msra.mxu0 0.0
        %2761 = vmatprep.subr.mxu0 0.0
        %2762 = vmatpush1.msra.mxu0 0.0
        %2763 = vmatprep.subr.mxu0 0.0
        %2764 = vmatpush1.msra.mxu0 0.0
        %2765 = vmatprep.subr.mxu0 0.0
        %2766 = vmatpush1.msra.mxu0 0.0
        %2767 = vmatprep.subr.mxu0 0.0
        %2768 = vmatpush1.msra.mxu0 0.0
        %2769 = vmatprep.mubr.f32.mxu0 0.0
        %2770 = vmatmul.mubr.f32.gmra.mrb[0].mxu0 %v2703
        %v2771 = vpop.f32.mrb[0].mxu0
        %v2772 = vadd.f32 0.0, %v2771
        %v2773 = vpop.f32.mrb[0].mxu0
        %2774 = vdwg.mxu0
        %v2775 = vadd.f32 %v419, %v2772
        %v2776 = vxor.u32 %v2775, 2147483648
        %v2777 = vmul.f32 %v2776, 1.442695
        %v2778 = vpow.pop %v2777
        %v2779 = vadd.f32 %v2778, 1.0
        %v2780 = vrcp.pop %v2779
        %v2781 = vmul.f32 1.0, %v2780
        %v2782 = vtanh.pop %v2775
        %v2783 = vmul.f32 %v2781, %v1491
        %2785 = vrot.lane.b32.xlu0 %v2782, 64
        %v2786 = vpop.permute.xlu0 %2785
        %v2788 = vmul.f32 %v2781, %v2786
        %2790 = vrot.lane.b32.xlu0 %v2788, 32
        %v2791 = vpop.permute.xlu0 %2790
        %v2793 = vadd.f32 %v2783, %v2791
        %v2794 = vtanh.pop %v2793
        %2796 = vrot.lane.b32.xlu0 %v2794, 64
        %v2797 = vpop.permute.xlu0 %2796
        %v2799 = vmul.f32 %v2781, %v2797
        %2801 = vrot.lane.b32.xlu0 %v2799, 32
        %v2802 = vpop.permute.xlu0 %2801
        %v2803 = vsel %vm528, %v2802, 0
        %2805 = vmatprep.subr.mxu0 %v504
        %2806 = vmatpush1.msra.mxu0 %v503
        %2807 = vmatprep.subr.mxu0 %v508
        %2808 = vmatpush1.msra.mxu0 %v507
        %2809 = vmatprep.subr.mxu0 %v512
        %2810 = vmatpush1.msra.mxu0 %v511
        %2811 = vmatprep.subr.mxu0 %v516
        %2812 = vmatpush1.msra.mxu0 %v515
        %2813 = vmatprep.subr.mxu0 0.0
        %2814 = vmatpush1.msra.mxu0 0.0
        %2815 = vmatprep.subr.mxu0 0.0
        %2816 = vmatpush1.msra.mxu0 0.0
        %2817 = vmatprep.subr.mxu0 0.0
        %2818 = vmatpush1.msra.mxu0 0.0
        %2819 = vmatprep.subr.mxu0 0.0
        %2820 = vmatpush1.msra.mxu0 0.0
        %2821 = vmatprep.subr.mxu0 0.0
        %2822 = vmatpush1.msra.mxu0 0.0
        %2823 = vmatprep.subr.mxu0 0.0
        %2824 = vmatpush1.msra.mxu0 0.0
        %2825 = vmatprep.subr.mxu0 0.0
        %2826 = vmatpush1.msra.mxu0 0.0
        %2827 = vmatprep.subr.mxu0 0.0
        %2828 = vmatpush1.msra.mxu0 0.0
        %2829 = vmatprep.subr.mxu0 0.0
        %2830 = vmatpush1.msra.mxu0 0.0
        %2831 = vmatprep.subr.mxu0 0.0
        %2832 = vmatpush1.msra.mxu0 0.0
        %2833 = vmatprep.subr.mxu0 0.0
        %2834 = vmatpush1.msra.mxu0 0.0
        %2835 = vmatprep.subr.mxu0 0.0
        %2836 = vmatpush1.msra.mxu0 0.0
        %2837 = vmatprep.subr.mxu0 0.0
        %2838 = vmatpush1.msra.mxu0 0.0
        %2839 = vmatprep.subr.mxu0 0.0
        %2840 = vmatpush1.msra.mxu0 0.0
        %2841 = vmatprep.subr.mxu0 0.0
        %2842 = vmatpush1.msra.mxu0 0.0
        %2843 = vmatprep.subr.mxu0 0.0
        %2844 = vmatpush1.msra.mxu0 0.0
        %2845 = vmatprep.subr.mxu0 0.0
        %2846 = vmatpush1.msra.mxu0 0.0
        %2847 = vmatprep.subr.mxu0 0.0
        %2848 = vmatpush1.msra.mxu0 0.0
        %2849 = vmatprep.subr.mxu0 0.0
        %2850 = vmatpush1.msra.mxu0 0.0
        %2851 = vmatprep.subr.mxu0 0.0
        %2852 = vmatpush1.msra.mxu0 0.0
        %2853 = vmatprep.subr.mxu0 0.0
        %2854 = vmatpush1.msra.mxu0 0.0
        %2855 = vmatprep.subr.mxu0 0.0
        %2856 = vmatpush1.msra.mxu0 0.0
        %2857 = vmatprep.subr.mxu0 0.0
        %2858 = vmatpush1.msra.mxu0 0.0
        %2859 = vmatprep.subr.mxu0 0.0
        %2860 = vmatpush1.msra.mxu0 0.0
        %2861 = vmatprep.subr.mxu0 0.0
        %2862 = vmatpush1.msra.mxu0 0.0
        %2863 = vmatprep.subr.mxu0 0.0
        %2864 = vmatpush1.msra.mxu0 0.0
        %2865 = vmatprep.subr.mxu0 0.0
        %2866 = vmatpush1.msra.mxu0 0.0
        %2867 = vmatprep.subr.mxu0 0.0
        %2868 = vmatpush1.msra.mxu0 0.0
        %2869 = vmatprep.mubr.f32.mxu0 0.0
        %2870 = vmatmul.mubr.f32.gmra.mrb[0].mxu0 %v2803
        %v2871 = vpop.f32.mrb[0].mxu0
        %v2872 = vadd.f32 %v1502, %v2871
        %v2873 = vpop.f32.mrb[0].mxu0
        %v2874 = vadd.f32 %v1506, %v2873
        %2875 = vdwg.mxu0
        %2876 = vmatprep.subr.mxu0 %v506
        %2877 = vmatpush1.msra.mxu0 %v505
        %2878 = vmatprep.subr.mxu0 %v510
        %2879 = vmatpush1.msra.mxu0 %v509
        %2880 = vmatprep.subr.mxu0 %v514
        %2881 = vmatpush1.msra.mxu0 %v513
        %2882 = vmatprep.subr.mxu0 %v518
        %2883 = vmatpush1.msra.mxu0 %v517
        %2884 = vmatprep.subr.mxu0 0.0
        %2885 = vmatpush1.msra.mxu0 0.0
        %2886 = vmatprep.subr.mxu0 0.0
        %2887 = vmatpush1.msra.mxu0 0.0
        %2888 = vmatprep.subr.mxu0 0.0
        %2889 = vmatpush1.msra.mxu0 0.0
        %2890 = vmatprep.subr.mxu0 0.0
        %2891 = vmatpush1.msra.mxu0 0.0
        %2892 = vmatprep.subr.mxu0 0.0
        %2893 = vmatpush1.msra.mxu0 0.0
        %2894 = vmatprep.subr.mxu0 0.0
        %2895 = vmatpush1.msra.mxu0 0.0
        %2896 = vmatprep.subr.mxu0 0.0
        %2897 = vmatpush1.msra.mxu0 0.0
        %2898 = vmatprep.subr.mxu0 0.0
        %2899 = vmatpush1.msra.mxu0 0.0
        %2900 = vmatprep.subr.mxu0 0.0
        %2901 = vmatpush1.msra.mxu0 0.0
        %2902 = vmatprep.subr.mxu0 0.0
        %2903 = vmatpush1.msra.mxu0 0.0
        %2904 = vmatprep.subr.mxu0 0.0
        %2905 = vmatpush1.msra.mxu0 0.0
        %2906 = vmatprep.subr.mxu0 0.0
        %2907 = vmatpush1.msra.mxu0 0.0
        %2908 = vmatprep.subr.mxu0 0.0
        %2909 = vmatpush1.msra.mxu0 0.0
        %2910 = vmatprep.subr.mxu0 0.0
        %2911 = vmatpush1.msra.mxu0 0.0
        %2912 = vmatprep.subr.mxu0 0.0
        %2913 = vmatpush1.msra.mxu0 0.0
        %2914 = vmatprep.subr.mxu0 0.0
        %2915 = vmatpush1.msra.mxu0 0.0
        %2916 = vmatprep.subr.mxu0 0.0
        %2917 = vmatpush1.msra.mxu0 0.0
        %2918 = vmatprep.subr.mxu0 0.0
        %2919 = vmatpush1.msra.mxu0 0.0
        %2920 = vmatprep.subr.mxu0 0.0
        %2921 = vmatpush1.msra.mxu0 0.0
        %2922 = vmatprep.subr.mxu0 0.0
        %2923 = vmatpush1.msra.mxu0 0.0
        %2924 = vmatprep.subr.mxu0 0.0
        %2925 = vmatpush1.msra.mxu0 0.0
        %2926 = vmatprep.subr.mxu0 0.0
        %2927 = vmatpush1.msra.mxu0 0.0
        %2928 = vmatprep.subr.mxu0 0.0
        %2929 = vmatpush1.msra.mxu0 0.0
        %2930 = vmatprep.subr.mxu0 0.0
        %2931 = vmatpush1.msra.mxu0 0.0
        %2932 = vmatprep.subr.mxu0 0.0
        %2933 = vmatpush1.msra.mxu0 0.0
        %2934 = vmatprep.subr.mxu0 0.0
        %2935 = vmatpush1.msra.mxu0 0.0
        %2936 = vmatprep.subr.mxu0 0.0
        %2937 = vmatpush1.msra.mxu0 0.0
        %2938 = vmatprep.subr.mxu0 0.0
        %2939 = vmatpush1.msra.mxu0 0.0
        %2940 = vmatprep.mubr.f32.mxu0 0.0
        %2941 = vmatmul.mubr.f32.gmra.mrb[0].mxu0 %v2803
        %v2942 = vpop.f32.mrb[0].mxu0
        %v2943 = vadd.f32 %v1510, %v2942
        %v2944 = vpop.f32.mrb[0].mxu0
        %v2945 = vadd.f32 %v1514, %v2944
        %2946 = vdwg.mxu0
        %s2947 = scalar_lea.vmem %s365, 32 [#allocation5]
        %2948 = vst [vmem:[%s2947] sm:$0xff] %v2872
        %2949 = vst [vmem:[%s2947 + $0x8] sm:$0xff] %v2874
        %2950 = vst [vmem:[%s2947 + $0x10] sm:$0xff] %v2943
        %2951 = vst [vmem:[%s2947 + $0x18] sm:$0xff] %v2945
        %v2952 = vmax.f32 %v2872, %v2874
        %v2953 = vmax.f32 %v2943, %v2945
        %v2954 = vmax.f32 %v2952, %v2953
        %2955 = vmax.xlane.f32.xlu0 %v2954
        %v2956 = vpop.xlane.xlu0 %2955
        %vm2957 = vcmp.eq.f32.partialorder %v2872, %v2956
        %vm2958 = vcmp.eq.f32.partialorder %v2874, %v2956
        %vm2959 = vcmp.eq.f32.partialorder %v2943, %v2956
        %vm2960 = vcmp.eq.f32.partialorder %v2945, %v2956
        %v2961 = vsel %vm2957, %v521, 512
        %v2962 = vsel %vm2958, %v522, 512
        %v2963 = vsel %vm2959, %v523, 512
        %v2964 = vsel %vm2960, %v524, 512
        %vm2965 = vcmp.lt.s32.totalorder %v2961, %v2962
        %v2966 = vsel %vm2965, %v2961, %v2962
        %vm2967 = vcmp.lt.s32.totalorder %v2963, %v2964
        %v2968 = vsel %vm2967, %v2963, %v2964
        %vm2969 = vcmp.lt.s32.totalorder %v2966, %v2968
        %v2970 = vsel %vm2969, %v2966, %v2968
        %v2971 = vand.u32 %v2970, 65535
        %v2972 = vshra.s32 %v2970, 16
        %v2973 = vcvt.s32.f32 %v2971
        %v2974 = vcvt.s32.f32 %v2972
        %2975 = vmin.xlane.f32.xlu0 %v2974
        %v2976 = vpop.xlane.xlu0 %2975
        %vm2977 = vcmp.eq.f32.partialorder %v2974, %v2976
        %v2978 = vsel %vm2977, %v2973, inf
        %2979 = vmin.xlane.f32.xlu0 %v2978
        %v2980 = vpop.xlane.xlu0 %2979
        %v2981 = vcvt.f32.s32 %v2980
        %v2982 = vcvt.f32.s32 %v2976
        %v2983 = vshll.u32 %v2982, 16
        %v2984 = vadd.s32 %v2983, %v2981
        %vm2985 = vcmp.eq.s32.totalorder %v521, 1
        %v2986 = vsel %vm2985, %v2984, %v1704
        %vm2987 = vcmp.eq.s32.totalorder %v521, %v2984
        %vm2988 = vcmp.eq.s32.totalorder %v522, %v2984
        %vm2989 = vcmp.eq.s32.totalorder %v523, %v2984
        %vm2990 = vcmp.eq.s32.totalorder %v524, %v2984
        %v2991 = vsel %vm2987, 1, 0
        %v2992 = vsel %vm2988, 1, 0
        %v2993 = vsel %vm2989, 1, 0
        %v2994 = vsel %vm2990, 1, 0
        %v2995 = vcvt.s32.f32 %v2991
        %v2996 = vcvt.s32.f32 %v2992
        %v2997 = vcvt.s32.f32 %v2993
        %v2998 = vcvt.s32.f32 %v2994
        %2999 = vmatprep.subr.mxu0 0.0
        %3000 = vmatpush1.msra.mxu0 %v420
        %3001 = vmatprep.subr.mxu0 0.0
        %3002 = vmatpush1.msra.mxu0 %v421
        %3003 = vmatprep.subr.mxu0 0.0
        %3004 = vmatpush1.msra.mxu0 %v422
        %3005 = vmatprep.subr.mxu0 0.0
        %3006 = vmatpush1.msra.mxu0 %v423
        %3007 = vmatprep.subr.mxu0 0.0
        %3008 = vmatpush1.msra.mxu0 %v424
        %3009 = vmatprep.subr.mxu0 0.0
        %3010 = vmatpush1.msra.mxu0 %v425
        %3011 = vmatprep.subr.mxu0 0.0
        %3012 = vmatpush1.msra.mxu0 %v426
        %3013 = vmatprep.subr.mxu0 0.0
        %3014 = vmatpush1.msra.mxu0 %v427
        %3015 = vmatprep.subr.mxu0 0.0
        %3016 = vmatpush1.msra.mxu0 %v428
        %3017 = vmatprep.subr.mxu0 0.0
        %3018 = vmatpush1.msra.mxu0 %v429
        %3019 = vmatprep.subr.mxu0 0.0
        %3020 = vmatpush1.msra.mxu0 %v430
        %3021 = vmatprep.subr.mxu0 0.0
        %3022 = vmatpush1.msra.mxu0 %v431
        %3023 = vmatprep.subr.mxu0 0.0
        %3024 = vmatpush1.msra.mxu0 %v432
        %3025 = vmatprep.subr.mxu0 0.0
        %3026 = vmatpush1.msra.mxu0 %v433
        %3027 = vmatprep.subr.mxu0 0.0
        %3028 = vmatpush1.msra.mxu0 %v434
        %3029 = vmatprep.subr.mxu0 0.0
        %3030 = vmatpush1.msra.mxu0 %v435
        %3031 = vmatprep.subr.mxu0 0.0
        %3032 = vmatpush1.msra.mxu0 %v436
        %3033 = vmatprep.subr.mxu0 0.0
        %3034 = vmatpush1.msra.mxu0 %v437
        %3035 = vmatprep.subr.mxu0 0.0
        %3036 = vmatpush1.msra.mxu0 %v438
        %3037 = vmatprep.subr.mxu0 0.0
        %3038 = vmatpush1.msra.mxu0 %v439
        %3039 = vmatprep.subr.mxu0 0.0
        %3040 = vmatpush1.msra.mxu0 %v440
        %3041 = vmatprep.subr.mxu0 0.0
        %3042 = vmatpush1.msra.mxu0 %v441
        %3043 = vmatprep.subr.mxu0 0.0
        %3044 = vmatpush1.msra.mxu0 %v442
        %3045 = vmatprep.subr.mxu0 0.0
        %3046 = vmatpush1.msra.mxu0 %v443
        %3047 = vmatprep.subr.mxu0 0.0
        %3048 = vmatpush1.msra.mxu0 %v444
        %3049 = vmatprep.subr.mxu0 0.0
        %3050 = vmatpush1.msra.mxu0 %v445
        %3051 = vmatprep.subr.mxu0 0.0
        %3052 = vmatpush1.msra.mxu0 %v446
        %3053 = vmatprep.subr.mxu0 0.0
        %3054 = vmatpush1.msra.mxu0 %v447
        %3055 = vmatprep.subr.mxu0 0.0
        %3056 = vmatpush1.msra.mxu0 %v448
        %3057 = vmatprep.subr.mxu0 0.0
        %3058 = vmatpush1.msra.mxu0 %v449
        %3059 = vmatprep.subr.mxu0 0.0
        %3060 = vmatpush1.msra.mxu0 %v450
        %3061 = vmatprep.subr.mxu0 0.0
        %3062 = vmatpush1.msra.mxu0 %v451
        %3063 = vmatprep.mubr.f32.mxu0 %v2996
        %3064 = vmatmul.mubr.f32.gmra.mrb[0].mxu0 %v2995
        %v3065 = vpop.f32.mrb[0].mxu0
        %v3066 = vadd.f32 0.0, %v3065
        %v3067 = vpop.f32.mrb[0].mxu0
        %3068 = vdwg.mxu0
        %3069 = vmatprep.subr.mxu0 0.0
        %3070 = vmatpush1.msra.mxu0 %v452
        %3071 = vmatprep.subr.mxu0 0.0
        %3072 = vmatpush1.msra.mxu0 %v453
        %3073 = vmatprep.subr.mxu0 0.0
        %3074 = vmatpush1.msra.mxu0 %v454
        %3075 = vmatprep.subr.mxu0 0.0
        %3076 = vmatpush1.msra.mxu0 %v455
        %3077 = vmatprep.subr.mxu0 0.0
        %3078 = vmatpush1.msra.mxu0 %v456
        %3079 = vmatprep.subr.mxu0 0.0
        %3080 = vmatpush1.msra.mxu0 %v457
        %3081 = vmatprep.subr.mxu0 0.0
        %3082 = vmatpush1.msra.mxu0 %v458
        %3083 = vmatprep.subr.mxu0 0.0
        %3084 = vmatpush1.msra.mxu0 %v459
        %3085 = vmatprep.subr.mxu0 0.0
        %3086 = vmatpush1.msra.mxu0 %v460
        %3087 = vmatprep.subr.mxu0 0.0
        %3088 = vmatpush1.msra.mxu0 %v461
        %3089 = vmatprep.subr.mxu0 0.0
        %3090 = vmatpush1.msra.mxu0 %v462
        %3091 = vmatprep.subr.mxu0 0.0
        %3092 = vmatpush1.msra.mxu0 %v463
        %3093 = vmatprep.subr.mxu0 0.0
        %3094 = vmatpush1.msra.mxu0 %v464
        %3095 = vmatprep.subr.mxu0 0.0
        %3096 = vmatpush1.msra.mxu0 %v465
        %3097 = vmatprep.subr.mxu0 0.0
        %3098 = vmatpush1.msra.mxu0 %v466
        %3099 = vmatprep.subr.mxu0 0.0
        %3100 = vmatpush1.msra.mxu0 %v467
        %3101 = vmatprep.subr.mxu0 0.0
        %3102 = vmatpush1.msra.mxu0 %v468
        %3103 = vmatprep.subr.mxu0 0.0
        %3104 = vmatpush1.msra.mxu0 %v469
        %3105 = vmatprep.subr.mxu0 0.0
        %3106 = vmatpush1.msra.mxu0 %v470
        %3107 = vmatprep.subr.mxu0 0.0
        %3108 = vmatpush1.msra.mxu0 %v471
        %3109 = vmatprep.subr.mxu0 0.0
        %3110 = vmatpush1.msra.mxu0 %v472
        %3111 = vmatprep.subr.mxu0 0.0
        %3112 = vmatpush1.msra.mxu0 %v473
        %3113 = vmatprep.subr.mxu0 0.0
        %3114 = vmatpush1.msra.mxu0 %v474
        %3115 = vmatprep.subr.mxu0 0.0
        %3116 = vmatpush1.msra.mxu0 %v475
        %3117 = vmatprep.subr.mxu0 0.0
        %3118 = vmatpush1.msra.mxu0 %v476
        %3119 = vmatprep.subr.mxu0 0.0
        %3120 = vmatpush1.msra.mxu0 %v477
        %3121 = vmatprep.subr.mxu0 0.0
        %3122 = vmatpush1.msra.mxu0 %v478
        %3123 = vmatprep.subr.mxu0 0.0
        %3124 = vmatpush1.msra.mxu0 %v479
        %3125 = vmatprep.subr.mxu0 0.0
        %3126 = vmatpush1.msra.mxu0 %v480
        %3127 = vmatprep.subr.mxu0 0.0
        %3128 = vmatpush1.msra.mxu0 %v481
        %3129 = vmatprep.subr.mxu0 0.0
        %3130 = vmatpush1.msra.mxu0 %v482
        %3131 = vmatprep.subr.mxu0 0.0
        %3132 = vmatpush1.msra.mxu0 %v483
        %3133 = vmatprep.mubr.f32.mxu0 %v2998
        %3134 = vmatmul.mubr.f32.gmra.mrb[0].mxu0 %v2997
        %v3135 = vpop.f32.mrb[0].mxu0
        %v3136 = vadd.f32 %v3066, %v3135
        %v3137 = vpop.f32.mrb[0].mxu0
        %3138 = vdwg.mxu0
        %3139 = vmatprep.subr.mxu0 0.0
        %3140 = vmatpush1.msra.mxu0 %v498
        %3141 = vmatprep.subr.mxu0 0.0
        %3142 = vmatpush1.msra.mxu0 %v499
        %3143 = vmatprep.subr.mxu0 0.0
        %3144 = vmatpush1.msra.mxu0 %v500
        %3145 = vmatprep.subr.mxu0 0.0
        %3146 = vmatpush1.msra.mxu0 %v501
        %3147 = vmatprep.subr.mxu0 0.0
        %3148 = vmatpush1.msra.mxu0 0.0
        %3149 = vmatprep.subr.mxu0 0.0
        %3150 = vmatpush1.msra.mxu0 0.0
        %3151 = vmatprep.subr.mxu0 0.0
        %3152 = vmatpush1.msra.mxu0 0.0
        %3153 = vmatprep.subr.mxu0 0.0
        %3154 = vmatpush1.msra.mxu0 0.0
        %3155 = vmatprep.subr.mxu0 0.0
        %3156 = vmatpush1.msra.mxu0 0.0
        %3157 = vmatprep.subr.mxu0 0.0
        %3158 = vmatpush1.msra.mxu0 0.0
        %3159 = vmatprep.subr.mxu0 0.0
        %3160 = vmatpush1.msra.mxu0 0.0
        %3161 = vmatprep.subr.mxu0 0.0
        %3162 = vmatpush1.msra.mxu0 0.0
        %3163 = vmatprep.subr.mxu0 0.0
        %3164 = vmatpush1.msra.mxu0 0.0
        %3165 = vmatprep.subr.mxu0 0.0
        %3166 = vmatpush1.msra.mxu0 0.0
        %3167 = vmatprep.subr.mxu0 0.0
        %3168 = vmatpush1.msra.mxu0 0.0
        %3169 = vmatprep.subr.mxu0 0.0
        %3170 = vmatpush1.msra.mxu0 0.0
        %3171 = vmatprep.subr.mxu0 0.0
        %3172 = vmatpush1.msra.mxu0 0.0
        %3173 = vmatprep.subr.mxu0 0.0
        %3174 = vmatpush1.msra.mxu0 0.0
        %3175 = vmatprep.subr.mxu0 0.0
        %3176 = vmatpush1.msra.mxu0 0.0
        %3177 = vmatprep.subr.mxu0 0.0
        %3178 = vmatpush1.msra.mxu0 0.0
        %3179 = vmatprep.subr.mxu0 0.0
        %3180 = vmatpush1.msra.mxu0 0.0
        %3181 = vmatprep.subr.mxu0 0.0
        %3182 = vmatpush1.msra.mxu0 0.0
        %3183 = vmatprep.subr.mxu0 0.0
        %3184 = vmatpush1.msra.mxu0 0.0
        %3185 = vmatprep.subr.mxu0 0.0
        %3186 = vmatpush1.msra.mxu0 0.0
        %3187 = vmatprep.subr.mxu0 0.0
        %3188 = vmatpush1.msra.mxu0 0.0
        %3189 = vmatprep.subr.mxu0 0.0
        %3190 = vmatpush1.msra.mxu0 0.0
        %3191 = vmatprep.subr.mxu0 0.0
        %3192 = vmatpush1.msra.mxu0 0.0
        %3193 = vmatprep.subr.mxu0 0.0
        %3194 = vmatpush1.msra.mxu0 0.0
        %3195 = vmatprep.subr.mxu0 0.0
        %3196 = vmatpush1.msra.mxu0 0.0
        %3197 = vmatprep.subr.mxu0 0.0
        %3198 = vmatpush1.msra.mxu0 0.0
        %3199 = vmatprep.subr.mxu0 0.0
        %3200 = vmatpush1.msra.mxu0 0.0
        %3201 = vmatprep.subr.mxu0 0.0
        %3202 = vmatpush1.msra.mxu0 0.0
        %3203 = vmatprep.mubr.f32.mxu0 0.0
        %3204 = vmatmul.mubr.f32.gmra.mrb[0].mxu0 %v2803
        %v3205 = vpop.f32.mrb[0].mxu0
        %v3206 = vadd.f32 0.0, %v3205
        %v3207 = vpop.f32.mrb[0].mxu0
        %3208 = vdwg.mxu0
        %v3210 = vcombine.high %v3206, %v3206
        %v3212 = vunpack.c.l.s4 1966171168
        %v3213 = vunpack.c.0.s8 %v3212
        %v3214 = vlaneseq
        %v3215 = vshrl.u32 %v3214, 7
        %v3216 = vsub.s32 %v3213, %v3215
        %v3217 = vrot.slane %v3206, %v3216
        %v3219 = vunpack.c.l.s4 1966171168
        %v3220 = vunpack.c.0.s8 %v3219
        %v3221 = vlaneseq
        %v3222 = vshrl.u32 %v3221, 7
        %v3223 = vsub.s32 %v3220, %v3222
        %v3224 = vrot.slane %v3210, %v3223
        %v3225 = vcombine.high %v3217, %v3217
        %v3226 = vcombine.high %v3224, %v3224
        %v3228 = vunpack.c.l.s4 1966171168
        %v3229 = vunpack.c.0.s8 %v3228
        %v3230 = vlaneseq
        %v3231 = vshrl.u32 %v3230, 7
        %v3232 = vsub.s32 %v3229, %v3231
        %v3233 = vrot.slane %v3217, %v3232
        %v3235 = vunpack.c.l.s4 1966171168
        %v3236 = vunpack.c.0.s8 %v3235
        %v3237 = vlaneseq
        %v3238 = vshrl.u32 %v3237, 7
        %v3239 = vsub.s32 %v3236, %v3238
        %v3240 = vrot.slane %v3224, %v3239
        %v3242 = vunpack.c.l.s4 1966171168
        %v3243 = vunpack.c.0.s8 %v3242
        %v3244 = vlaneseq
        %v3245 = vshrl.u32 %v3244, 7
        %v3246 = vsub.s32 %v3243, %v3245
        %v3247 = vrot.slane %v3225, %v3246
        %v3249 = vunpack.c.l.s4 1966171168
        %v3250 = vunpack.c.0.s8 %v3249
        %v3251 = vlaneseq
        %v3252 = vshrl.u32 %v3251, 7
        %v3253 = vsub.s32 %v3250, %v3252
        %v3254 = vrot.slane %v3226, %v3253
        %v3255 = vcombine.high %v3233, %v3233
        %v3256 = vcombine.high %v3240, %v3240
        %v3257 = vcombine.high %v3247, %v3247
        %v3258 = vcombine.high %v3254, %v3254
        %v3259 = vlaneseq
        %v3260 = vshrl.u32 %v3259, 7
        %v3261 = vsub.s32 0, %v3260
        %v3262 = vrot.slane %v3233, %v3261
        %v3263 = vlaneseq
        %v3264 = vshrl.u32 %v3263, 7
        %v3265 = vsub.s32 0, %v3264
        %v3266 = vrot.slane %v3247, %v3265
        %v3267 = vlaneseq
        %v3268 = vshrl.u32 %v3267, 7
        %v3269 = vsub.s32 0, %v3268
        %v3270 = vrot.slane %v3255, %v3269
        %v3271 = vlaneseq
        %v3272 = vshrl.u32 %v3271, 7
        %v3273 = vsub.s32 0, %v3272
        %v3274 = vrot.slane %v3257, %v3273
        %v3275 = vlaneseq
        %v3276 = vshrl.u32 %v3275, 7
        %v3277 = vsub.s32 0, %v3276
        %v3278 = vrot.slane %v3240, %v3277
        %v3279 = vlaneseq
        %v3280 = vshrl.u32 %v3279, 7
        %v3281 = vsub.s32 0, %v3280
        %v3282 = vrot.slane %v3254, %v3281
        %v3283 = vlaneseq
        %v3284 = vshrl.u32 %v3283, 7
        %v3285 = vsub.s32 0, %v3284
        %v3286 = vrot.slane %v3256, %v3285
        %v3287 = vlaneseq
        %v3288 = vshrl.u32 %v3287, 7
        %v3289 = vsub.s32 0, %v3288
        %v3290 = vrot.slane %v3258, %v3289
        %v3299 = vadd.f32 %v403, %v3262
        %v3300 = vadd.f32 %v404, %v3262
        %v3301 = vadd.f32 %v405, %v3266
        %v3302 = vadd.f32 %v406, %v3266
        %v3303 = vadd.f32 %v407, %v3270
        %v3304 = vadd.f32 %v408, %v3270
        %v3305 = vadd.f32 %v409, %v3274
        %v3306 = vadd.f32 %v410, %v3274
        %v3307 = vadd.f32 %v411, %v3278
        %v3308 = vadd.f32 %v412, %v3278
        %v3309 = vadd.f32 %v413, %v3282
        %v3310 = vadd.f32 %v414, %v3282
        %v3311 = vadd.f32 %v415, %v3286
        %v3312 = vadd.f32 %v416, %v3286
        %v3313 = vadd.f32 %v417, %v3290
        %v3314 = vadd.f32 %v418, %v3290
        %v3315 = vtanh.pop %v3299
        %v3316 = vtanh.pop %v3300
        %v3317 = vtanh.pop %v3301
        %v3318 = vtanh.pop %v3302
        %v3319 = vtanh.pop %v3303
        %v3320 = vtanh.pop %v3304
        %v3321 = vtanh.pop %v3305
        %v3322 = vtanh.pop %v3306
        %v3323 = vtanh.pop %v3307
        %v3324 = vtanh.pop %v3308
        %v3325 = vtanh.pop %v3309
        %v3326 = vtanh.pop %v3310
        %v3327 = vtanh.pop %v3311
        %v3328 = vtanh.pop %v3312
        %v3329 = vtanh.pop %v3313
        %v3330 = vtanh.pop %v3314
        %v3331 = vmul.f32 %v3315, %v728
        %v3332 = vmul.f32 %v3316, %v728
        %v3333 = vmul.f32 %v3317, %v728
        %v3334 = vmul.f32 %v3318, %v728
        %v3335 = vmul.f32 %v3319, %v728
        %v3336 = vmul.f32 %v3320, %v728
        %v3337 = vmul.f32 %v3321, %v728
        %v3338 = vmul.f32 %v3322, %v728
        %v3339 = vmul.f32 %v3323, %v728
        %v3340 = vmul.f32 %v3324, %v728
        %v3341 = vmul.f32 %v3325, %v728
        %v3342 = vmul.f32 %v3326, %v728
        %v3343 = vmul.f32 %v3327, %v728
        %v3344 = vmul.f32 %v3328, %v728
        %v3345 = vmul.f32 %v3329, %v728
        %v3346 = vmul.f32 %v3330, %v728
        %v3347 = vsel %vm528, %v3331, 0.0
        %3348 = vadd.xlane.f32.xlu0 %v3347
        %v3349 = vpop.xlane.xlu0 %3348
        %v3350 = vsel %vm528, %v3332, 0.0
        %3351 = vadd.xlane.f32.xlu0 %v3350
        %v3352 = vpop.xlane.xlu0 %3351
        %v3353 = vsel %vm528, %v3333, 0.0
        %3354 = vadd.xlane.f32.xlu0 %v3353
        %v3355 = vpop.xlane.xlu0 %3354
        %v3356 = vsel %vm528, %v3334, 0.0
        %3357 = vadd.xlane.f32.xlu0 %v3356
        %v3358 = vpop.xlane.xlu0 %3357
        %v3359 = vsel %vm528, %v3335, 0.0
        %3360 = vadd.xlane.f32.xlu0 %v3359
        %v3361 = vpop.xlane.xlu0 %3360
        %v3362 = vsel %vm528, %v3336, 0.0
        %3363 = vadd.xlane.f32.xlu0 %v3362
        %v3364 = vpop.xlane.xlu0 %3363
        %v3365 = vsel %vm528, %v3337, 0.0
        %3366 = vadd.xlane.f32.xlu0 %v3365
        %v3367 = vpop.xlane.xlu0 %3366
        %v3368 = vsel %vm528, %v3338, 0.0
        %3369 = vadd.xlane.f32.xlu0 %v3368
        %v3370 = vpop.xlane.xlu0 %3369
        %v3371 = vsel %vm528, %v3339, 0.0
        %3372 = vadd.xlane.f32.xlu0 %v3371
        %v3373 = vpop.xlane.xlu0 %3372
        %v3374 = vsel %vm528, %v3340, 0.0
        %3375 = vadd.xlane.f32.xlu0 %v3374
        %v3376 = vpop.xlane.xlu0 %3375
        %v3377 = vsel %vm528, %v3341, 0.0
        %3378 = vadd.xlane.f32.xlu0 %v3377
        %v3379 = vpop.xlane.xlu0 %3378
        %v3380 = vsel %vm528, %v3342, 0.0
        %3381 = vadd.xlane.f32.xlu0 %v3380
        %v3382 = vpop.xlane.xlu0 %3381
        %v3383 = vsel %vm528, %v3343, 0.0
        %3384 = vadd.xlane.f32.xlu0 %v3383
        %v3385 = vpop.xlane.xlu0 %3384
        %v3386 = vsel %vm528, %v3344, 0.0
        %3387 = vadd.xlane.f32.xlu0 %v3386
        %v3388 = vpop.xlane.xlu0 %3387
        %v3389 = vsel %vm528, %v3345, 0.0
        %3390 = vadd.xlane.f32.xlu0 %v3389
        %v3391 = vpop.xlane.xlu0 %3390
        %v3392 = vsel %vm528, %v3346, 0.0
        %3393 = vadd.xlane.f32.xlu0 %v3392
        %v3394 = vpop.xlane.xlu0 %3393
        %v3411 = vlaneseq
        %v3412 = vshrl.u32 %v3411, 7
        %v3413 = vsub.s32 %v521, %v3412
        %v3414 = vrot.slane %v3349, %v3413
        %v3415 = vlaneseq
        %v3416 = vshrl.u32 %v3415, 7
        %v3417 = vsub.s32 %v814, %v3416
        %v3418 = vrot.slane %v3352, %v3417
        %v3419 = vsel %vm819, %v3418, %v3414
        %v3420 = vlaneseq
        %v3421 = vshrl.u32 %v3420, 7
        %v3422 = vsub.s32 %v521, %v3421
        %v3423 = vrot.slane %v3355, %v3422
        %v3424 = vlaneseq
        %v3425 = vshrl.u32 %v3424, 7
        %v3426 = vsub.s32 %v814, %v3425
        %v3427 = vrot.slane %v3358, %v3426
        %v3428 = vsel %vm819, %v3427, %v3423
        %v3429 = vlaneseq
        %v3430 = vshrl.u32 %v3429, 7
        %v3431 = vsub.s32 %v521, %v3430
        %v3432 = vrot.slane %v3361, %v3431
        %v3433 = vlaneseq
        %v3434 = vshrl.u32 %v3433, 7
        %v3435 = vsub.s32 %v814, %v3434
        %v3436 = vrot.slane %v3364, %v3435
        %v3437 = vsel %vm819, %v3436, %v3432
        %v3438 = vlaneseq
        %v3439 = vshrl.u32 %v3438, 7
        %v3440 = vsub.s32 %v521, %v3439
        %v3441 = vrot.slane %v3367, %v3440
        %v3442 = vlaneseq
        %v3443 = vshrl.u32 %v3442, 7
        %v3444 = vsub.s32 %v814, %v3443
        %v3445 = vrot.slane %v3370, %v3444
        %v3446 = vsel %vm819, %v3445, %v3441
        %v3447 = vlaneseq
        %v3448 = vshrl.u32 %v3447, 7
        %v3449 = vsub.s32 %v521, %v3448
        %v3450 = vrot.slane %v3373, %v3449
        %v3451 = vlaneseq
        %v3452 = vshrl.u32 %v3451, 7
        %v3453 = vsub.s32 %v814, %v3452
        %v3454 = vrot.slane %v3376, %v3453
        %v3455 = vsel %vm819, %v3454, %v3450
        %v3456 = vlaneseq
        %v3457 = vshrl.u32 %v3456, 7
        %v3458 = vsub.s32 %v521, %v3457
        %v3459 = vrot.slane %v3379, %v3458
        %v3460 = vlaneseq
        %v3461 = vshrl.u32 %v3460, 7
        %v3462 = vsub.s32 %v814, %v3461
        %v3463 = vrot.slane %v3382, %v3462
        %v3464 = vsel %vm819, %v3463, %v3459
        %v3465 = vlaneseq
        %v3466 = vshrl.u32 %v3465, 7
        %v3467 = vsub.s32 %v521, %v3466
        %v3468 = vrot.slane %v3385, %v3467
        %v3469 = vlaneseq
        %v3470 = vshrl.u32 %v3469, 7
        %v3471 = vsub.s32 %v814, %v3470
        %v3472 = vrot.slane %v3388, %v3471
        %v3473 = vsel %vm819, %v3472, %v3468
        %v3474 = vlaneseq
        %v3475 = vshrl.u32 %v3474, 7
        %v3476 = vsub.s32 %v521, %v3475
        %v3477 = vrot.slane %v3391, %v3476
        %v3478 = vlaneseq
        %v3479 = vshrl.u32 %v3478, 7
        %v3480 = vsub.s32 %v814, %v3479
        %v3481 = vrot.slane %v3394, %v3480
        %v3482 = vsel %vm819, %v3481, %v3477
        %v3483 = vsel %vm884, %v3428, %v3419
        %v3484 = vsel %vm886, %v3437, %v3483
        %v3485 = vsel %vm888, %v3446, %v3484
        %v3486 = vsel %vm890, %v3455, %v3485
        %v3487 = vsel %vm892, %v3464, %v3486
        %v3488 = vsel %vm894, %v3473, %v3487
        %v3489 = vsel %vm896, %v3482, %v3488
        %v3491 = vsel %vm899, %v3489, -inf
        %3492 = vmax.xlane.f32.xlu0 %v3491
        %v3493 = vpop.xlane.xlu0 %3492
        %v3495 = vlaneseq
        %v3496 = vshrl.u32 %v3495, 7
        %v3497 = vsub.s32 0, %v3496
        %v3498 = vrot.slane %v3493, %v3497
        %v3499 = vlaneseq
        %v3500 = vshrl.u32 %v3499, 7
        %v3501 = vsub.s32 1, %v3500
        %v3502 = vrot.slane %v3493, %v3501
        %v3503 = vlaneseq
        %v3504 = vshrl.u32 %v3503, 7
        %v3505 = vsub.s32 2, %v3504
        %v3506 = vrot.slane %v3493, %v3505
        %v3507 = vlaneseq
        %v3508 = vshrl.u32 %v3507, 7
        %v3509 = vsub.s32 3, %v3508
        %v3510 = vrot.slane %v3493, %v3509
        %v3511 = vlaneseq
        %v3512 = vshrl.u32 %v3511, 7
        %v3513 = vsub.s32 4, %v3512
        %v3514 = vrot.slane %v3493, %v3513
        %v3515 = vlaneseq
        %v3516 = vshrl.u32 %v3515, 7
        %v3517 = vsub.s32 5, %v3516
        %v3518 = vrot.slane %v3493, %v3517
        %v3519 = vlaneseq
        %v3520 = vshrl.u32 %v3519, 7
        %v3521 = vsub.s32 6, %v3520
        %v3522 = vrot.slane %v3493, %v3521
        %v3523 = vlaneseq
        %v3524 = vshrl.u32 %v3523, 7
        %v3525 = vsub.s32 7, %v3524
        %v3526 = vrot.slane %v3493, %v3525
        %v3535 = vsub.f32 %v3349, %v3498
        %v3536 = vsub.f32 %v3352, %v3498
        %v3537 = vsub.f32 %v3355, %v3502
        %v3538 = vsub.f32 %v3358, %v3502
        %v3539 = vsub.f32 %v3361, %v3506
        %v3540 = vsub.f32 %v3364, %v3506
        %v3541 = vsub.f32 %v3367, %v3510
        %v3542 = vsub.f32 %v3370, %v3510
        %v3543 = vsub.f32 %v3373, %v3514
        %v3544 = vsub.f32 %v3376, %v3514
        %v3545 = vsub.f32 %v3379, %v3518
        %v3546 = vsub.f32 %v3382, %v3518
        %v3547 = vsub.f32 %v3385, %v3522
        %v3548 = vsub.f32 %v3388, %v3522
        %v3549 = vsub.f32 %v3391, %v3526
        %v3550 = vsub.f32 %v3394, %v3526
        %v3551 = vmul.f32 %v3535, 1.442695
        %v3552 = vpow.pop %v3551
        %v3553 = vmul.f32 %v3536, 1.442695
        %v3554 = vpow.pop %v3553
        %v3555 = vmul.f32 %v3537, 1.442695
        %v3556 = vpow.pop %v3555
        %v3557 = vmul.f32 %v3538, 1.442695
        %v3558 = vpow.pop %v3557
        %v3559 = vmul.f32 %v3539, 1.442695
        %v3560 = vpow.pop %v3559
        %v3561 = vmul.f32 %v3540, 1.442695
        %v3562 = vpow.pop %v3561
        %v3563 = vmul.f32 %v3541, 1.442695
        %v3564 = vpow.pop %v3563
        %v3565 = vmul.f32 %v3542, 1.442695
        %v3566 = vpow.pop %v3565
        %v3567 = vmul.f32 %v3543, 1.442695
        %v3568 = vpow.pop %v3567
        %v3569 = vmul.f32 %v3544, 1.442695
        %v3570 = vpow.pop %v3569
        %v3571 = vmul.f32 %v3545, 1.442695
        %v3572 = vpow.pop %v3571
        %v3573 = vmul.f32 %v3546, 1.442695
        %v3574 = vpow.pop %v3573
        %v3575 = vmul.f32 %v3547, 1.442695
        %v3576 = vpow.pop %v3575
        %v3577 = vmul.f32 %v3548, 1.442695
        %v3578 = vpow.pop %v3577
        %v3579 = vmul.f32 %v3549, 1.442695
        %v3580 = vpow.pop %v3579
        %v3581 = vmul.f32 %v3550, 1.442695
        %v3582 = vpow.pop %v3581
        %3599 = vset.pattern.permute.xlu0 0
        %3600 = vperm.xlu0 %3599, %v3552
        %v3601 = vpop.permute.xlu0 %3600
        %3602 = vset.pattern.permute.xlu0 0
        %3603 = vperm.xlu0 %3602, %v3554
        %v3604 = vpop.permute.xlu0 %3603
        %3605 = vset.pattern.permute.xlu0 0
        %3606 = vperm.xlu0 %3605, %v3556
        %v3607 = vpop.permute.xlu0 %3606
        %3608 = vset.pattern.permute.xlu0 0
        %3609 = vperm.xlu0 %3608, %v3558
        %v3610 = vpop.permute.xlu0 %3609
        %3611 = vset.pattern.permute.xlu0 0
        %3612 = vperm.xlu0 %3611, %v3560
        %v3613 = vpop.permute.xlu0 %3612
        %3614 = vset.pattern.permute.xlu0 0
        %3615 = vperm.xlu0 %3614, %v3562
        %v3616 = vpop.permute.xlu0 %3615
        %3617 = vset.pattern.permute.xlu0 0
        %3618 = vperm.xlu0 %3617, %v3564
        %v3619 = vpop.permute.xlu0 %3618
        %3620 = vset.pattern.permute.xlu0 0
        %3621 = vperm.xlu0 %3620, %v3566
        %v3622 = vpop.permute.xlu0 %3621
        %3623 = vset.pattern.permute.xlu0 0
        %3624 = vperm.xlu0 %3623, %v3568
        %v3625 = vpop.permute.xlu0 %3624
        %3626 = vset.pattern.permute.xlu0 0
        %3627 = vperm.xlu0 %3626, %v3570
        %v3628 = vpop.permute.xlu0 %3627
        %3629 = vset.pattern.permute.xlu0 0
        %3630 = vperm.xlu0 %3629, %v3572
        %v3631 = vpop.permute.xlu0 %3630
        %3632 = vset.pattern.permute.xlu0 0
        %3633 = vperm.xlu0 %3632, %v3574
        %v3634 = vpop.permute.xlu0 %3633
        %3635 = vset.pattern.permute.xlu0 0
        %3636 = vperm.xlu0 %3635, %v3576
        %v3637 = vpop.permute.xlu0 %3636
        %3638 = vset.pattern.permute.xlu0 0
        %3639 = vperm.xlu0 %3638, %v3578
        %v3640 = vpop.permute.xlu0 %3639
        %3641 = vset.pattern.permute.xlu0 0
        %3642 = vperm.xlu0 %3641, %v3580
        %v3643 = vpop.permute.xlu0 %3642
        %3644 = vset.pattern.permute.xlu0 0
        %3645 = vperm.xlu0 %3644, %v3582
        %v3646 = vpop.permute.xlu0 %3645
        %v3647 = vlaneseq
        %v3648 = vshrl.u32 %v3647, 7
        %v3649 = vsub.s32 %v521, %v3648
        %v3650 = vrot.slane %v3601, %v3649
        %v3651 = vlaneseq
        %v3652 = vshrl.u32 %v3651, 7
        %v3653 = vsub.s32 %v814, %v3652
        %v3654 = vrot.slane %v3604, %v3653
        %v3655 = vsel %vm819, %v3654, %v3650
        %v3656 = vlaneseq
        %v3657 = vshrl.u32 %v3656, 7
        %v3658 = vsub.s32 %v521, %v3657
        %v3659 = vrot.slane %v3607, %v3658
        %v3660 = vlaneseq
        %v3661 = vshrl.u32 %v3660, 7
        %v3662 = vsub.s32 %v814, %v3661
        %v3663 = vrot.slane %v3610, %v3662
        %v3664 = vsel %vm819, %v3663, %v3659
        %v3665 = vlaneseq
        %v3666 = vshrl.u32 %v3665, 7
        %v3667 = vsub.s32 %v521, %v3666
        %v3668 = vrot.slane %v3613, %v3667
        %v3669 = vlaneseq
        %v3670 = vshrl.u32 %v3669, 7
        %v3671 = vsub.s32 %v814, %v3670
        %v3672 = vrot.slane %v3616, %v3671
        %v3673 = vsel %vm819, %v3672, %v3668
        %v3674 = vlaneseq
        %v3675 = vshrl.u32 %v3674, 7
        %v3676 = vsub.s32 %v521, %v3675
        %v3677 = vrot.slane %v3619, %v3676
        %v3678 = vlaneseq
        %v3679 = vshrl.u32 %v3678, 7
        %v3680 = vsub.s32 %v814, %v3679
        %v3681 = vrot.slane %v3622, %v3680
        %v3682 = vsel %vm819, %v3681, %v3677
        %v3683 = vlaneseq
        %v3684 = vshrl.u32 %v3683, 7
        %v3685 = vsub.s32 %v521, %v3684
        %v3686 = vrot.slane %v3625, %v3685
        %v3687 = vlaneseq
        %v3688 = vshrl.u32 %v3687, 7
        %v3689 = vsub.s32 %v814, %v3688
        %v3690 = vrot.slane %v3628, %v3689
        %v3691 = vsel %vm819, %v3690, %v3686
        %v3692 = vlaneseq
        %v3693 = vshrl.u32 %v3692, 7
        %v3694 = vsub.s32 %v521, %v3693
        %v3695 = vrot.slane %v3631, %v3694
        %v3696 = vlaneseq
        %v3697 = vshrl.u32 %v3696, 7
        %v3698 = vsub.s32 %v814, %v3697
        %v3699 = vrot.slane %v3634, %v3698
        %v3700 = vsel %vm819, %v3699, %v3695
        %v3701 = vlaneseq
        %v3702 = vshrl.u32 %v3701, 7
        %v3703 = vsub.s32 %v521, %v3702
        %v3704 = vrot.slane %v3637, %v3703
        %v3705 = vlaneseq
        %v3706 = vshrl.u32 %v3705, 7
        %v3707 = vsub.s32 %v814, %v3706
        %v3708 = vrot.slane %v3640, %v3707
        %v3709 = vsel %vm819, %v3708, %v3704
        %v3710 = vlaneseq
        %v3711 = vshrl.u32 %v3710, 7
        %v3712 = vsub.s32 %v521, %v3711
        %v3713 = vrot.slane %v3643, %v3712
        %v3714 = vlaneseq
        %v3715 = vshrl.u32 %v3714, 7
        %v3716 = vsub.s32 %v814, %v3715
        %v3717 = vrot.slane %v3646, %v3716
        %v3718 = vsel %vm819, %v3717, %v3713
        %v3719 = vsel %vm884, %v3664, %v3655
        %v3720 = vsel %vm886, %v3673, %v3719
        %v3721 = vsel %vm888, %v3682, %v3720
        %v3722 = vsel %vm890, %v3691, %v3721
        %v3723 = vsel %vm892, %v3700, %v3722
        %v3724 = vsel %vm894, %v3709, %v3723
        %v3725 = vsel %vm896, %v3718, %v3724
        %v3727 = vsel %vm899, %v3725, 0.0
        %3728 = vadd.xlane.f32.xlu0 %v3727
        %v3729 = vpop.xlane.xlu0 %3728
        %v3730 = vrcp.pop %v3729
        %v3731 = vmul.f32 %v3729, %v3730
        %v3732 = vsub.f32 2.0, %v3731
        %v3733 = vmul.f32 %v3730, %v3732
        %v3735 = vlaneseq
        %v3736 = vshrl.u32 %v3735, 7
        %v3737 = vsub.s32 0, %v3736
        %v3738 = vrot.slane %v3733, %v3737
        %v3739 = vlaneseq
        %v3740 = vshrl.u32 %v3739, 7
        %v3741 = vsub.s32 1, %v3740
        %v3742 = vrot.slane %v3733, %v3741
        %v3743 = vlaneseq
        %v3744 = vshrl.u32 %v3743, 7
        %v3745 = vsub.s32 2, %v3744
        %v3746 = vrot.slane %v3733, %v3745
        %v3747 = vlaneseq
        %v3748 = vshrl.u32 %v3747, 7
        %v3749 = vsub.s32 3, %v3748
        %v3750 = vrot.slane %v3733, %v3749
        %v3751 = vlaneseq
        %v3752 = vshrl.u32 %v3751, 7
        %v3753 = vsub.s32 4, %v3752
        %v3754 = vrot.slane %v3733, %v3753
        %v3755 = vlaneseq
        %v3756 = vshrl.u32 %v3755, 7
        %v3757 = vsub.s32 5, %v3756
        %v3758 = vrot.slane %v3733, %v3757
        %v3759 = vlaneseq
        %v3760 = vshrl.u32 %v3759, 7
        %v3761 = vsub.s32 6, %v3760
        %v3762 = vrot.slane %v3733, %v3761
        %v3763 = vlaneseq
        %v3764 = vshrl.u32 %v3763, 7
        %v3765 = vsub.s32 7, %v3764
        %v3766 = vrot.slane %v3733, %v3765
        %v3775 = vmul.f32 %v3552, %v3738
        %v3776 = vmul.f32 %v3554, %v3738
        %v3777 = vmul.f32 %v3556, %v3742
        %v3778 = vmul.f32 %v3558, %v3742
        %v3779 = vmul.f32 %v3560, %v3746
        %v3780 = vmul.f32 %v3562, %v3746
        %v3781 = vmul.f32 %v3564, %v3750
        %v3782 = vmul.f32 %v3566, %v3750
        %v3783 = vmul.f32 %v3568, %v3754
        %v3784 = vmul.f32 %v3570, %v3754
        %v3785 = vmul.f32 %v3572, %v3758
        %v3786 = vmul.f32 %v3574, %v3758
        %v3787 = vmul.f32 %v3576, %v3762
        %v3788 = vmul.f32 %v3578, %v3762
        %v3789 = vmul.f32 %v3580, %v3766
        %v3790 = vmul.f32 %v3582, %v3766
        %3792 = vset.pattern.permute.xlu0 0
        %3793 = vperm.xlu0 %3792, %v3775
        %v3794 = vpop.permute.xlu0 %3793
        %3797 = vset.pattern.permute.xlu0 0
        %3798 = vperm.xlu0 %3797, %v3776
        %v3799 = vpop.permute.xlu0 %3798
        %3802 = vset.pattern.permute.xlu0 0
        %3803 = vperm.xlu0 %3802, %v3777
        %v3804 = vpop.permute.xlu0 %3803
        %3807 = vset.pattern.permute.xlu0 0
        %3808 = vperm.xlu0 %3807, %v3778
        %v3809 = vpop.permute.xlu0 %3808
        %3812 = vset.pattern.permute.xlu0 0
        %3813 = vperm.xlu0 %3812, %v3779
        %v3814 = vpop.permute.xlu0 %3813
        %3817 = vset.pattern.permute.xlu0 0
        %3818 = vperm.xlu0 %3817, %v3780
        %v3819 = vpop.permute.xlu0 %3818
        %3822 = vset.pattern.permute.xlu0 0
        %3823 = vperm.xlu0 %3822, %v3781
        %v3824 = vpop.permute.xlu0 %3823
        %3827 = vset.pattern.permute.xlu0 0
        %3828 = vperm.xlu0 %3827, %v3782
        %v3829 = vpop.permute.xlu0 %3828
        %3832 = vset.pattern.permute.xlu0 0
        %3833 = vperm.xlu0 %3832, %v3783
        %v3834 = vpop.permute.xlu0 %3833
        %3837 = vset.pattern.permute.xlu0 0
        %3838 = vperm.xlu0 %3837, %v3784
        %v3839 = vpop.permute.xlu0 %3838
        %3842 = vset.pattern.permute.xlu0 0
        %3843 = vperm.xlu0 %3842, %v3785
        %v3844 = vpop.permute.xlu0 %3843
        %3847 = vset.pattern.permute.xlu0 0
        %3848 = vperm.xlu0 %3847, %v3786
        %v3849 = vpop.permute.xlu0 %3848
        %3852 = vset.pattern.permute.xlu0 0
        %3853 = vperm.xlu0 %3852, %v3787
        %v3854 = vpop.permute.xlu0 %3853
        %3857 = vset.pattern.permute.xlu0 0
        %3858 = vperm.xlu0 %3857, %v3788
        %v3859 = vpop.permute.xlu0 %3858
        %3862 = vset.pattern.permute.xlu0 0
        %3863 = vperm.xlu0 %3862, %v3789
        %v3864 = vpop.permute.xlu0 %3863
        %3867 = vset.pattern.permute.xlu0 0
        %3868 = vperm.xlu0 %3867, %v3790
        %v3869 = vpop.permute.xlu0 %3868
        %v3871 = vmul.f32 %v3794, %v387
        %v3872 = vmul.f32 %v3799, %v388
        %v3873 = vmul.f32 %v3804, %v389
        %v3874 = vmul.f32 %v3809, %v390
        %v3875 = vmul.f32 %v3814, %v391
        %v3876 = vmul.f32 %v3819, %v392
        %v3877 = vmul.f32 %v3824, %v393
        %v3878 = vmul.f32 %v3829, %v394
        %v3879 = vmul.f32 %v3834, %v395
        %v3880 = vmul.f32 %v3839, %v396
        %v3881 = vmul.f32 %v3844, %v397
        %v3882 = vmul.f32 %v3849, %v398
        %v3883 = vmul.f32 %v3854, %v399
        %v3884 = vmul.f32 %v3859, %v400
        %v3885 = vmul.f32 %v3864, %v401
        %v3886 = vmul.f32 %v3869, %v402
        %v3887 = vsel %vm1296, %v3871, 0.0
        %v3888 = vsel %vm1296, %v3872, 0.0
        %v3889 = vadd.f32 %v3887, %v3888
        %v3890 = vrot.slane %v3889, 4
        %v3891 = vadd.f32 %v3889, %v3890
        %v3892 = vrot.slane %v3891, 2
        %v3893 = vadd.f32 %v3891, %v3892
        %v3894 = vrot.slane %v3893, 1
        %v3895 = vadd.f32 %v3893, %v3894
        %v3896 = vsel %vm1296, %v3873, 0.0
        %v3897 = vsel %vm1296, %v3874, 0.0
        %v3898 = vadd.f32 %v3896, %v3897
        %v3899 = vrot.slane %v3898, 4
        %v3900 = vadd.f32 %v3898, %v3899
        %v3901 = vrot.slane %v3900, 2
        %v3902 = vadd.f32 %v3900, %v3901
        %v3903 = vrot.slane %v3902, 1
        %v3904 = vadd.f32 %v3902, %v3903
        %v3905 = vsel %vm1296, %v3875, 0.0
        %v3906 = vsel %vm1296, %v3876, 0.0
        %v3907 = vadd.f32 %v3905, %v3906
        %v3908 = vrot.slane %v3907, 4
        %v3909 = vadd.f32 %v3907, %v3908
        %v3910 = vrot.slane %v3909, 2
        %v3911 = vadd.f32 %v3909, %v3910
        %v3912 = vrot.slane %v3911, 1
        %v3913 = vadd.f32 %v3911, %v3912
        %v3914 = vsel %vm1296, %v3877, 0.0
        %v3915 = vsel %vm1296, %v3878, 0.0
        %v3916 = vadd.f32 %v3914, %v3915
        %v3917 = vrot.slane %v3916, 4
        %v3918 = vadd.f32 %v3916, %v3917
        %v3919 = vrot.slane %v3918, 2
        %v3920 = vadd.f32 %v3918, %v3919
        %v3921 = vrot.slane %v3920, 1
        %v3922 = vadd.f32 %v3920, %v3921
        %v3923 = vsel %vm1296, %v3879, 0.0
        %v3924 = vsel %vm1296, %v3880, 0.0
        %v3925 = vadd.f32 %v3923, %v3924
        %v3926 = vrot.slane %v3925, 4
        %v3927 = vadd.f32 %v3925, %v3926
        %v3928 = vrot.slane %v3927, 2
        %v3929 = vadd.f32 %v3927, %v3928
        %v3930 = vrot.slane %v3929, 1
        %v3931 = vadd.f32 %v3929, %v3930
        %v3932 = vsel %vm1296, %v3881, 0.0
        %v3933 = vsel %vm1296, %v3882, 0.0
        %v3934 = vadd.f32 %v3932, %v3933
        %v3935 = vrot.slane %v3934, 4
        %v3936 = vadd.f32 %v3934, %v3935
        %v3937 = vrot.slane %v3936, 2
        %v3938 = vadd.f32 %v3936, %v3937
        %v3939 = vrot.slane %v3938, 1
        %v3940 = vadd.f32 %v3938, %v3939
        %v3941 = vsel %vm1296, %v3883, 0.0
        %v3942 = vsel %vm1296, %v3884, 0.0
        %v3943 = vadd.f32 %v3941, %v3942
        %v3944 = vrot.slane %v3943, 4
        %v3945 = vadd.f32 %v3943, %v3944
        %v3946 = vrot.slane %v3945, 2
        %v3947 = vadd.f32 %v3945, %v3946
        %v3948 = vrot.slane %v3947, 1
        %v3949 = vadd.f32 %v3947, %v3948
        %v3950 = vsel %vm1296, %v3885, 0.0
        %v3951 = vsel %vm1296, %v3886, 0.0
        %v3952 = vadd.f32 %v3950, %v3951
        %v3953 = vrot.slane %v3952, 4
        %v3954 = vadd.f32 %v3952, %v3953
        %v3955 = vrot.slane %v3954, 2
        %v3956 = vadd.f32 %v3954, %v3955
        %v3957 = vrot.slane %v3956, 1
        %v3958 = vadd.f32 %v3956, %v3957
        %v3967 = vsel %vm884, %v3904, %v3895
        %v3968 = vsel %vm886, %v3913, %v3967
        %v3969 = vsel %vm888, %v3922, %v3968
        %v3970 = vsel %vm890, %v3931, %v3969
        %v3971 = vsel %vm892, %v3940, %v3970
        %v3972 = vsel %vm894, %v3949, %v3971
        %v3973 = vsel %vm896, %v3958, %v3972
        %3976 = vrot.lane.b32.xlu0 %v3136, 64
        %v3977 = vpop.permute.xlu0 %3976
        %3979 = vrot.lane.b32.xlu0 %v2799, 112
        %v3980 = vpop.permute.xlu0 %3979
        %v3982 = vsel %vm1296, %v3973, %v3977
        %v3983 = vsel %vm1393, %v3982, %v3980
        %v3985 = vsel %vm1395, %v3983, 0
        %3987 = vmatprep.subr.mxu0 0.0
        %3988 = vmatpush1.msra.mxu0 %v484
        %3989 = vmatprep.subr.mxu0 0.0
        %3990 = vmatpush1.msra.mxu0 %v485
        %3991 = vmatprep.subr.mxu0 0.0
        %3992 = vmatpush1.msra.mxu0 %v486
        %3993 = vmatprep.subr.mxu0 0.0
        %3994 = vmatpush1.msra.mxu0 %v487
        %3995 = vmatprep.subr.mxu0 0.0
        %3996 = vmatpush1.msra.mxu0 %v488
        %3997 = vmatprep.subr.mxu0 0.0
        %3998 = vmatpush1.msra.mxu0 %v489
        %3999 = vmatprep.subr.mxu0 0.0
        %4000 = vmatpush1.msra.mxu0 %v490
        %4001 = vmatprep.subr.mxu0 0.0
        %4002 = vmatpush1.msra.mxu0 %v491
        %4003 = vmatprep.subr.mxu0 0.0
        %4004 = vmatpush1.msra.mxu0 %v492
        %4005 = vmatprep.subr.mxu0 0.0
        %4006 = vmatpush1.msra.mxu0 %v493
        %4007 = vmatprep.subr.mxu0 0.0
        %4008 = vmatpush1.msra.mxu0 %v494
        %4009 = vmatprep.subr.mxu0 0.0
        %4010 = vmatpush1.msra.mxu0 %v495
        %4011 = vmatprep.subr.mxu0 0.0
        %4012 = vmatpush1.msra.mxu0 %v496
        %4013 = vmatprep.subr.mxu0 0.0
        %4014 = vmatpush1.msra.mxu0 %v497
        %4015 = vmatprep.subr.mxu0 0.0
        %4016 = vmatpush1.msra.mxu0 0.0
        %4017 = vmatprep.subr.mxu0 0.0
        %4018 = vmatpush1.msra.mxu0 0.0
        %4019 = vmatprep.subr.mxu0 0.0
        %4020 = vmatpush1.msra.mxu0 0.0
        %4021 = vmatprep.subr.mxu0 0.0
        %4022 = vmatpush1.msra.mxu0 0.0
        %4023 = vmatprep.subr.mxu0 0.0
        %4024 = vmatpush1.msra.mxu0 0.0
        %4025 = vmatprep.subr.mxu0 0.0
        %4026 = vmatpush1.msra.mxu0 0.0
        %4027 = vmatprep.subr.mxu0 0.0
        %4028 = vmatpush1.msra.mxu0 0.0
        %4029 = vmatprep.subr.mxu0 0.0
        %4030 = vmatpush1.msra.mxu0 0.0
        %4031 = vmatprep.subr.mxu0 0.0
        %4032 = vmatpush1.msra.mxu0 0.0
        %4033 = vmatprep.subr.mxu0 0.0
        %4034 = vmatpush1.msra.mxu0 0.0
        %4035 = vmatprep.subr.mxu0 0.0
        %4036 = vmatpush1.msra.mxu0 0.0
        %4037 = vmatprep.subr.mxu0 0.0
        %4038 = vmatpush1.msra.mxu0 0.0
        %4039 = vmatprep.subr.mxu0 0.0
        %4040 = vmatpush1.msra.mxu0 0.0
        %4041 = vmatprep.subr.mxu0 0.0
        %4042 = vmatpush1.msra.mxu0 0.0
        %4043 = vmatprep.subr.mxu0 0.0
        %4044 = vmatpush1.msra.mxu0 0.0
        %4045 = vmatprep.subr.mxu0 0.0
        %4046 = vmatpush1.msra.mxu0 0.0
        %4047 = vmatprep.subr.mxu0 0.0
        %4048 = vmatpush1.msra.mxu0 0.0
        %4049 = vmatprep.subr.mxu0 0.0
        %4050 = vmatpush1.msra.mxu0 0.0
        %4051 = vmatprep.mubr.f32.mxu0 0.0
        %4052 = vmatmul.mubr.f32.gmra.mrb[0].mxu0 %v3985
        %v4053 = vpop.f32.mrb[0].mxu0
        %v4054 = vadd.f32 0.0, %v4053
        %v4055 = vpop.f32.mrb[0].mxu0
        %4056 = vdwg.mxu0
        %v4057 = vadd.f32 %v419, %v4054
        %v4058 = vxor.u32 %v4057, 2147483648
        %v4059 = vmul.f32 %v4058, 1.442695
        %v4060 = vpow.pop %v4059
        %v4061 = vadd.f32 %v4060, 1.0
        %v4062 = vrcp.pop %v4061
        %v4063 = vmul.f32 1.0, %v4062
        %v4064 = vtanh.pop %v4057
        %v4065 = vmul.f32 %v4063, %v2793
        %4067 = vrot.lane.b32.xlu0 %v4064, 64
        %v4068 = vpop.permute.xlu0 %4067
        %v4070 = vmul.f32 %v4063, %v4068
        %4072 = vrot.lane.b32.xlu0 %v4070, 32
        %v4073 = vpop.permute.xlu0 %4072
        %v4075 = vadd.f32 %v4065, %v4073
        %v4076 = vtanh.pop %v4075
        %4078 = vrot.lane.b32.xlu0 %v4076, 64
        %v4079 = vpop.permute.xlu0 %4078
        %v4081 = vmul.f32 %v4063, %v4079
        %4083 = vrot.lane.b32.xlu0 %v4081, 32
        %v4084 = vpop.permute.xlu0 %4083
        %v4085 = vsel %vm528, %v4084, 0
        %4087 = vmatprep.subr.mxu0 %v504
        %4088 = vmatpush1.msra.mxu0 %v503
        %4089 = vmatprep.subr.mxu0 %v508
        %4090 = vmatpush1.msra.mxu0 %v507
        %4091 = vmatprep.subr.mxu0 %v512
        %4092 = vmatpush1.msra.mxu0 %v511
        %4093 = vmatprep.subr.mxu0 %v516
        %4094 = vmatpush1.msra.mxu0 %v515
        %4095 = vmatprep.subr.mxu0 0.0
        %4096 = vmatpush1.msra.mxu0 0.0
        %4097 = vmatprep.subr.mxu0 0.0
        %4098 = vmatpush1.msra.mxu0 0.0
        %4099 = vmatprep.subr.mxu0 0.0
        %4100 = vmatpush1.msra.mxu0 0.0
        %4101 = vmatprep.subr.mxu0 0.0
        %4102 = vmatpush1.msra.mxu0 0.0
        %4103 = vmatprep.subr.mxu0 0.0
        %4104 = vmatpush1.msra.mxu0 0.0
        %4105 = vmatprep.subr.mxu0 0.0
        %4106 = vmatpush1.msra.mxu0 0.0
        %4107 = vmatprep.subr.mxu0 0.0
        %4108 = vmatpush1.msra.mxu0 0.0
        %4109 = vmatprep.subr.mxu0 0.0
        %4110 = vmatpush1.msra.mxu0 0.0
        %4111 = vmatprep.subr.mxu0 0.0
        %4112 = vmatpush1.msra.mxu0 0.0
        %4113 = vmatprep.subr.mxu0 0.0
        %4114 = vmatpush1.msra.mxu0 0.0
        %4115 = vmatprep.subr.mxu0 0.0
        %4116 = vmatpush1.msra.mxu0 0.0
        %4117 = vmatprep.subr.mxu0 0.0
        %4118 = vmatpush1.msra.mxu0 0.0
        %4119 = vmatprep.subr.mxu0 0.0
        %4120 = vmatpush1.msra.mxu0 0.0
        %4121 = vmatprep.subr.mxu0 0.0
        %4122 = vmatpush1.msra.mxu0 0.0
        %4123 = vmatprep.subr.mxu0 0.0
        %4124 = vmatpush1.msra.mxu0 0.0
        %4125 = vmatprep.subr.mxu0 0.0
        %4126 = vmatpush1.msra.mxu0 0.0
        %4127 = vmatprep.subr.mxu0 0.0
        %4128 = vmatpush1.msra.mxu0 0.0
        %4129 = vmatprep.subr.mxu0 0.0
        %4130 = vmatpush1.msra.mxu0 0.0
        %4131 = vmatprep.subr.mxu0 0.0
        %4132 = vmatpush1.msra.mxu0 0.0
        %4133 = vmatprep.subr.mxu0 0.0
        %4134 = vmatpush1.msra.mxu0 0.0
        %4135 = vmatprep.subr.mxu0 0.0
        %4136 = vmatpush1.msra.mxu0 0.0
        %4137 = vmatprep.subr.mxu0 0.0
        %4138 = vmatpush1.msra.mxu0 0.0
        %4139 = vmatprep.subr.mxu0 0.0
        %4140 = vmatpush1.msra.mxu0 0.0
        %4141 = vmatprep.subr.mxu0 0.0
        %4142 = vmatpush1.msra.mxu0 0.0
        %4143 = vmatprep.subr.mxu0 0.0
        %4144 = vmatpush1.msra.mxu0 0.0
        %4145 = vmatprep.subr.mxu0 0.0
        %4146 = vmatpush1.msra.mxu0 0.0
        %4147 = vmatprep.subr.mxu0 0.0
        %4148 = vmatpush1.msra.mxu0 0.0
        %4149 = vmatprep.subr.mxu0 0.0
        %4150 = vmatpush1.msra.mxu0 0.0
        %4151 = vmatprep.mubr.f32.mxu0 0.0
        %4152 = vmatmul.mubr.f32.gmra.mrb[0].mxu0 %v4085
        %v4153 = vpop.f32.mrb[0].mxu0
        %v4154 = vadd.f32 %v1502, %v4153
        %v4155 = vpop.f32.mrb[0].mxu0
        %v4156 = vadd.f32 %v1506, %v4155
        %4157 = vdwg.mxu0
        %4158 = vmatprep.subr.mxu0 %v506
        %4159 = vmatpush1.msra.mxu0 %v505
        %4160 = vmatprep.subr.mxu0 %v510
        %4161 = vmatpush1.msra.mxu0 %v509
        %4162 = vmatprep.subr.mxu0 %v514
        %4163 = vmatpush1.msra.mxu0 %v513
        %4164 = vmatprep.subr.mxu0 %v518
        %4165 = vmatpush1.msra.mxu0 %v517
        %4166 = vmatprep.subr.mxu0 0.0
        %4167 = vmatpush1.msra.mxu0 0.0
        %4168 = vmatprep.subr.mxu0 0.0
        %4169 = vmatpush1.msra.mxu0 0.0
        %4170 = vmatprep.subr.mxu0 0.0
        %4171 = vmatpush1.msra.mxu0 0.0
        %4172 = vmatprep.subr.mxu0 0.0
        %4173 = vmatpush1.msra.mxu0 0.0
        %4174 = vmatprep.subr.mxu0 0.0
        %4175 = vmatpush1.msra.mxu0 0.0
        %4176 = vmatprep.subr.mxu0 0.0
        %4177 = vmatpush1.msra.mxu0 0.0
        %4178 = vmatprep.subr.mxu0 0.0
        %4179 = vmatpush1.msra.mxu0 0.0
        %4180 = vmatprep.subr.mxu0 0.0
        %4181 = vmatpush1.msra.mxu0 0.0
        %4182 = vmatprep.subr.mxu0 0.0
        %4183 = vmatpush1.msra.mxu0 0.0
        %4184 = vmatprep.subr.mxu0 0.0
        %4185 = vmatpush1.msra.mxu0 0.0
        %4186 = vmatprep.subr.mxu0 0.0
        %4187 = vmatpush1.msra.mxu0 0.0
        %4188 = vmatprep.subr.mxu0 0.0
        %4189 = vmatpush1.msra.mxu0 0.0
        %4190 = vmatprep.subr.mxu0 0.0
        %4191 = vmatpush1.msra.mxu0 0.0
        %4192 = vmatprep.subr.mxu0 0.0
        %4193 = vmatpush1.msra.mxu0 0.0
        %4194 = vmatprep.subr.mxu0 0.0
        %4195 = vmatpush1.msra.mxu0 0.0
        %4196 = vmatprep.subr.mxu0 0.0
        %4197 = vmatpush1.msra.mxu0 0.0
        %4198 = vmatprep.subr.mxu0 0.0
        %4199 = vmatpush1.msra.mxu0 0.0
        %4200 = vmatprep.subr.mxu0 0.0
        %4201 = vmatpush1.msra.mxu0 0.0
        %4202 = vmatprep.subr.mxu0 0.0
        %4203 = vmatpush1.msra.mxu0 0.0
        %4204 = vmatprep.subr.mxu0 0.0
        %4205 = vmatpush1.msra.mxu0 0.0
        %4206 = vmatprep.subr.mxu0 0.0
        %4207 = vmatpush1.msra.mxu0 0.0
        %4208 = vmatprep.subr.mxu0 0.0
        %4209 = vmatpush1.msra.mxu0 0.0
        %4210 = vmatprep.subr.mxu0 0.0
        %4211 = vmatpush1.msra.mxu0 0.0
        %4212 = vmatprep.subr.mxu0 0.0
        %4213 = vmatpush1.msra.mxu0 0.0
        %4214 = vmatprep.subr.mxu0 0.0
        %4215 = vmatpush1.msra.mxu0 0.0
        %4216 = vmatprep.subr.mxu0 0.0
        %4217 = vmatpush1.msra.mxu0 0.0
        %4218 = vmatprep.subr.mxu0 0.0
        %4219 = vmatpush1.msra.mxu0 0.0
        %4220 = vmatprep.subr.mxu0 0.0
        %4221 = vmatpush1.msra.mxu0 0.0
        %4222 = vmatprep.mubr.f32.mxu0 0.0
        %4223 = vmatmul.mubr.f32.gmra.mrb[0].mxu0 %v4085
        %v4224 = vpop.f32.mrb[0].mxu0
        %v4225 = vadd.f32 %v1510, %v4224
        %v4226 = vpop.f32.mrb[0].mxu0
        %v4227 = vadd.f32 %v1514, %v4226
        %4228 = vdwg.mxu0
        %s4229 = scalar_lea.vmem %s365, 64 [#allocation5]
        %4230 = vst [vmem:[%s4229] sm:$0xff] %v4154
        %4231 = vst [vmem:[%s4229 + $0x8] sm:$0xff] %v4156
        %4232 = vst [vmem:[%s4229 + $0x10] sm:$0xff] %v4225
        %4233 = vst [vmem:[%s4229 + $0x18] sm:$0xff] %v4227
        %v4234 = vmax.f32 %v4154, %v4156
        %v4235 = vmax.f32 %v4225, %v4227
        %v4236 = vmax.f32 %v4234, %v4235
        %4237 = vmax.xlane.f32.xlu0 %v4236
        %v4238 = vpop.xlane.xlu0 %4237
        %vm4239 = vcmp.eq.f32.partialorder %v4154, %v4238
        %vm4240 = vcmp.eq.f32.partialorder %v4156, %v4238
        %vm4241 = vcmp.eq.f32.partialorder %v4225, %v4238
        %vm4242 = vcmp.eq.f32.partialorder %v4227, %v4238
        %v4243 = vsel %vm4239, %v521, 512
        %v4244 = vsel %vm4240, %v522, 512
        %v4245 = vsel %vm4241, %v523, 512
        %v4246 = vsel %vm4242, %v524, 512
        %vm4247 = vcmp.lt.s32.totalorder %v4243, %v4244
        %v4248 = vsel %vm4247, %v4243, %v4244
        %vm4249 = vcmp.lt.s32.totalorder %v4245, %v4246
        %v4250 = vsel %vm4249, %v4245, %v4246
        %vm4251 = vcmp.lt.s32.totalorder %v4248, %v4250
        %v4252 = vsel %vm4251, %v4248, %v4250
        %v4253 = vand.u32 %v4252, 65535
        %v4254 = vshra.s32 %v4252, 16
        %v4255 = vcvt.s32.f32 %v4253
        %v4256 = vcvt.s32.f32 %v4254
        %4257 = vmin.xlane.f32.xlu0 %v4256
        %v4258 = vpop.xlane.xlu0 %4257
        %vm4259 = vcmp.eq.f32.partialorder %v4256, %v4258
        %v4260 = vsel %vm4259, %v4255, inf
        %4261 = vmin.xlane.f32.xlu0 %v4260
        %v4262 = vpop.xlane.xlu0 %4261
        %v4263 = vcvt.f32.s32 %v4262
        %v4264 = vcvt.f32.s32 %v4258
        %v4265 = vshll.u32 %v4264, 16
        %v4266 = vadd.s32 %v4265, %v4263
        %vm4267 = vcmp.eq.s32.totalorder %v521, 2
        %v4268 = vsel %vm4267, %v4266, %v2986
        %vm4269 = vcmp.eq.s32.totalorder %v521, %v4266
        %vm4270 = vcmp.eq.s32.totalorder %v522, %v4266
        %vm4271 = vcmp.eq.s32.totalorder %v523, %v4266
        %vm4272 = vcmp.eq.s32.totalorder %v524, %v4266
        %v4273 = vsel %vm4269, 1, 0
        %v4274 = vsel %vm4270, 1, 0
        %v4275 = vsel %vm4271, 1, 0
        %v4276 = vsel %vm4272, 1, 0
        %v4277 = vcvt.s32.f32 %v4273
        %v4278 = vcvt.s32.f32 %v4274
        %v4279 = vcvt.s32.f32 %v4275
        %v4280 = vcvt.s32.f32 %v4276
        %4281 = vmatprep.subr.mxu0 0.0
        %4282 = vmatpush1.msra.mxu0 %v420
        %4283 = vmatprep.subr.mxu0 0.0
        %4284 = vmatpush1.msra.mxu0 %v421
        %4285 = vmatprep.subr.mxu0 0.0
        %4286 = vmatpush1.msra.mxu0 %v422
        %4287 = vmatprep.subr.mxu0 0.0
        %4288 = vmatpush1.msra.mxu0 %v423
        %4289 = vmatprep.subr.mxu0 0.0
        %4290 = vmatpush1.msra.mxu0 %v424
        %4291 = vmatprep.subr.mxu0 0.0
        %4292 = vmatpush1.msra.mxu0 %v425
        %4293 = vmatprep.subr.mxu0 0.0
        %4294 = vmatpush1.msra.mxu0 %v426
        %4295 = vmatprep.subr.mxu0 0.0
        %4296 = vmatpush1.msra.mxu0 %v427
        %4297 = vmatprep.subr.mxu0 0.0
        %4298 = vmatpush1.msra.mxu0 %v428
        %4299 = vmatprep.subr.mxu0 0.0
        %4300 = vmatpush1.msra.mxu0 %v429
        %4301 = vmatprep.subr.mxu0 0.0
        %4302 = vmatpush1.msra.mxu0 %v430
        %4303 = vmatprep.subr.mxu0 0.0
        %4304 = vmatpush1.msra.mxu0 %v431
        %4305 = vmatprep.subr.mxu0 0.0
        %4306 = vmatpush1.msra.mxu0 %v432
        %4307 = vmatprep.subr.mxu0 0.0
        %4308 = vmatpush1.msra.mxu0 %v433
        %4309 = vmatprep.subr.mxu0 0.0
        %4310 = vmatpush1.msra.mxu0 %v434
        %4311 = vmatprep.subr.mxu0 0.0
        %4312 = vmatpush1.msra.mxu0 %v435
        %4313 = vmatprep.subr.mxu0 0.0
        %4314 = vmatpush1.msra.mxu0 %v436
        %4315 = vmatprep.subr.mxu0 0.0
        %4316 = vmatpush1.msra.mxu0 %v437
        %4317 = vmatprep.subr.mxu0 0.0
        %4318 = vmatpush1.msra.mxu0 %v438
        %4319 = vmatprep.subr.mxu0 0.0
        %4320 = vmatpush1.msra.mxu0 %v439
        %4321 = vmatprep.subr.mxu0 0.0
        %4322 = vmatpush1.msra.mxu0 %v440
        %4323 = vmatprep.subr.mxu0 0.0
        %4324 = vmatpush1.msra.mxu0 %v441
        %4325 = vmatprep.subr.mxu0 0.0
        %4326 = vmatpush1.msra.mxu0 %v442
        %4327 = vmatprep.subr.mxu0 0.0
        %4328 = vmatpush1.msra.mxu0 %v443
        %4329 = vmatprep.subr.mxu0 0.0
        %4330 = vmatpush1.msra.mxu0 %v444
        %4331 = vmatprep.subr.mxu0 0.0
        %4332 = vmatpush1.msra.mxu0 %v445
        %4333 = vmatprep.subr.mxu0 0.0
        %4334 = vmatpush1.msra.mxu0 %v446
        %4335 = vmatprep.subr.mxu0 0.0
        %4336 = vmatpush1.msra.mxu0 %v447
        %4337 = vmatprep.subr.mxu0 0.0
        %4338 = vmatpush1.msra.mxu0 %v448
        %4339 = vmatprep.subr.mxu0 0.0
        %4340 = vmatpush1.msra.mxu0 %v449
        %4341 = vmatprep.subr.mxu0 0.0
        %4342 = vmatpush1.msra.mxu0 %v450
        %4343 = vmatprep.subr.mxu0 0.0
        %4344 = vmatpush1.msra.mxu0 %v451
        %4345 = vmatprep.mubr.f32.mxu0 %v4278
        %4346 = vmatmul.mubr.f32.gmra.mrb[0].mxu0 %v4277
        %v4347 = vpop.f32.mrb[0].mxu0
        %v4348 = vadd.f32 0.0, %v4347
        %v4349 = vpop.f32.mrb[0].mxu0
        %4350 = vdwg.mxu0
        %4351 = vmatprep.subr.mxu0 0.0
        %4352 = vmatpush1.msra.mxu0 %v452
        %4353 = vmatprep.subr.mxu0 0.0
        %4354 = vmatpush1.msra.mxu0 %v453
        %4355 = vmatprep.subr.mxu0 0.0
        %4356 = vmatpush1.msra.mxu0 %v454
        %4357 = vmatprep.subr.mxu0 0.0
        %4358 = vmatpush1.msra.mxu0 %v455
        %4359 = vmatprep.subr.mxu0 0.0
        %4360 = vmatpush1.msra.mxu0 %v456
        %4361 = vmatprep.subr.mxu0 0.0
        %4362 = vmatpush1.msra.mxu0 %v457
        %4363 = vmatprep.subr.mxu0 0.0
        %4364 = vmatpush1.msra.mxu0 %v458
        %4365 = vmatprep.subr.mxu0 0.0
        %4366 = vmatpush1.msra.mxu0 %v459
        %4367 = vmatprep.subr.mxu0 0.0
        %4368 = vmatpush1.msra.mxu0 %v460
        %4369 = vmatprep.subr.mxu0 0.0
        %4370 = vmatpush1.msra.mxu0 %v461
        %4371 = vmatprep.subr.mxu0 0.0
        %4372 = vmatpush1.msra.mxu0 %v462
        %4373 = vmatprep.subr.mxu0 0.0
        %4374 = vmatpush1.msra.mxu0 %v463
        %4375 = vmatprep.subr.mxu0 0.0
        %4376 = vmatpush1.msra.mxu0 %v464
        %4377 = vmatprep.subr.mxu0 0.0
        %4378 = vmatpush1.msra.mxu0 %v465
        %4379 = vmatprep.subr.mxu0 0.0
        %4380 = vmatpush1.msra.mxu0 %v466
        %4381 = vmatprep.subr.mxu0 0.0
        %4382 = vmatpush1.msra.mxu0 %v467
        %4383 = vmatprep.subr.mxu0 0.0
        %4384 = vmatpush1.msra.mxu0 %v468
        %4385 = vmatprep.subr.mxu0 0.0
        %4386 = vmatpush1.msra.mxu0 %v469
        %4387 = vmatprep.subr.mxu0 0.0
        %4388 = vmatpush1.msra.mxu0 %v470
        %4389 = vmatprep.subr.mxu0 0.0
        %4390 = vmatpush1.msra.mxu0 %v471
        %4391 = vmatprep.subr.mxu0 0.0
        %4392 = vmatpush1.msra.mxu0 %v472
        %4393 = vmatprep.subr.mxu0 0.0
        %4394 = vmatpush1.msra.mxu0 %v473
        %4395 = vmatprep.subr.mxu0 0.0
        %4396 = vmatpush1.msra.mxu0 %v474
        %4397 = vmatprep.subr.mxu0 0.0
        %4398 = vmatpush1.msra.mxu0 %v475
        %4399 = vmatprep.subr.mxu0 0.0
        %4400 = vmatpush1.msra.mxu0 %v476
        %4401 = vmatprep.subr.mxu0 0.0
        %4402 = vmatpush1.msra.mxu0 %v477
        %4403 = vmatprep.subr.mxu0 0.0
        %4404 = vmatpush1.msra.mxu0 %v478
        %4405 = vmatprep.subr.mxu0 0.0
        %4406 = vmatpush1.msra.mxu0 %v479
        %4407 = vmatprep.subr.mxu0 0.0
        %4408 = vmatpush1.msra.mxu0 %v480
        %4409 = vmatprep.subr.mxu0 0.0
        %4410 = vmatpush1.msra.mxu0 %v481
        %4411 = vmatprep.subr.mxu0 0.0
        %4412 = vmatpush1.msra.mxu0 %v482
        %4413 = vmatprep.subr.mxu0 0.0
        %4414 = vmatpush1.msra.mxu0 %v483
        %4415 = vmatprep.mubr.f32.mxu0 %v4280
        %4416 = vmatmul.mubr.f32.gmra.mrb[0].mxu0 %v4279
        %v4417 = vpop.f32.mrb[0].mxu0
        %v4418 = vadd.f32 %v4348, %v4417
        %v4419 = vpop.f32.mrb[0].mxu0
        %4420 = vdwg.mxu0
        %4421 = vmatprep.subr.mxu0 0.0
        %4422 = vmatpush1.msra.mxu0 %v498
        %4423 = vmatprep.subr.mxu0 0.0
        %4424 = vmatpush1.msra.mxu0 %v499
        %4425 = vmatprep.subr.mxu0 0.0
        %4426 = vmatpush1.msra.mxu0 %v500
        %4427 = vmatprep.subr.mxu0 0.0
        %4428 = vmatpush1.msra.mxu0 %v501
        %4429 = vmatprep.subr.mxu0 0.0
        %4430 = vmatpush1.msra.mxu0 0.0
        %4431 = vmatprep.subr.mxu0 0.0
        %4432 = vmatpush1.msra.mxu0 0.0
        %4433 = vmatprep.subr.mxu0 0.0
        %4434 = vmatpush1.msra.mxu0 0.0
        %4435 = vmatprep.subr.mxu0 0.0
        %4436 = vmatpush1.msra.mxu0 0.0
        %4437 = vmatprep.subr.mxu0 0.0
        %4438 = vmatpush1.msra.mxu0 0.0
        %4439 = vmatprep.subr.mxu0 0.0
        %4440 = vmatpush1.msra.mxu0 0.0
        %4441 = vmatprep.subr.mxu0 0.0
        %4442 = vmatpush1.msra.mxu0 0.0
        %4443 = vmatprep.subr.mxu0 0.0
        %4444 = vmatpush1.msra.mxu0 0.0
        %4445 = vmatprep.subr.mxu0 0.0
        %4446 = vmatpush1.msra.mxu0 0.0
        %4447 = vmatprep.subr.mxu0 0.0
        %4448 = vmatpush1.msra.mxu0 0.0
        %4449 = vmatprep.subr.mxu0 0.0
        %4450 = vmatpush1.msra.mxu0 0.0
        %4451 = vmatprep.subr.mxu0 0.0
        %4452 = vmatpush1.msra.mxu0 0.0
        %4453 = vmatprep.subr.mxu0 0.0
        %4454 = vmatpush1.msra.mxu0 0.0
        %4455 = vmatprep.subr.mxu0 0.0
        %4456 = vmatpush1.msra.mxu0 0.0
        %4457 = vmatprep.subr.mxu0 0.0
        %4458 = vmatpush1.msra.mxu0 0.0
        %4459 = vmatprep.subr.mxu0 0.0
        %4460 = vmatpush1.msra.mxu0 0.0
        %4461 = vmatprep.subr.mxu0 0.0
        %4462 = vmatpush1.msra.mxu0 0.0
        %4463 = vmatprep.subr.mxu0 0.0
        %4464 = vmatpush1.msra.mxu0 0.0
        %4465 = vmatprep.subr.mxu0 0.0
        %4466 = vmatpush1.msra.mxu0 0.0
        %4467 = vmatprep.subr.mxu0 0.0
        %4468 = vmatpush1.msra.mxu0 0.0
        %4469 = vmatprep.subr.mxu0 0.0
        %4470 = vmatpush1.msra.mxu0 0.0
        %4471 = vmatprep.subr.mxu0 0.0
        %4472 = vmatpush1.msra.mxu0 0.0
        %4473 = vmatprep.subr.mxu0 0.0
        %4474 = vmatpush1.msra.mxu0 0.0
        %4475 = vmatprep.subr.mxu0 0.0
        %4476 = vmatpush1.msra.mxu0 0.0
        %4477 = vmatprep.subr.mxu0 0.0
        %4478 = vmatpush1.msra.mxu0 0.0
        %4479 = vmatprep.subr.mxu0 0.0
        %4480 = vmatpush1.msra.mxu0 0.0
        %4481 = vmatprep.subr.mxu0 0.0
        %4482 = vmatpush1.msra.mxu0 0.0
        %4483 = vmatprep.subr.mxu0 0.0
        %4484 = vmatpush1.msra.mxu0 0.0
        %4485 = vmatprep.mubr.f32.mxu0 0.0
        %4486 = vmatmul.mubr.f32.gmra.mrb[0].mxu0 %v4085
        %v4487 = vpop.f32.mrb[0].mxu0
        %v4488 = vadd.f32 0.0, %v4487
        %v4489 = vpop.f32.mrb[0].mxu0
        %4490 = vdwg.mxu0
        %v4492 = vcombine.high %v4488, %v4488
        %v4494 = vunpack.c.l.s4 1966171168
        %v4495 = vunpack.c.0.s8 %v4494
        %v4496 = vlaneseq
        %v4497 = vshrl.u32 %v4496, 7
        %v4498 = vsub.s32 %v4495, %v4497
        %v4499 = vrot.slane %v4488, %v4498
        %v4501 = vunpack.c.l.s4 1966171168
        %v4502 = vunpack.c.0.s8 %v4501
        %v4503 = vlaneseq
        %v4504 = vshrl.u32 %v4503, 7
        %v4505 = vsub.s32 %v4502, %v4504
        %v4506 = vrot.slane %v4492, %v4505
        %v4507 = vcombine.high %v4499, %v4499
        %v4508 = vcombine.high %v4506, %v4506
        %v4510 = vunpack.c.l.s4 1966171168
        %v4511 = vunpack.c.0.s8 %v4510
        %v4512 = vlaneseq
        %v4513 = vshrl.u32 %v4512, 7
        %v4514 = vsub.s32 %v4511, %v4513
        %v4515 = vrot.slane %v4499, %v4514
        %v4517 = vunpack.c.l.s4 1966171168
        %v4518 = vunpack.c.0.s8 %v4517
        %v4519 = vlaneseq
        %v4520 = vshrl.u32 %v4519, 7
        %v4521 = vsub.s32 %v4518, %v4520
        %v4522 = vrot.slane %v4506, %v4521
        %v4524 = vunpack.c.l.s4 1966171168
        %v4525 = vunpack.c.0.s8 %v4524
        %v4526 = vlaneseq
        %v4527 = vshrl.u32 %v4526, 7
        %v4528 = vsub.s32 %v4525, %v4527
        %v4529 = vrot.slane %v4507, %v4528
        %v4531 = vunpack.c.l.s4 1966171168
        %v4532 = vunpack.c.0.s8 %v4531
        %v4533 = vlaneseq
        %v4534 = vshrl.u32 %v4533, 7
        %v4535 = vsub.s32 %v4532, %v4534
        %v4536 = vrot.slane %v4508, %v4535
        %v4537 = vcombine.high %v4515, %v4515
        %v4538 = vcombine.high %v4522, %v4522
        %v4539 = vcombine.high %v4529, %v4529
        %v4540 = vcombine.high %v4536, %v4536
        %v4541 = vlaneseq
        %v4542 = vshrl.u32 %v4541, 7
        %v4543 = vsub.s32 0, %v4542
        %v4544 = vrot.slane %v4515, %v4543
        %v4545 = vlaneseq
        %v4546 = vshrl.u32 %v4545, 7
        %v4547 = vsub.s32 0, %v4546
        %v4548 = vrot.slane %v4529, %v4547
        %v4549 = vlaneseq
        %v4550 = vshrl.u32 %v4549, 7
        %v4551 = vsub.s32 0, %v4550
        %v4552 = vrot.slane %v4537, %v4551
        %v4553 = vlaneseq
        %v4554 = vshrl.u32 %v4553, 7
        %v4555 = vsub.s32 0, %v4554
        %v4556 = vrot.slane %v4539, %v4555
        %v4557 = vlaneseq
        %v4558 = vshrl.u32 %v4557, 7
        %v4559 = vsub.s32 0, %v4558
        %v4560 = vrot.slane %v4522, %v4559
        %v4561 = vlaneseq
        %v4562 = vshrl.u32 %v4561, 7
        %v4563 = vsub.s32 0, %v4562
        %v4564 = vrot.slane %v4536, %v4563
        %v4565 = vlaneseq
        %v4566 = vshrl.u32 %v4565, 7
        %v4567 = vsub.s32 0, %v4566
        %v4568 = vrot.slane %v4538, %v4567
        %v4569 = vlaneseq
        %v4570 = vshrl.u32 %v4569, 7
        %v4571 = vsub.s32 0, %v4570
        %v4572 = vrot.slane %v4540, %v4571
        %v4581 = vadd.f32 %v403, %v4544
        %v4582 = vadd.f32 %v404, %v4544
        %v4583 = vadd.f32 %v405, %v4548
        %v4584 = vadd.f32 %v406, %v4548
        %v4585 = vadd.f32 %v407, %v4552
        %v4586 = vadd.f32 %v408, %v4552
        %v4587 = vadd.f32 %v409, %v4556
        %v4588 = vadd.f32 %v410, %v4556
        %v4589 = vadd.f32 %v411, %v4560
        %v4590 = vadd.f32 %v412, %v4560
        %v4591 = vadd.f32 %v413, %v4564
        %v4592 = vadd.f32 %v414, %v4564
        %v4593 = vadd.f32 %v415, %v4568
        %v4594 = vadd.f32 %v416, %v4568
        %v4595 = vadd.f32 %v417, %v4572
        %v4596 = vadd.f32 %v418, %v4572
        %v4597 = vtanh.pop %v4581
        %v4598 = vtanh.pop %v4582
        %v4599 = vtanh.pop %v4583
        %v4600 = vtanh.pop %v4584
        %v4601 = vtanh.pop %v4585
        %v4602 = vtanh.pop %v4586
        %v4603 = vtanh.pop %v4587
        %v4604 = vtanh.pop %v4588
        %v4605 = vtanh.pop %v4589
        %v4606 = vtanh.pop %v4590
        %v4607 = vtanh.pop %v4591
        %v4608 = vtanh.pop %v4592
        %v4609 = vtanh.pop %v4593
        %v4610 = vtanh.pop %v4594
        %v4611 = vtanh.pop %v4595
        %v4612 = vtanh.pop %v4596
        %v4613 = vmul.f32 %v4597, %v728
        %v4614 = vmul.f32 %v4598, %v728
        %v4615 = vmul.f32 %v4599, %v728
        %v4616 = vmul.f32 %v4600, %v728
        %v4617 = vmul.f32 %v4601, %v728
        %v4618 = vmul.f32 %v4602, %v728
        %v4619 = vmul.f32 %v4603, %v728
        %v4620 = vmul.f32 %v4604, %v728
        %v4621 = vmul.f32 %v4605, %v728
        %v4622 = vmul.f32 %v4606, %v728
        %v4623 = vmul.f32 %v4607, %v728
        %v4624 = vmul.f32 %v4608, %v728
        %v4625 = vmul.f32 %v4609, %v728
        %v4626 = vmul.f32 %v4610, %v728
        %v4627 = vmul.f32 %v4611, %v728
        %v4628 = vmul.f32 %v4612, %v728
        %v4629 = vsel %vm528, %v4613, 0.0
        %4630 = vadd.xlane.f32.xlu0 %v4629
        %v4631 = vpop.xlane.xlu0 %4630
        %v4632 = vsel %vm528, %v4614, 0.0
        %4633 = vadd.xlane.f32.xlu0 %v4632
        %v4634 = vpop.xlane.xlu0 %4633
        %v4635 = vsel %vm528, %v4615, 0.0
        %4636 = vadd.xlane.f32.xlu0 %v4635
        %v4637 = vpop.xlane.xlu0 %4636
        %v4638 = vsel %vm528, %v4616, 0.0
        %4639 = vadd.xlane.f32.xlu0 %v4638
        %v4640 = vpop.xlane.xlu0 %4639
        %v4641 = vsel %vm528, %v4617, 0.0
        %4642 = vadd.xlane.f32.xlu0 %v4641
        %v4643 = vpop.xlane.xlu0 %4642
        %v4644 = vsel %vm528, %v4618, 0.0
        %4645 = vadd.xlane.f32.xlu0 %v4644
        %v4646 = vpop.xlane.xlu0 %4645
        %v4647 = vsel %vm528, %v4619, 0.0
        %4648 = vadd.xlane.f32.xlu0 %v4647
        %v4649 = vpop.xlane.xlu0 %4648
        %v4650 = vsel %vm528, %v4620, 0.0
        %4651 = vadd.xlane.f32.xlu0 %v4650
        %v4652 = vpop.xlane.xlu0 %4651
        %v4653 = vsel %vm528, %v4621, 0.0
        %4654 = vadd.xlane.f32.xlu0 %v4653
        %v4655 = vpop.xlane.xlu0 %4654
        %v4656 = vsel %vm528, %v4622, 0.0
        %4657 = vadd.xlane.f32.xlu0 %v4656
        %v4658 = vpop.xlane.xlu0 %4657
        %v4659 = vsel %vm528, %v4623, 0.0
        %4660 = vadd.xlane.f32.xlu0 %v4659
        %v4661 = vpop.xlane.xlu0 %4660
        %v4662 = vsel %vm528, %v4624, 0.0
        %4663 = vadd.xlane.f32.xlu0 %v4662
        %v4664 = vpop.xlane.xlu0 %4663
        %v4665 = vsel %vm528, %v4625, 0.0
        %4666 = vadd.xlane.f32.xlu0 %v4665
        %v4667 = vpop.xlane.xlu0 %4666
        %v4668 = vsel %vm528, %v4626, 0.0
        %4669 = vadd.xlane.f32.xlu0 %v4668
        %v4670 = vpop.xlane.xlu0 %4669
        %v4671 = vsel %vm528, %v4627, 0.0
        %4672 = vadd.xlane.f32.xlu0 %v4671
        %v4673 = vpop.xlane.xlu0 %4672
        %v4674 = vsel %vm528, %v4628, 0.0
        %4675 = vadd.xlane.f32.xlu0 %v4674
        %v4676 = vpop.xlane.xlu0 %4675
        %v4693 = vlaneseq
        %v4694 = vshrl.u32 %v4693, 7
        %v4695 = vsub.s32 %v521, %v4694
        %v4696 = vrot.slane %v4631, %v4695
        %v4697 = vlaneseq
        %v4698 = vshrl.u32 %v4697, 7
        %v4699 = vsub.s32 %v814, %v4698
        %v4700 = vrot.slane %v4634, %v4699
        %v4701 = vsel %vm819, %v4700, %v4696
        %v4702 = vlaneseq
        %v4703 = vshrl.u32 %v4702, 7
        %v4704 = vsub.s32 %v521, %v4703
        %v4705 = vrot.slane %v4637, %v4704
        %v4706 = vlaneseq
        %v4707 = vshrl.u32 %v4706, 7
        %v4708 = vsub.s32 %v814, %v4707
        %v4709 = vrot.slane %v4640, %v4708
        %v4710 = vsel %vm819, %v4709, %v4705
        %v4711 = vlaneseq
        %v4712 = vshrl.u32 %v4711, 7
        %v4713 = vsub.s32 %v521, %v4712
        %v4714 = vrot.slane %v4643, %v4713
        %v4715 = vlaneseq
        %v4716 = vshrl.u32 %v4715, 7
        %v4717 = vsub.s32 %v814, %v4716
        %v4718 = vrot.slane %v4646, %v4717
        %v4719 = vsel %vm819, %v4718, %v4714
        %v4720 = vlaneseq
        %v4721 = vshrl.u32 %v4720, 7
        %v4722 = vsub.s32 %v521, %v4721
        %v4723 = vrot.slane %v4649, %v4722
        %v4724 = vlaneseq
        %v4725 = vshrl.u32 %v4724, 7
        %v4726 = vsub.s32 %v814, %v4725
        %v4727 = vrot.slane %v4652, %v4726
        %v4728 = vsel %vm819, %v4727, %v4723
        %v4729 = vlaneseq
        %v4730 = vshrl.u32 %v4729, 7
        %v4731 = vsub.s32 %v521, %v4730
        %v4732 = vrot.slane %v4655, %v4731
        %v4733 = vlaneseq
        %v4734 = vshrl.u32 %v4733, 7
        %v4735 = vsub.s32 %v814, %v4734
        %v4736 = vrot.slane %v4658, %v4735
        %v4737 = vsel %vm819, %v4736, %v4732
        %v4738 = vlaneseq
        %v4739 = vshrl.u32 %v4738, 7
        %v4740 = vsub.s32 %v521, %v4739
        %v4741 = vrot.slane %v4661, %v4740
        %v4742 = vlaneseq
        %v4743 = vshrl.u32 %v4742, 7
        %v4744 = vsub.s32 %v814, %v4743
        %v4745 = vrot.slane %v4664, %v4744
        %v4746 = vsel %vm819, %v4745, %v4741
        %v4747 = vlaneseq
        %v4748 = vshrl.u32 %v4747, 7
        %v4749 = vsub.s32 %v521, %v4748
        %v4750 = vrot.slane %v4667, %v4749
        %v4751 = vlaneseq
        %v4752 = vshrl.u32 %v4751, 7
        %v4753 = vsub.s32 %v814, %v4752
        %v4754 = vrot.slane %v4670, %v4753
        %v4755 = vsel %vm819, %v4754, %v4750
        %v4756 = vlaneseq
        %v4757 = vshrl.u32 %v4756, 7
        %v4758 = vsub.s32 %v521, %v4757
        %v4759 = vrot.slane %v4673, %v4758
        %v4760 = vlaneseq
        %v4761 = vshrl.u32 %v4760, 7
        %v4762 = vsub.s32 %v814, %v4761
        %v4763 = vrot.slane %v4676, %v4762
        %v4764 = vsel %vm819, %v4763, %v4759
        %v4765 = vsel %vm884, %v4710, %v4701
        %v4766 = vsel %vm886, %v4719, %v4765
        %v4767 = vsel %vm888, %v4728, %v4766
        %v4768 = vsel %vm890, %v4737, %v4767
        %v4769 = vsel %vm892, %v4746, %v4768
        %v4770 = vsel %vm894, %v4755, %v4769
        %v4771 = vsel %vm896, %v4764, %v4770
        %v4773 = vsel %vm899, %v4771, -inf
        %4774 = vmax.xlane.f32.xlu0 %v4773
        %v4775 = vpop.xlane.xlu0 %4774
        %v4777 = vlaneseq
        %v4778 = vshrl.u32 %v4777, 7
        %v4779 = vsub.s32 0, %v4778
        %v4780 = vrot.slane %v4775, %v4779
        %v4781 = vlaneseq
        %v4782 = vshrl.u32 %v4781, 7
        %v4783 = vsub.s32 1, %v4782
        %v4784 = vrot.slane %v4775, %v4783
        %v4785 = vlaneseq
        %v4786 = vshrl.u32 %v4785, 7
        %v4787 = vsub.s32 2, %v4786
        %v4788 = vrot.slane %v4775, %v4787
        %v4789 = vlaneseq
        %v4790 = vshrl.u32 %v4789, 7
        %v4791 = vsub.s32 3, %v4790
        %v4792 = vrot.slane %v4775, %v4791
        %v4793 = vlaneseq
        %v4794 = vshrl.u32 %v4793, 7
        %v4795 = vsub.s32 4, %v4794
        %v4796 = vrot.slane %v4775, %v4795
        %v4797 = vlaneseq
        %v4798 = vshrl.u32 %v4797, 7
        %v4799 = vsub.s32 5, %v4798
        %v4800 = vrot.slane %v4775, %v4799
        %v4801 = vlaneseq
        %v4802 = vshrl.u32 %v4801, 7
        %v4803 = vsub.s32 6, %v4802
        %v4804 = vrot.slane %v4775, %v4803
        %v4805 = vlaneseq
        %v4806 = vshrl.u32 %v4805, 7
        %v4807 = vsub.s32 7, %v4806
        %v4808 = vrot.slane %v4775, %v4807
        %v4817 = vsub.f32 %v4631, %v4780
        %v4818 = vsub.f32 %v4634, %v4780
        %v4819 = vsub.f32 %v4637, %v4784
        %v4820 = vsub.f32 %v4640, %v4784
        %v4821 = vsub.f32 %v4643, %v4788
        %v4822 = vsub.f32 %v4646, %v4788
        %v4823 = vsub.f32 %v4649, %v4792
        %v4824 = vsub.f32 %v4652, %v4792
        %v4825 = vsub.f32 %v4655, %v4796
        %v4826 = vsub.f32 %v4658, %v4796
        %v4827 = vsub.f32 %v4661, %v4800
        %v4828 = vsub.f32 %v4664, %v4800
        %v4829 = vsub.f32 %v4667, %v4804
        %v4830 = vsub.f32 %v4670, %v4804
        %v4831 = vsub.f32 %v4673, %v4808
        %v4832 = vsub.f32 %v4676, %v4808
        %v4833 = vmul.f32 %v4817, 1.442695
        %v4834 = vpow.pop %v4833
        %v4835 = vmul.f32 %v4818, 1.442695
        %v4836 = vpow.pop %v4835
        %v4837 = vmul.f32 %v4819, 1.442695
        %v4838 = vpow.pop %v4837
        %v4839 = vmul.f32 %v4820, 1.442695
        %v4840 = vpow.pop %v4839
        %v4841 = vmul.f32 %v4821, 1.442695
        %v4842 = vpow.pop %v4841
        %v4843 = vmul.f32 %v4822, 1.442695
        %v4844 = vpow.pop %v4843
        %v4845 = vmul.f32 %v4823, 1.442695
        %v4846 = vpow.pop %v4845
        %v4847 = vmul.f32 %v4824, 1.442695
        %v4848 = vpow.pop %v4847
        %v4849 = vmul.f32 %v4825, 1.442695
        %v4850 = vpow.pop %v4849
        %v4851 = vmul.f32 %v4826, 1.442695
        %v4852 = vpow.pop %v4851
        %v4853 = vmul.f32 %v4827, 1.442695
        %v4854 = vpow.pop %v4853
        %v4855 = vmul.f32 %v4828, 1.442695
        %v4856 = vpow.pop %v4855
        %v4857 = vmul.f32 %v4829, 1.442695
        %v4858 = vpow.pop %v4857
        %v4859 = vmul.f32 %v4830, 1.442695
        %v4860 = vpow.pop %v4859
        %v4861 = vmul.f32 %v4831, 1.442695
        %v4862 = vpow.pop %v4861
        %v4863 = vmul.f32 %v4832, 1.442695
        %v4864 = vpow.pop %v4863
        %4881 = vset.pattern.permute.xlu0 0
        %4882 = vperm.xlu0 %4881, %v4834
        %v4883 = vpop.permute.xlu0 %4882
        %4884 = vset.pattern.permute.xlu0 0
        %4885 = vperm.xlu0 %4884, %v4836
        %v4886 = vpop.permute.xlu0 %4885
        %4887 = vset.pattern.permute.xlu0 0
        %4888 = vperm.xlu0 %4887, %v4838
        %v4889 = vpop.permute.xlu0 %4888
        %4890 = vset.pattern.permute.xlu0 0
        %4891 = vperm.xlu0 %4890, %v4840
        %v4892 = vpop.permute.xlu0 %4891
        %4893 = vset.pattern.permute.xlu0 0
        %4894 = vperm.xlu0 %4893, %v4842
        %v4895 = vpop.permute.xlu0 %4894
        %4896 = vset.pattern.permute.xlu0 0
        %4897 = vperm.xlu0 %4896, %v4844
        %v4898 = vpop.permute.xlu0 %4897
        %4899 = vset.pattern.permute.xlu0 0
        %4900 = vperm.xlu0 %4899, %v4846
        %v4901 = vpop.permute.xlu0 %4900
        %4902 = vset.pattern.permute.xlu0 0
        %4903 = vperm.xlu0 %4902, %v4848
        %v4904 = vpop.permute.xlu0 %4903
        %4905 = vset.pattern.permute.xlu0 0
        %4906 = vperm.xlu0 %4905, %v4850
        %v4907 = vpop.permute.xlu0 %4906
        %4908 = vset.pattern.permute.xlu0 0
        %4909 = vperm.xlu0 %4908, %v4852
        %v4910 = vpop.permute.xlu0 %4909
        %4911 = vset.pattern.permute.xlu0 0
        %4912 = vperm.xlu0 %4911, %v4854
        %v4913 = vpop.permute.xlu0 %4912
        %4914 = vset.pattern.permute.xlu0 0
        %4915 = vperm.xlu0 %4914, %v4856
        %v4916 = vpop.permute.xlu0 %4915
        %4917 = vset.pattern.permute.xlu0 0
        %4918 = vperm.xlu0 %4917, %v4858
        %v4919 = vpop.permute.xlu0 %4918
        %4920 = vset.pattern.permute.xlu0 0
        %4921 = vperm.xlu0 %4920, %v4860
        %v4922 = vpop.permute.xlu0 %4921
        %4923 = vset.pattern.permute.xlu0 0
        %4924 = vperm.xlu0 %4923, %v4862
        %v4925 = vpop.permute.xlu0 %4924
        %4926 = vset.pattern.permute.xlu0 0
        %4927 = vperm.xlu0 %4926, %v4864
        %v4928 = vpop.permute.xlu0 %4927
        %v4929 = vlaneseq
        %v4930 = vshrl.u32 %v4929, 7
        %v4931 = vsub.s32 %v521, %v4930
        %v4932 = vrot.slane %v4883, %v4931
        %v4933 = vlaneseq
        %v4934 = vshrl.u32 %v4933, 7
        %v4935 = vsub.s32 %v814, %v4934
        %v4936 = vrot.slane %v4886, %v4935
        %v4937 = vsel %vm819, %v4936, %v4932
        %v4938 = vlaneseq
        %v4939 = vshrl.u32 %v4938, 7
        %v4940 = vsub.s32 %v521, %v4939
        %v4941 = vrot.slane %v4889, %v4940
        %v4942 = vlaneseq
        %v4943 = vshrl.u32 %v4942, 7
        %v4944 = vsub.s32 %v814, %v4943
        %v4945 = vrot.slane %v4892, %v4944
        %v4946 = vsel %vm819, %v4945, %v4941
        %v4947 = vlaneseq
        %v4948 = vshrl.u32 %v4947, 7
        %v4949 = vsub.s32 %v521, %v4948
        %v4950 = vrot.slane %v4895, %v4949
        %v4951 = vlaneseq
        %v4952 = vshrl.u32 %v4951, 7
        %v4953 = vsub.s32 %v814, %v4952
        %v4954 = vrot.slane %v4898, %v4953
        %v4955 = vsel %vm819, %v4954, %v4950
        %v4956 = vlaneseq
        %v4957 = vshrl.u32 %v4956, 7
        %v4958 = vsub.s32 %v521, %v4957
        %v4959 = vrot.slane %v4901, %v4958
        %v4960 = vlaneseq
        %v4961 = vshrl.u32 %v4960, 7
        %v4962 = vsub.s32 %v814, %v4961
        %v4963 = vrot.slane %v4904, %v4962
        %v4964 = vsel %vm819, %v4963, %v4959
        %v4965 = vlaneseq
        %v4966 = vshrl.u32 %v4965, 7
        %v4967 = vsub.s32 %v521, %v4966
        %v4968 = vrot.slane %v4907, %v4967
        %v4969 = vlaneseq
        %v4970 = vshrl.u32 %v4969, 7
        %v4971 = vsub.s32 %v814, %v4970
        %v4972 = vrot.slane %v4910, %v4971
        %v4973 = vsel %vm819, %v4972, %v4968
        %v4974 = vlaneseq
        %v4975 = vshrl.u32 %v4974, 7
        %v4976 = vsub.s32 %v521, %v4975
        %v4977 = vrot.slane %v4913, %v4976
        %v4978 = vlaneseq
        %v4979 = vshrl.u32 %v4978, 7
        %v4980 = vsub.s32 %v814, %v4979
        %v4981 = vrot.slane %v4916, %v4980
        %v4982 = vsel %vm819, %v4981, %v4977
        %v4983 = vlaneseq
        %v4984 = vshrl.u32 %v4983, 7
        %v4985 = vsub.s32 %v521, %v4984
        %v4986 = vrot.slane %v4919, %v4985
        %v4987 = vlaneseq
        %v4988 = vshrl.u32 %v4987, 7
        %v4989 = vsub.s32 %v814, %v4988
        %v4990 = vrot.slane %v4922, %v4989
        %v4991 = vsel %vm819, %v4990, %v4986
        %v4992 = vlaneseq
        %v4993 = vshrl.u32 %v4992, 7
        %v4994 = vsub.s32 %v521, %v4993
        %v4995 = vrot.slane %v4925, %v4994
        %v4996 = vlaneseq
        %v4997 = vshrl.u32 %v4996, 7
        %v4998 = vsub.s32 %v814, %v4997
        %v4999 = vrot.slane %v4928, %v4998
        %v5000 = vsel %vm819, %v4999, %v4995
        %v5001 = vsel %vm884, %v4946, %v4937
        %v5002 = vsel %vm886, %v4955, %v5001
        %v5003 = vsel %vm888, %v4964, %v5002
        %v5004 = vsel %vm890, %v4973, %v5003
        %v5005 = vsel %vm892, %v4982, %v5004
        %v5006 = vsel %vm894, %v4991, %v5005
        %v5007 = vsel %vm896, %v5000, %v5006
        %v5009 = vsel %vm899, %v5007, 0.0
        %5010 = vadd.xlane.f32.xlu0 %v5009
        %v5011 = vpop.xlane.xlu0 %5010
        %v5012 = vrcp.pop %v5011
        %v5013 = vmul.f32 %v5011, %v5012
        %v5014 = vsub.f32 2.0, %v5013
        %v5015 = vmul.f32 %v5012, %v5014
        %v5017 = vlaneseq
        %v5018 = vshrl.u32 %v5017, 7
        %v5019 = vsub.s32 0, %v5018
        %v5020 = vrot.slane %v5015, %v5019
        %v5021 = vlaneseq
        %v5022 = vshrl.u32 %v5021, 7
        %v5023 = vsub.s32 1, %v5022
        %v5024 = vrot.slane %v5015, %v5023
        %v5025 = vlaneseq
        %v5026 = vshrl.u32 %v5025, 7
        %v5027 = vsub.s32 2, %v5026
        %v5028 = vrot.slane %v5015, %v5027
        %v5029 = vlaneseq
        %v5030 = vshrl.u32 %v5029, 7
        %v5031 = vsub.s32 3, %v5030
        %v5032 = vrot.slane %v5015, %v5031
        %v5033 = vlaneseq
        %v5034 = vshrl.u32 %v5033, 7
        %v5035 = vsub.s32 4, %v5034
        %v5036 = vrot.slane %v5015, %v5035
        %v5037 = vlaneseq
        %v5038 = vshrl.u32 %v5037, 7
        %v5039 = vsub.s32 5, %v5038
        %v5040 = vrot.slane %v5015, %v5039
        %v5041 = vlaneseq
        %v5042 = vshrl.u32 %v5041, 7
        %v5043 = vsub.s32 6, %v5042
        %v5044 = vrot.slane %v5015, %v5043
        %v5045 = vlaneseq
        %v5046 = vshrl.u32 %v5045, 7
        %v5047 = vsub.s32 7, %v5046
        %v5048 = vrot.slane %v5015, %v5047
        %v5057 = vmul.f32 %v4834, %v5020
        %v5058 = vmul.f32 %v4836, %v5020
        %v5059 = vmul.f32 %v4838, %v5024
        %v5060 = vmul.f32 %v4840, %v5024
        %v5061 = vmul.f32 %v4842, %v5028
        %v5062 = vmul.f32 %v4844, %v5028
        %v5063 = vmul.f32 %v4846, %v5032
        %v5064 = vmul.f32 %v4848, %v5032
        %v5065 = vmul.f32 %v4850, %v5036
        %v5066 = vmul.f32 %v4852, %v5036
        %v5067 = vmul.f32 %v4854, %v5040
        %v5068 = vmul.f32 %v4856, %v5040
        %v5069 = vmul.f32 %v4858, %v5044
        %v5070 = vmul.f32 %v4860, %v5044
        %v5071 = vmul.f32 %v4862, %v5048
        %v5072 = vmul.f32 %v4864, %v5048
        %5074 = vset.pattern.permute.xlu0 0
        %5075 = vperm.xlu0 %5074, %v5057
        %v5076 = vpop.permute.xlu0 %5075
        %5079 = vset.pattern.permute.xlu0 0
        %5080 = vperm.xlu0 %5079, %v5058
        %v5081 = vpop.permute.xlu0 %5080
        %5084 = vset.pattern.permute.xlu0 0
        %5085 = vperm.xlu0 %5084, %v5059
        %v5086 = vpop.permute.xlu0 %5085
        %5089 = vset.pattern.permute.xlu0 0
        %5090 = vperm.xlu0 %5089, %v5060
        %v5091 = vpop.permute.xlu0 %5090
        %5094 = vset.pattern.permute.xlu0 0
        %5095 = vperm.xlu0 %5094, %v5061
        %v5096 = vpop.permute.xlu0 %5095
        %5099 = vset.pattern.permute.xlu0 0
        %5100 = vperm.xlu0 %5099, %v5062
        %v5101 = vpop.permute.xlu0 %5100
        %5104 = vset.pattern.permute.xlu0 0
        %5105 = vperm.xlu0 %5104, %v5063
        %v5106 = vpop.permute.xlu0 %5105
        %5109 = vset.pattern.permute.xlu0 0
        %5110 = vperm.xlu0 %5109, %v5064
        %v5111 = vpop.permute.xlu0 %5110
        %5114 = vset.pattern.permute.xlu0 0
        %5115 = vperm.xlu0 %5114, %v5065
        %v5116 = vpop.permute.xlu0 %5115
        %5119 = vset.pattern.permute.xlu0 0
        %5120 = vperm.xlu0 %5119, %v5066
        %v5121 = vpop.permute.xlu0 %5120
        %5124 = vset.pattern.permute.xlu0 0
        %5125 = vperm.xlu0 %5124, %v5067
        %v5126 = vpop.permute.xlu0 %5125
        %5129 = vset.pattern.permute.xlu0 0
        %5130 = vperm.xlu0 %5129, %v5068
        %v5131 = vpop.permute.xlu0 %5130
        %5134 = vset.pattern.permute.xlu0 0
        %5135 = vperm.xlu0 %5134, %v5069
        %v5136 = vpop.permute.xlu0 %5135
        %5139 = vset.pattern.permute.xlu0 0
        %5140 = vperm.xlu0 %5139, %v5070
        %v5141 = vpop.permute.xlu0 %5140
        %5144 = vset.pattern.permute.xlu0 0
        %5145 = vperm.xlu0 %5144, %v5071
        %v5146 = vpop.permute.xlu0 %5145
        %5149 = vset.pattern.permute.xlu0 0
        %5150 = vperm.xlu0 %5149, %v5072
        %v5151 = vpop.permute.xlu0 %5150
        %v5153 = vmul.f32 %v5076, %v387
        %v5154 = vmul.f32 %v5081, %v388
        %v5155 = vmul.f32 %v5086, %v389
        %v5156 = vmul.f32 %v5091, %v390
        %v5157 = vmul.f32 %v5096, %v391
        %v5158 = vmul.f32 %v5101, %v392
        %v5159 = vmul.f32 %v5106, %v393
        %v5160 = vmul.f32 %v5111, %v394
        %v5161 = vmul.f32 %v5116, %v395
        %v5162 = vmul.f32 %v5121, %v396
        %v5163 = vmul.f32 %v5126, %v397
        %v5164 = vmul.f32 %v5131, %v398
        %v5165 = vmul.f32 %v5136, %v399
        %v5166 = vmul.f32 %v5141, %v400
        %v5167 = vmul.f32 %v5146, %v401
        %v5168 = vmul.f32 %v5151, %v402
        %v5169 = vsel %vm1296, %v5153, 0.0
        %v5170 = vsel %vm1296, %v5154, 0.0
        %v5171 = vadd.f32 %v5169, %v5170
        %v5172 = vrot.slane %v5171, 4
        %v5173 = vadd.f32 %v5171, %v5172
        %v5174 = vrot.slane %v5173, 2
        %v5175 = vadd.f32 %v5173, %v5174
        %v5176 = vrot.slane %v5175, 1
        %v5177 = vadd.f32 %v5175, %v5176
        %v5178 = vsel %vm1296, %v5155, 0.0
        %v5179 = vsel %vm1296, %v5156, 0.0
        %v5180 = vadd.f32 %v5178, %v5179
        %v5181 = vrot.slane %v5180, 4
        %v5182 = vadd.f32 %v5180, %v5181
        %v5183 = vrot.slane %v5182, 2
        %v5184 = vadd.f32 %v5182, %v5183
        %v5185 = vrot.slane %v5184, 1
        %v5186 = vadd.f32 %v5184, %v5185
        %v5187 = vsel %vm1296, %v5157, 0.0
        %v5188 = vsel %vm1296, %v5158, 0.0
        %v5189 = vadd.f32 %v5187, %v5188
        %v5190 = vrot.slane %v5189, 4
        %v5191 = vadd.f32 %v5189, %v5190
        %v5192 = vrot.slane %v5191, 2
        %v5193 = vadd.f32 %v5191, %v5192
        %v5194 = vrot.slane %v5193, 1
        %v5195 = vadd.f32 %v5193, %v5194
        %v5196 = vsel %vm1296, %v5159, 0.0
        %v5197 = vsel %vm1296, %v5160, 0.0
        %v5198 = vadd.f32 %v5196, %v5197
        %v5199 = vrot.slane %v5198, 4
        %v5200 = vadd.f32 %v5198, %v5199
        %v5201 = vrot.slane %v5200, 2
        %v5202 = vadd.f32 %v5200, %v5201
        %v5203 = vrot.slane %v5202, 1
        %v5204 = vadd.f32 %v5202, %v5203
        %v5205 = vsel %vm1296, %v5161, 0.0
        %v5206 = vsel %vm1296, %v5162, 0.0
        %v5207 = vadd.f32 %v5205, %v5206
        %v5208 = vrot.slane %v5207, 4
        %v5209 = vadd.f32 %v5207, %v5208
        %v5210 = vrot.slane %v5209, 2
        %v5211 = vadd.f32 %v5209, %v5210
        %v5212 = vrot.slane %v5211, 1
        %v5213 = vadd.f32 %v5211, %v5212
        %v5214 = vsel %vm1296, %v5163, 0.0
        %v5215 = vsel %vm1296, %v5164, 0.0
        %v5216 = vadd.f32 %v5214, %v5215
        %v5217 = vrot.slane %v5216, 4
        %v5218 = vadd.f32 %v5216, %v5217
        %v5219 = vrot.slane %v5218, 2
        %v5220 = vadd.f32 %v5218, %v5219
        %v5221 = vrot.slane %v5220, 1
        %v5222 = vadd.f32 %v5220, %v5221
        %v5223 = vsel %vm1296, %v5165, 0.0
        %v5224 = vsel %vm1296, %v5166, 0.0
        %v5225 = vadd.f32 %v5223, %v5224
        %v5226 = vrot.slane %v5225, 4
        %v5227 = vadd.f32 %v5225, %v5226
        %v5228 = vrot.slane %v5227, 2
        %v5229 = vadd.f32 %v5227, %v5228
        %v5230 = vrot.slane %v5229, 1
        %v5231 = vadd.f32 %v5229, %v5230
        %v5232 = vsel %vm1296, %v5167, 0.0
        %v5233 = vsel %vm1296, %v5168, 0.0
        %v5234 = vadd.f32 %v5232, %v5233
        %v5235 = vrot.slane %v5234, 4
        %v5236 = vadd.f32 %v5234, %v5235
        %v5237 = vrot.slane %v5236, 2
        %v5238 = vadd.f32 %v5236, %v5237
        %v5239 = vrot.slane %v5238, 1
        %v5240 = vadd.f32 %v5238, %v5239
        %v5249 = vsel %vm884, %v5186, %v5177
        %v5250 = vsel %vm886, %v5195, %v5249
        %v5251 = vsel %vm888, %v5204, %v5250
        %v5252 = vsel %vm890, %v5213, %v5251
        %v5253 = vsel %vm892, %v5222, %v5252
        %v5254 = vsel %vm894, %v5231, %v5253
        %v5255 = vsel %vm896, %v5240, %v5254
        %5258 = vrot.lane.b32.xlu0 %v4418, 64
        %v5259 = vpop.permute.xlu0 %5258
        %5261 = vrot.lane.b32.xlu0 %v4081, 112
        %v5262 = vpop.permute.xlu0 %5261
        %v5264 = vsel %vm1296, %v5255, %v5259
        %v5265 = vsel %vm1393, %v5264, %v5262
        %v5267 = vsel %vm1395, %v5265, 0
        %5269 = vmatprep.subr.mxu0 0.0
        %5270 = vmatpush1.msra.mxu0 %v484
        %5271 = vmatprep.subr.mxu0 0.0
        %5272 = vmatpush1.msra.mxu0 %v485
        %5273 = vmatprep.subr.mxu0 0.0
        %5274 = vmatpush1.msra.mxu0 %v486
        %5275 = vmatprep.subr.mxu0 0.0
        %5276 = vmatpush1.msra.mxu0 %v487
        %5277 = vmatprep.subr.mxu0 0.0
        %5278 = vmatpush1.msra.mxu0 %v488
        %5279 = vmatprep.subr.mxu0 0.0
        %5280 = vmatpush1.msra.mxu0 %v489
        %5281 = vmatprep.subr.mxu0 0.0
        %5282 = vmatpush1.msra.mxu0 %v490
        %5283 = vmatprep.subr.mxu0 0.0
        %5284 = vmatpush1.msra.mxu0 %v491
        %5285 = vmatprep.subr.mxu0 0.0
        %5286 = vmatpush1.msra.mxu0 %v492
        %5287 = vmatprep.subr.mxu0 0.0
        %5288 = vmatpush1.msra.mxu0 %v493
        %5289 = vmatprep.subr.mxu0 0.0
        %5290 = vmatpush1.msra.mxu0 %v494
        %5291 = vmatprep.subr.mxu0 0.0
        %5292 = vmatpush1.msra.mxu0 %v495
        %5293 = vmatprep.subr.mxu0 0.0
        %5294 = vmatpush1.msra.mxu0 %v496
        %5295 = vmatprep.subr.mxu0 0.0
        %5296 = vmatpush1.msra.mxu0 %v497
        %5297 = vmatprep.subr.mxu0 0.0
        %5298 = vmatpush1.msra.mxu0 0.0
        %5299 = vmatprep.subr.mxu0 0.0
        %5300 = vmatpush1.msra.mxu0 0.0
        %5301 = vmatprep.subr.mxu0 0.0
        %5302 = vmatpush1.msra.mxu0 0.0
        %5303 = vmatprep.subr.mxu0 0.0
        %5304 = vmatpush1.msra.mxu0 0.0
        %5305 = vmatprep.subr.mxu0 0.0
        %5306 = vmatpush1.msra.mxu0 0.0
        %5307 = vmatprep.subr.mxu0 0.0
        %5308 = vmatpush1.msra.mxu0 0.0
        %5309 = vmatprep.subr.mxu0 0.0
        %5310 = vmatpush1.msra.mxu0 0.0
        %5311 = vmatprep.subr.mxu0 0.0
        %5312 = vmatpush1.msra.mxu0 0.0
        %5313 = vmatprep.subr.mxu0 0.0
        %5314 = vmatpush1.msra.mxu0 0.0
        %5315 = vmatprep.subr.mxu0 0.0
        %5316 = vmatpush1.msra.mxu0 0.0
        %5317 = vmatprep.subr.mxu0 0.0
        %5318 = vmatpush1.msra.mxu0 0.0
        %5319 = vmatprep.subr.mxu0 0.0
        %5320 = vmatpush1.msra.mxu0 0.0
        %5321 = vmatprep.subr.mxu0 0.0
        %5322 = vmatpush1.msra.mxu0 0.0
        %5323 = vmatprep.subr.mxu0 0.0
        %5324 = vmatpush1.msra.mxu0 0.0
        %5325 = vmatprep.subr.mxu0 0.0
        %5326 = vmatpush1.msra.mxu0 0.0
        %5327 = vmatprep.subr.mxu0 0.0
        %5328 = vmatpush1.msra.mxu0 0.0
        %5329 = vmatprep.subr.mxu0 0.0
        %5330 = vmatpush1.msra.mxu0 0.0
        %5331 = vmatprep.subr.mxu0 0.0
        %5332 = vmatpush1.msra.mxu0 0.0
        %5333 = vmatprep.mubr.f32.mxu0 0.0
        %5334 = vmatmul.mubr.f32.gmra.mrb[0].mxu0 %v5267
        %v5335 = vpop.f32.mrb[0].mxu0
        %v5336 = vadd.f32 0.0, %v5335
        %v5337 = vpop.f32.mrb[0].mxu0
        %5338 = vdwg.mxu0
        %v5339 = vadd.f32 %v419, %v5336
        %v5340 = vxor.u32 %v5339, 2147483648
        %v5341 = vmul.f32 %v5340, 1.442695
        %v5342 = vpow.pop %v5341
        %v5343 = vadd.f32 %v5342, 1.0
        %v5344 = vrcp.pop %v5343
        %v5345 = vmul.f32 1.0, %v5344
        %v5346 = vtanh.pop %v5339
        %v5347 = vmul.f32 %v5345, %v4075
        %5349 = vrot.lane.b32.xlu0 %v5346, 64
        %v5350 = vpop.permute.xlu0 %5349
        %v5352 = vmul.f32 %v5345, %v5350
        %5354 = vrot.lane.b32.xlu0 %v5352, 32
        %v5355 = vpop.permute.xlu0 %5354
        %v5357 = vadd.f32 %v5347, %v5355
        %v5358 = vtanh.pop %v5357
        %5360 = vrot.lane.b32.xlu0 %v5358, 64
        %v5361 = vpop.permute.xlu0 %5360
        %v5363 = vmul.f32 %v5345, %v5361
        %5365 = vrot.lane.b32.xlu0 %v5363, 32
        %v5366 = vpop.permute.xlu0 %5365
        %v5367 = vsel %vm528, %v5366, 0
        %5369 = vmatprep.subr.mxu0 %v504
        %5370 = vmatpush1.msra.mxu0 %v503
        %5371 = vmatprep.subr.mxu0 %v508
        %5372 = vmatpush1.msra.mxu0 %v507
        %5373 = vmatprep.subr.mxu0 %v512
        %5374 = vmatpush1.msra.mxu0 %v511
        %5375 = vmatprep.subr.mxu0 %v516
        %5376 = vmatpush1.msra.mxu0 %v515
        %5377 = vmatprep.subr.mxu0 0.0
        %5378 = vmatpush1.msra.mxu0 0.0
        %5379 = vmatprep.subr.mxu0 0.0
        %5380 = vmatpush1.msra.mxu0 0.0
        %5381 = vmatprep.subr.mxu0 0.0
        %5382 = vmatpush1.msra.mxu0 0.0
        %5383 = vmatprep.subr.mxu0 0.0
        %5384 = vmatpush1.msra.mxu0 0.0
        %5385 = vmatprep.subr.mxu0 0.0
        %5386 = vmatpush1.msra.mxu0 0.0
        %5387 = vmatprep.subr.mxu0 0.0
        %5388 = vmatpush1.msra.mxu0 0.0
        %5389 = vmatprep.subr.mxu0 0.0
        %5390 = vmatpush1.msra.mxu0 0.0
        %5391 = vmatprep.subr.mxu0 0.0
        %5392 = vmatpush1.msra.mxu0 0.0
        %5393 = vmatprep.subr.mxu0 0.0
        %5394 = vmatpush1.msra.mxu0 0.0
        %5395 = vmatprep.subr.mxu0 0.0
        %5396 = vmatpush1.msra.mxu0 0.0
        %5397 = vmatprep.subr.mxu0 0.0
        %5398 = vmatpush1.msra.mxu0 0.0
        %5399 = vmatprep.subr.mxu0 0.0
        %5400 = vmatpush1.msra.mxu0 0.0
        %5401 = vmatprep.subr.mxu0 0.0
        %5402 = vmatpush1.msra.mxu0 0.0
        %5403 = vmatprep.subr.mxu0 0.0
        %5404 = vmatpush1.msra.mxu0 0.0
        %5405 = vmatprep.subr.mxu0 0.0
        %5406 = vmatpush1.msra.mxu0 0.0
        %5407 = vmatprep.subr.mxu0 0.0
        %5408 = vmatpush1.msra.mxu0 0.0
        %5409 = vmatprep.subr.mxu0 0.0
        %5410 = vmatpush1.msra.mxu0 0.0
        %5411 = vmatprep.subr.mxu0 0.0
        %5412 = vmatpush1.msra.mxu0 0.0
        %5413 = vmatprep.subr.mxu0 0.0
        %5414 = vmatpush1.msra.mxu0 0.0
        %5415 = vmatprep.subr.mxu0 0.0
        %5416 = vmatpush1.msra.mxu0 0.0
        %5417 = vmatprep.subr.mxu0 0.0
        %5418 = vmatpush1.msra.mxu0 0.0
        %5419 = vmatprep.subr.mxu0 0.0
        %5420 = vmatpush1.msra.mxu0 0.0
        %5421 = vmatprep.subr.mxu0 0.0
        %5422 = vmatpush1.msra.mxu0 0.0
        %5423 = vmatprep.subr.mxu0 0.0
        %5424 = vmatpush1.msra.mxu0 0.0
        %5425 = vmatprep.subr.mxu0 0.0
        %5426 = vmatpush1.msra.mxu0 0.0
        %5427 = vmatprep.subr.mxu0 0.0
        %5428 = vmatpush1.msra.mxu0 0.0
        %5429 = vmatprep.subr.mxu0 0.0
        %5430 = vmatpush1.msra.mxu0 0.0
        %5431 = vmatprep.subr.mxu0 0.0
        %5432 = vmatpush1.msra.mxu0 0.0
        %5433 = vmatprep.mubr.f32.mxu0 0.0
        %5434 = vmatmul.mubr.f32.gmra.mrb[0].mxu0 %v5367
        %v5435 = vpop.f32.mrb[0].mxu0
        %v5436 = vadd.f32 %v1502, %v5435
        %v5437 = vpop.f32.mrb[0].mxu0
        %v5438 = vadd.f32 %v1506, %v5437
        %5439 = vdwg.mxu0
        %5440 = vmatprep.subr.mxu0 %v506
        %5441 = vmatpush1.msra.mxu0 %v505
        %5442 = vmatprep.subr.mxu0 %v510
        %5443 = vmatpush1.msra.mxu0 %v509
        %5444 = vmatprep.subr.mxu0 %v514
        %5445 = vmatpush1.msra.mxu0 %v513
        %5446 = vmatprep.subr.mxu0 %v518
        %5447 = vmatpush1.msra.mxu0 %v517
        %5448 = vmatprep.subr.mxu0 0.0
        %5449 = vmatpush1.msra.mxu0 0.0
        %5450 = vmatprep.subr.mxu0 0.0
        %5451 = vmatpush1.msra.mxu0 0.0
        %5452 = vmatprep.subr.mxu0 0.0
        %5453 = vmatpush1.msra.mxu0 0.0
        %5454 = vmatprep.subr.mxu0 0.0
        %5455 = vmatpush1.msra.mxu0 0.0
        %5456 = vmatprep.subr.mxu0 0.0
        %5457 = vmatpush1.msra.mxu0 0.0
        %5458 = vmatprep.subr.mxu0 0.0
        %5459 = vmatpush1.msra.mxu0 0.0
        %5460 = vmatprep.subr.mxu0 0.0
        %5461 = vmatpush1.msra.mxu0 0.0
        %5462 = vmatprep.subr.mxu0 0.0
        %5463 = vmatpush1.msra.mxu0 0.0
        %5464 = vmatprep.subr.mxu0 0.0
        %5465 = vmatpush1.msra.mxu0 0.0
        %5466 = vmatprep.subr.mxu0 0.0
        %5467 = vmatpush1.msra.mxu0 0.0
        %5468 = vmatprep.subr.mxu0 0.0
        %5469 = vmatpush1.msra.mxu0 0.0
        %5470 = vmatprep.subr.mxu0 0.0
        %5471 = vmatpush1.msra.mxu0 0.0
        %5472 = vmatprep.subr.mxu0 0.0
        %5473 = vmatpush1.msra.mxu0 0.0
        %5474 = vmatprep.subr.mxu0 0.0
        %5475 = vmatpush1.msra.mxu0 0.0
        %5476 = vmatprep.subr.mxu0 0.0
        %5477 = vmatpush1.msra.mxu0 0.0
        %5478 = vmatprep.subr.mxu0 0.0
        %5479 = vmatpush1.msra.mxu0 0.0
        %5480 = vmatprep.subr.mxu0 0.0
        %5481 = vmatpush1.msra.mxu0 0.0
        %5482 = vmatprep.subr.mxu0 0.0
        %5483 = vmatpush1.msra.mxu0 0.0
        %5484 = vmatprep.subr.mxu0 0.0
        %5485 = vmatpush1.msra.mxu0 0.0
        %5486 = vmatprep.subr.mxu0 0.0
        %5487 = vmatpush1.msra.mxu0 0.0
        %5488 = vmatprep.subr.mxu0 0.0
        %5489 = vmatpush1.msra.mxu0 0.0
        %5490 = vmatprep.subr.mxu0 0.0
        %5491 = vmatpush1.msra.mxu0 0.0
        %5492 = vmatprep.subr.mxu0 0.0
        %5493 = vmatpush1.msra.mxu0 0.0
        %5494 = vmatprep.subr.mxu0 0.0
        %5495 = vmatpush1.msra.mxu0 0.0
        %5496 = vmatprep.subr.mxu0 0.0
        %5497 = vmatpush1.msra.mxu0 0.0
        %5498 = vmatprep.subr.mxu0 0.0
        %5499 = vmatpush1.msra.mxu0 0.0
        %5500 = vmatprep.subr.mxu0 0.0
        %5501 = vmatpush1.msra.mxu0 0.0
        %5502 = vmatprep.subr.mxu0 0.0
        %5503 = vmatpush1.msra.mxu0 0.0
        %5504 = vmatprep.mubr.f32.mxu0 0.0
        %5505 = vmatmul.mubr.f32.gmra.mrb[0].mxu0 %v5367
        %v5506 = vpop.f32.mrb[0].mxu0
        %v5507 = vadd.f32 %v1510, %v5506
        %v5508 = vpop.f32.mrb[0].mxu0
        %v5509 = vadd.f32 %v1514, %v5508
        %5510 = vdwg.mxu0
        %s5511 = scalar_lea.vmem %s365, 96 [#allocation5]
        %5512 = vst [vmem:[%s5511] sm:$0xff] %v5436
        %5513 = vst [vmem:[%s5511 + $0x8] sm:$0xff] %v5438
        %5514 = vst [vmem:[%s5511 + $0x10] sm:$0xff] %v5507
        %5515 = vst [vmem:[%s5511 + $0x18] sm:$0xff] %v5509
        %v5516 = vmax.f32 %v5436, %v5438
        %v5517 = vmax.f32 %v5507, %v5509
        %v5518 = vmax.f32 %v5516, %v5517
        %5519 = vmax.xlane.f32.xlu0 %v5518
        %v5520 = vpop.xlane.xlu0 %5519
        %vm5521 = vcmp.eq.f32.partialorder %v5436, %v5520
        %vm5522 = vcmp.eq.f32.partialorder %v5438, %v5520
        %vm5523 = vcmp.eq.f32.partialorder %v5507, %v5520
        %vm5524 = vcmp.eq.f32.partialorder %v5509, %v5520
        %v5525 = vsel %vm5521, %v521, 512
        %v5526 = vsel %vm5522, %v522, 512
        %v5527 = vsel %vm5523, %v523, 512
        %v5528 = vsel %vm5524, %v524, 512
        %vm5529 = vcmp.lt.s32.totalorder %v5525, %v5526
        %v5530 = vsel %vm5529, %v5525, %v5526
        %vm5531 = vcmp.lt.s32.totalorder %v5527, %v5528
        %v5532 = vsel %vm5531, %v5527, %v5528
        %vm5533 = vcmp.lt.s32.totalorder %v5530, %v5532
        %v5534 = vsel %vm5533, %v5530, %v5532
        %v5535 = vand.u32 %v5534, 65535
        %v5536 = vshra.s32 %v5534, 16
        %v5537 = vcvt.s32.f32 %v5535
        %v5538 = vcvt.s32.f32 %v5536
        %5539 = vmin.xlane.f32.xlu0 %v5538
        %v5540 = vpop.xlane.xlu0 %5539
        %vm5541 = vcmp.eq.f32.partialorder %v5538, %v5540
        %v5542 = vsel %vm5541, %v5537, inf
        %5543 = vmin.xlane.f32.xlu0 %v5542
        %v5544 = vpop.xlane.xlu0 %5543
        %v5545 = vcvt.f32.s32 %v5544
        %v5546 = vcvt.f32.s32 %v5540
        %v5547 = vshll.u32 %v5546, 16
        %v5548 = vadd.s32 %v5547, %v5545
        %vm5549 = vcmp.eq.s32.totalorder %v521, 3
        %v5550 = vsel %vm5549, %v5548, %v4268
        %vm5551 = vcmp.eq.s32.totalorder %v521, %v5548
        %vm5552 = vcmp.eq.s32.totalorder %v522, %v5548
        %vm5553 = vcmp.eq.s32.totalorder %v523, %v5548
        %vm5554 = vcmp.eq.s32.totalorder %v524, %v5548
        %v5555 = vsel %vm5551, 1, 0
        %v5556 = vsel %vm5552, 1, 0
        %v5557 = vsel %vm5553, 1, 0
        %v5558 = vsel %vm5554, 1, 0
        %v5559 = vcvt.s32.f32 %v5555
        %v5560 = vcvt.s32.f32 %v5556
        %v5561 = vcvt.s32.f32 %v5557
        %v5562 = vcvt.s32.f32 %v5558
        %5563 = vmatprep.subr.mxu0 0.0
        %5564 = vmatpush1.msra.mxu0 %v420
        %5565 = vmatprep.subr.mxu0 0.0
        %5566 = vmatpush1.msra.mxu0 %v421
        %5567 = vmatprep.subr.mxu0 0.0
        %5568 = vmatpush1.msra.mxu0 %v422
        %5569 = vmatprep.subr.mxu0 0.0
        %5570 = vmatpush1.msra.mxu0 %v423
        %5571 = vmatprep.subr.mxu0 0.0
        %5572 = vmatpush1.msra.mxu0 %v424
        %5573 = vmatprep.subr.mxu0 0.0
        %5574 = vmatpush1.msra.mxu0 %v425
        %5575 = vmatprep.subr.mxu0 0.0
        %5576 = vmatpush1.msra.mxu0 %v426
        %5577 = vmatprep.subr.mxu0 0.0
        %5578 = vmatpush1.msra.mxu0 %v427
        %5579 = vmatprep.subr.mxu0 0.0
        %5580 = vmatpush1.msra.mxu0 %v428
        %5581 = vmatprep.subr.mxu0 0.0
        %5582 = vmatpush1.msra.mxu0 %v429
        %5583 = vmatprep.subr.mxu0 0.0
        %5584 = vmatpush1.msra.mxu0 %v430
        %5585 = vmatprep.subr.mxu0 0.0
        %5586 = vmatpush1.msra.mxu0 %v431
        %5587 = vmatprep.subr.mxu0 0.0
        %5588 = vmatpush1.msra.mxu0 %v432
        %5589 = vmatprep.subr.mxu0 0.0
        %5590 = vmatpush1.msra.mxu0 %v433
        %5591 = vmatprep.subr.mxu0 0.0
        %5592 = vmatpush1.msra.mxu0 %v434
        %5593 = vmatprep.subr.mxu0 0.0
        %5594 = vmatpush1.msra.mxu0 %v435
        %5595 = vmatprep.subr.mxu0 0.0
        %5596 = vmatpush1.msra.mxu0 %v436
        %5597 = vmatprep.subr.mxu0 0.0
        %5598 = vmatpush1.msra.mxu0 %v437
        %5599 = vmatprep.subr.mxu0 0.0
        %5600 = vmatpush1.msra.mxu0 %v438
        %5601 = vmatprep.subr.mxu0 0.0
        %5602 = vmatpush1.msra.mxu0 %v439
        %5603 = vmatprep.subr.mxu0 0.0
        %5604 = vmatpush1.msra.mxu0 %v440
        %5605 = vmatprep.subr.mxu0 0.0
        %5606 = vmatpush1.msra.mxu0 %v441
        %5607 = vmatprep.subr.mxu0 0.0
        %5608 = vmatpush1.msra.mxu0 %v442
        %5609 = vmatprep.subr.mxu0 0.0
        %5610 = vmatpush1.msra.mxu0 %v443
        %5611 = vmatprep.subr.mxu0 0.0
        %5612 = vmatpush1.msra.mxu0 %v444
        %5613 = vmatprep.subr.mxu0 0.0
        %5614 = vmatpush1.msra.mxu0 %v445
        %5615 = vmatprep.subr.mxu0 0.0
        %5616 = vmatpush1.msra.mxu0 %v446
        %5617 = vmatprep.subr.mxu0 0.0
        %5618 = vmatpush1.msra.mxu0 %v447
        %5619 = vmatprep.subr.mxu0 0.0
        %5620 = vmatpush1.msra.mxu0 %v448
        %5621 = vmatprep.subr.mxu0 0.0
        %5622 = vmatpush1.msra.mxu0 %v449
        %5623 = vmatprep.subr.mxu0 0.0
        %5624 = vmatpush1.msra.mxu0 %v450
        %5625 = vmatprep.subr.mxu0 0.0
        %5626 = vmatpush1.msra.mxu0 %v451
        %5627 = vmatprep.mubr.f32.mxu0 %v5560
        %5628 = vmatmul.mubr.f32.gmra.mrb[0].mxu0 %v5559
        %v5629 = vpop.f32.mrb[0].mxu0
        %v5630 = vadd.f32 0.0, %v5629
        %v5631 = vpop.f32.mrb[0].mxu0
        %5632 = vdwg.mxu0
        %5633 = vmatprep.subr.mxu0 0.0
        %5634 = vmatpush1.msra.mxu0 %v452
        %5635 = vmatprep.subr.mxu0 0.0
        %5636 = vmatpush1.msra.mxu0 %v453
        %5637 = vmatprep.subr.mxu0 0.0
        %5638 = vmatpush1.msra.mxu0 %v454
        %5639 = vmatprep.subr.mxu0 0.0
        %5640 = vmatpush1.msra.mxu0 %v455
        %5641 = vmatprep.subr.mxu0 0.0
        %5642 = vmatpush1.msra.mxu0 %v456
        %5643 = vmatprep.subr.mxu0 0.0
        %5644 = vmatpush1.msra.mxu0 %v457
        %5645 = vmatprep.subr.mxu0 0.0
        %5646 = vmatpush1.msra.mxu0 %v458
        %5647 = vmatprep.subr.mxu0 0.0
        %5648 = vmatpush1.msra.mxu0 %v459
        %5649 = vmatprep.subr.mxu0 0.0
        %5650 = vmatpush1.msra.mxu0 %v460
        %5651 = vmatprep.subr.mxu0 0.0
        %5652 = vmatpush1.msra.mxu0 %v461
        %5653 = vmatprep.subr.mxu0 0.0
        %5654 = vmatpush1.msra.mxu0 %v462
        %5655 = vmatprep.subr.mxu0 0.0
        %5656 = vmatpush1.msra.mxu0 %v463
        %5657 = vmatprep.subr.mxu0 0.0
        %5658 = vmatpush1.msra.mxu0 %v464
        %5659 = vmatprep.subr.mxu0 0.0
        %5660 = vmatpush1.msra.mxu0 %v465
        %5661 = vmatprep.subr.mxu0 0.0
        %5662 = vmatpush1.msra.mxu0 %v466
        %5663 = vmatprep.subr.mxu0 0.0
        %5664 = vmatpush1.msra.mxu0 %v467
        %5665 = vmatprep.subr.mxu0 0.0
        %5666 = vmatpush1.msra.mxu0 %v468
        %5667 = vmatprep.subr.mxu0 0.0
        %5668 = vmatpush1.msra.mxu0 %v469
        %5669 = vmatprep.subr.mxu0 0.0
        %5670 = vmatpush1.msra.mxu0 %v470
        %5671 = vmatprep.subr.mxu0 0.0
        %5672 = vmatpush1.msra.mxu0 %v471
        %5673 = vmatprep.subr.mxu0 0.0
        %5674 = vmatpush1.msra.mxu0 %v472
        %5675 = vmatprep.subr.mxu0 0.0
        %5676 = vmatpush1.msra.mxu0 %v473
        %5677 = vmatprep.subr.mxu0 0.0
        %5678 = vmatpush1.msra.mxu0 %v474
        %5679 = vmatprep.subr.mxu0 0.0
        %5680 = vmatpush1.msra.mxu0 %v475
        %5681 = vmatprep.subr.mxu0 0.0
        %5682 = vmatpush1.msra.mxu0 %v476
        %5683 = vmatprep.subr.mxu0 0.0
        %5684 = vmatpush1.msra.mxu0 %v477
        %5685 = vmatprep.subr.mxu0 0.0
        %5686 = vmatpush1.msra.mxu0 %v478
        %5687 = vmatprep.subr.mxu0 0.0
        %5688 = vmatpush1.msra.mxu0 %v479
        %5689 = vmatprep.subr.mxu0 0.0
        %5690 = vmatpush1.msra.mxu0 %v480
        %5691 = vmatprep.subr.mxu0 0.0
        %5692 = vmatpush1.msra.mxu0 %v481
        %5693 = vmatprep.subr.mxu0 0.0
        %5694 = vmatpush1.msra.mxu0 %v482
        %5695 = vmatprep.subr.mxu0 0.0
        %5696 = vmatpush1.msra.mxu0 %v483
        %5697 = vmatprep.mubr.f32.mxu0 %v5562
        %5698 = vmatmul.mubr.f32.gmra.mrb[0].mxu0 %v5561
        %v5699 = vpop.f32.mrb[0].mxu0
        %v5700 = vadd.f32 %v5630, %v5699
        %v5701 = vpop.f32.mrb[0].mxu0
        %5702 = vdwg.mxu0
        %5704 = vst.msk [vmem:[#allocation2] sm:$0xff] %vm528, %v5366
        %5706 = vrot.lane.b32.xlu0 %v5357, 96
        %v5707 = vpop.permute.xlu0 %5706
        %5709 = vst.msk [vmem:[#allocation3] sm:$0xff] %vm528, %v5707
        %5710 = vst.msk [vmem:[#allocation4] sm:$0xff] %vm899, %v5700
        %vm5711 = vcmask 31744
        %5712 = vst.msk [vmem:[%s376] sm:$0xff] %vm5711, %v5550
        %s5713 = sand.u32 %s244, 1
        %s5714 = scalar_lea.sflag [#allocation6], %s5713
        %s5715 = sand.u32 %s244, 1
        %s5716 = smul.addr %s5715, 128
        %s5717 = scalar_lea.vmem [#allocation5], %s5716
        %p5718 = scmp.lt.s32.totalorder %s26, 1
        %s5719 = scalar_select %p5718, %s26, 1
        %s5720 = smul.addr %s5719, 8
        %s5721 = scalar_lea.vmem %s11, %s5720
        // Predicated region
        $region65: #{tpu_custom_call.1} parent=59 // pred_check
          %p5722 = pneg %p254
        $region66: #{tpu_custom_call.1} parent=59 // pred_check_branch
          %5724 = sbr.rel (%p5722) target = $region68
        $region67: #{tpu_custom_call.1} parent=59 // pred_region
          %s5725 = smul.u32 4, %s26
          %s5727 = ssub.s32 2048, 2048
          %5728 = vsyncadd %s5714, %s5727
          %s5729 = smul.addr %s5725, 4
          %s5730 = smul.addr %s5729, 128
          %s5731 = scalar_lea.hbm %s10, %s5730
          %s5732 = sshll.u32 %s5717, 4
          %s5733 = int_to_ptr.vmem [resolvable:$true] %s5732
          %5738 = dma.vmem_to_hbm [thread:$0]  %s5733, 2048, %s5731, %s5714, 512, 512, 32
        $region68: #{tpu_custom_call.1} parent=59 // pred_fallthru
          _
        // Predicated region
        $region69: #{tpu_custom_call.1} parent=59 // pred_check
          %p5739 = pneg %p280
        $region70: #{tpu_custom_call.1} parent=59 // pred_check_branch
          %5741 = sbr.rel (%p5739) target = $region72
        $region71: #{tpu_custom_call.1} parent=59 // pred_region
          _
        $region72: #{tpu_custom_call.1} parent=59 // pred_fallthru
          _
      $region60: #{tpu_custom_call.1} parent=5 // pred_fallthru
        _
      %p5742 = scmp.le.s32.totalorder 2, %s21
      // Predicated region
      $region73: #{tpu_custom_call.1} parent=5 // pred_check
        %p5743 = pneg %p5742
      $region74: #{tpu_custom_call.1} parent=5 // pred_check_branch
        %5745 = sbr.rel (%p5743) target = $region76
      $region75: #{tpu_custom_call.1} parent=5 // pred_region
        %s5746 = ssub.s32 %s21, 2
        // Predicated region
        $region77: #{tpu_custom_call.1} parent=75 // pred_check
          %p5747 = pneg %p260
        $region78: #{tpu_custom_call.1} parent=75 // pred_check_branch
          %5749 = sbr.rel (%p5747) target = $region80
        $region79: #{tpu_custom_call.1} parent=75 // pred_region
          %s5750 = sand.u32 %s245, 1
          %s5751 = scalar_lea.sflag [#allocation6], %s5750
          %s5752 = sand.u32 %s245, 1
          %s5753 = smul.addr %s5752, 128
          %s5754 = scalar_lea.vmem [#allocation5], %s5753
          %5755 = dma.done %s5751, 2048
        $region80: #{tpu_custom_call.1} parent=75 // pred_fallthru
          _
        // Predicated region
        $region81: #{tpu_custom_call.1} parent=75 // pred_check
          %p5756 = pneg %p286
        $region82: #{tpu_custom_call.1} parent=75 // pred_check_branch
          %5758 = sbr.rel (%p5756) target = $region84
        $region83: #{tpu_custom_call.1} parent=75 // pred_region
          %p5759 = scmp.lt.s32.totalorder %s27, 1
          %s5760 = scalar_select %p5759, %s27, 1
          %s5761 = smul.addr %s5760, 8
          %s5762 = scalar_lea.vmem %s11, %s5761
        $region84: #{tpu_custom_call.1} parent=75 // pred_fallthru
          _
      $region76: #{tpu_custom_call.1} parent=5 // pred_fallthru
        _
    $region6: #{tpu_custom_call.1} parent=1 // loop_footer
      %s25 = sadd.s32 1, %s21
    $region7: #{tpu_custom_call.1} parent=1 // loop_footer_branch
      %20 = sbr.rel target = $region3
    $region8: #{tpu_custom_call.1} parent=1 // loop_exit
      _
    %5763 = vsyncpa [#allocation6], 1
    %s5764 = scalar_lea.sflag [#allocation6], 1
    %5765 = vsyncpa %s5764, 1

</llo_original>
